<compile_context>
chip_gen: v7x
topology: tpu7x:2x2x1
jax: 0.10.0
libtpu: 0.0.40
codegen_flags: <defaults>
</compile_context>

<pallas_src>
import functools
import math

import jax
import jax.numpy as jnp
from jax import lax
from jax.experimental import pallas as pl
from jax.experimental.pallas import tpu as pltpu


def _round_up(x, m):
    return (x + m - 1) // m * m


def _attention_core(q, k, v, hid, wo, bo, gamma, beta, out_ref,
                    *, num_heads, head_dim, h_true):
    """Per-head attention + output projection + residual + LayerNorm.

    q:   (S, Hp) padded queries (already scaled by 1/sqrt(head_dim))
    hid: (S, Hp) padded residual input
    k,v: (T, Hp) padded keys/values
    wo:  (H, Hp)  bo/gamma/beta: (1, Hp)
    Valid features live in lanes [0, h_true); padded lanes are exactly zero.
    """
    ctx_heads = []
    for h in range(num_heads):                 # statically unrolled (<= 16)
        lo = h * head_dim
        hi = lo + head_dim
        qh = q[:, lo:hi]                       # (S, hd)
        kh = k[:, lo:hi]                       # (T, hd)
        vh = v[:, lo:hi]                       # (T, hd)
        s = lax.dot_general(qh, kh, (((1,), (1,)), ((), ())),
                            preferred_element_type=jnp.float32)          # (S, T)
        s = s - jnp.max(s, axis=-1, keepdims=True)        # stable softmax
        p = jnp.exp(s)
        p = p * pl.reciprocal(jnp.sum(p, axis=-1, keepdims=True), approx=False)
        ctx_heads.append(jnp.dot(p, vh, preferred_element_type=jnp.float32))
    ctx_all = jnp.concatenate(ctx_heads, axis=-1)          # (S, h_true)

    # ---- output projection + residual + LayerNorm (eps=1e-12, biased var) ----
    o = jnp.dot(ctx_all, wo, preferred_element_type=jnp.float32) + bo   # (S, Hp)
    r = o + hid                                            # padded lanes stay 0
    inv_h = 1.0 / h_true
    mean = jnp.sum(r, axis=-1, keepdims=True) * inv_h
    ex2 = jnp.sum(r * r, axis=-1, keepdims=True) * inv_h
    var = ex2 - mean * mean                                # padded lanes add 0
    xhat = (r - mean) * lax.rsqrt(var + 1e-12)
    # padded lanes: gamma = beta = 0 -> output padded lanes stay 0
    out_ref[0] = (xhat * gamma + beta).astype(out_ref.dtype)


def _self_attn_kernel(hid_ref, wqkv_ref, bqkv_ref, wo_ref, bo_ref,
                      gamma_ref, beta_ref, out_ref,
                      *, num_heads, head_dim, h_true, h_pad):
    hid = hid_ref[0]                                       # (S, Hp)
    qkv = jnp.dot(hid, wqkv_ref[...],
                  preferred_element_type=jnp.float32) + bqkv_ref[...]   # (S, 3Hp)
    scale = 1.0 / math.sqrt(head_dim)
    q = qkv[:, :h_pad] * scale                             # 128-aligned slices
    k = qkv[:, h_pad:2 * h_pad]
    v = qkv[:, 2 * h_pad:]
    _attention_core(q, k, v, hid, wo_ref[...], bo_ref[...],
                    gamma_ref[...], beta_ref[...], out_ref,
                    num_heads=num_heads, head_dim=head_dim, h_true=h_true)


def _cross_attn_kernel(hid_ref, ctx_ref, wq_ref, bq_ref, wkv_ref, bkv_ref,
                       wo_ref, bo_ref, gamma_ref, beta_ref, out_ref,
                       *, num_heads, head_dim, h_true, h_pad):
    hid = hid_ref[0]                                       # (S, Hp)
    ctx = ctx_ref[0]                                       # (T, Hp)
    scale = 1.0 / math.sqrt(head_dim)
    q = (jnp.dot(hid, wq_ref[...],
                 preferred_element_type=jnp.float32) + bq_ref[...]) * scale   # (S, Hp)
    kv = jnp.dot(ctx, wkv_ref[...],
                 preferred_element_type=jnp.float32) + bkv_ref[...]           # (T, 2Hp)
    k = kv[:, :h_pad]                                      # 128-aligned slices
    v = kv[:, h_pad:]
    _attention_core(q, k, v, hid, wo_ref[...], bo_ref[...],
                    gamma_ref[...], beta_ref[...], out_ref,
                    num_heads=num_heads, head_dim=head_dim, h_true=h_true)


def _pad_last(x, to):
    pad = to - x.shape[-1]
    if pad == 0:
        return x
    widths = [(0, 0)] * (x.ndim - 1) + [(0, pad)]
    return jnp.pad(x, widths)


def _pad2(w, rows, cols):
    return jnp.zeros((rows, cols), w.dtype).at[:w.shape[0], :w.shape[1]].set(w)


def lxmert_attention_layer(hidden, context, params, num_heads,
                           *, self_attention=False):
    """hidden: (B, S, H) queries + residual; context: (B, T, H) keys/values."""
    B, S, H = hidden.shape
    _, T, _ = context.shape
    head_dim = H // num_heads
    Hp = _round_up(H, 128)                    # lane-dense padded hidden size

    hid_p = _pad_last(hidden, Hp)
    wo_p = _pad2(params["wo"], H, Hp)         # pad output columns only
    bo_p = _pad_last(params["bo"], Hp)
    gamma_p = _pad_last(params["gamma"], Hp)
    beta_p = _pad_last(params["beta"], Hp)

    def full_spec(shape):
        n = len(shape)
        return pl.BlockSpec(shape, lambda b: (0,) * n)

    common = dict(num_heads=num_heads, head_dim=head_dim, h_true=H, h_pad=Hp)

    if self_attention:
        wqkv = jnp.concatenate([_pad2(params["wq"], Hp, Hp),
                                _pad2(params["wk"], Hp, Hp),
                                _pad2(params["wv"], Hp, Hp)], axis=1)    # (Hp, 3Hp)
        bqkv = jnp.concatenate([_pad_last(params["bq"], Hp),
                                _pad_last(params["bk"], Hp),
                                _pad_last(params["bv"], Hp)], axis=1)    # (1, 3Hp)
        kernel = functools.partial(_self_attn_kernel, **common)
        in_specs = [
            pl.BlockSpec((1, S, Hp), lambda b: (b, 0, 0)),               # hidden
            full_spec(wqkv.shape), full_spec(bqkv.shape),
            full_spec(wo_p.shape), full_spec(bo_p.shape),
            full_spec(gamma_p.shape), full_spec(beta_p.shape),
        ]
        args = (hid_p, wqkv, bqkv, wo_p, bo_p, gamma_p, beta_p)
    else:
        ctx_p = _pad_last(context, Hp)
        wq_p = _pad2(params["wq"], Hp, Hp)
        bq_p = _pad_last(params["bq"], Hp)
        wkv = jnp.concatenate([_pad2(params["wk"], Hp, Hp),
                               _pad2(params["wv"], Hp, Hp)], axis=1)     # (Hp, 2Hp)
        bkv = jnp.concatenate([_pad_last(params["bk"], Hp),
                               _pad_last(params["bv"], Hp)], axis=1)     # (1, 2Hp)
        kernel = functools.partial(_cross_attn_kernel, **common)
        in_specs = [
            pl.BlockSpec((1, S, Hp), lambda b: (b, 0, 0)),               # hidden
            pl.BlockSpec((1, T, Hp), lambda b: (b, 0, 0)),               # context
            full_spec(wq_p.shape), full_spec(bq_p.shape),
            full_spec(wkv.shape), full_spec(bkv.shape),
            full_spec(wo_p.shape), full_spec(bo_p.shape),
            full_spec(gamma_p.shape), full_spec(beta_p.shape),
        ]
        args = (hid_p, ctx_p, wq_p, bq_p, wkv, bkv, wo_p, bo_p, gamma_p, beta_p)

    out_p = pl.pallas_call(
        kernel,
        out_shape=jax.ShapeDtypeStruct((B, S, Hp), hidden.dtype),
        grid_spec=pltpu.PrefetchScalarGridSpec(
            num_scalar_prefetch=0,
            grid=(B,),
            in_specs=in_specs,
            out_specs=pl.BlockSpec((1, S, Hp), lambda b: (b, 0, 0)),
        ),
        compiler_params=pltpu.CompilerParams(
            dimension_semantics=("parallel",)),   # batch elems are independent
    )(*args)
    return out_p[:, :, :H]


def init_attn_params(key, hidden_size):
    """Deterministic synthetic parameters (ctx_dim == hidden_size, as in LXMERT)."""
    ks = jax.random.split(key, 10)

    def w(k, fi, fo):
        return jax.random.normal(k, (fi, fo), jnp.float32) * 0.05

    def b(k, n):
        return jax.random.normal(k, (1, n), jnp.float32) * 0.02

    return {
        "wq": w(ks[0], hidden_size, hidden_size), "bq": b(ks[1], hidden_size),
        "wk": w(ks[2], hidden_size, hidden_size), "bk": b(ks[3], hidden_size),
        "wv": w(ks[4], hidden_size, hidden_size), "bv": b(ks[5], hidden_size),
        "wo": w(ks[6], hidden_size, hidden_size), "bo": b(ks[7], hidden_size),
        "gamma": 1.0 + jax.random.normal(ks[8], (1, hidden_size), jnp.float32) * 0.02,
        "beta": jax.random.normal(ks[9], (1, hidden_size), jnp.float32) * 0.02,
    }


def ref_attention_layer(hidden, context, p, num_heads):
    """Pure-JAX reference mirroring transformers LxmertAttention + AttentionOutput."""
    B, S, H = hidden.shape
    T = context.shape[1]
    hd = H // num_heads
    q = hidden @ p["wq"] + p["bq"]
    k = context @ p["wk"] + p["bk"]
    v = context @ p["wv"] + p["bv"]

    def split(x, L):
        return x.reshape(B, L, num_heads, hd).transpose(0, 2, 1, 3)

    qh, kh, vh = split(q, S), split(k, T), split(v, T)
    s = jnp.einsum("bhsd,bhtd->bhst", qh, kh) / math.sqrt(hd)
    pr = jax.nn.softmax(s, axis=-1)
    c = jnp.einsum("bhst,bhtd->bhsd", pr, vh).transpose(0, 2, 1, 3).reshape(B, S, H)
    o = c @ p["wo"] + p["bo"]
    r = o + hidden
    mean = r.mean(-1, keepdims=True)
    var = ((r - mean) ** 2).mean(-1, keepdims=True)
    return (r - mean) / jnp.sqrt(var + 1e-12) * p["gamma"] + p["beta"]


if __name__ == "__main__":
    key = jax.random.PRNGKey(0)
    kx, ky, kc, kp0, kp1 = jax.random.split(key, 5)

    B = 2
    Sx, Sy, Sc = 8, 8, 12
    H0, NH0 = 192, 16   # config0: hidden_size=192, num_attention_heads=16
    H1, NH1 = 66, 6     # config1: hidden_size=66,  num_attention_heads=6

    x = jax.random.normal(kx, (B, Sx, H0), jnp.float32)
    y = jax.random.normal(ky, (B, Sy, H1), jnp.float32)
    ctx = jax.random.normal(kc, (B, Sc, H1), jnp.float32)

    p0 = init_attn_params(kp0, H0)
    p1 = init_attn_params(kp1, H1)

    # attn0: self-attention (queries, keys, values all from x)
    out0 = lxmert_attention_layer(x, x, p0, NH0, self_attention=True)
    # attn1: cross-attention (queries from y, keys/values from ctx)
    out1 = lxmert_attention_layer(y, ctx, p1, NH1, self_attention=False)
    out0, out1 = jax.block_until_ready((out0, out1))

    r0 = ref_attention_layer(x, x, p0, NH0)
    r1 = ref_attention_layer(y, ctx, p1, NH1)
    assert out0.shape == (B, Sx, H0) and out1.shape == (B, Sy, H1)
    assert jnp.allclose(out0, r0, atol=2e-4, rtol=2e-4), float(jnp.max(jnp.abs(out0 - r0)))
    assert jnp.allclose(out1, r1, atol=2e-4, rtol=2e-4), float(jnp.max(jnp.abs(out1 - r1)))

    print("KERNEL_OK")
</pallas_src>

<mosaic_0001>
module attributes {stable_mosaic.version = 11 : i64} {
  func.func @_self_attn_kernel(%arg0: i32, %arg1: memref<1x8x256xf32, #tpu.memory_space<vmem>>, %arg2: memref<256x768xf32, #tpu.memory_space<vmem>>, %arg3: memref<1x768xf32, #tpu.memory_space<vmem>>, %arg4: memref<192x256xf32, #tpu.memory_space<vmem>>, %arg5: memref<1x256xf32, #tpu.memory_space<vmem>>, %arg6: memref<1x256xf32, #tpu.memory_space<vmem>>, %arg7: memref<1x256xf32, #tpu.memory_space<vmem>>, %arg8: memref<1x8x256xf32, #tpu.memory_space<vmem>>) attributes {dimension_semantics = [#tpu.dimension_semantics<parallel>], iteration_bounds = array<i64: 2>, scalar_prefetch = 0 : i64, scratch_operands = 0 : i64, tpu.core_type = #tpu.core_type<tc>, window_params = [{transform_indices = @transform_0, window_bounds = array<i64: 1, 8, 256>}, {pipeline_mode = #tpu.pipeline_mode<synchronous>, transform_indices = @transform_1, window_bounds = array<i64: 256, 768>}, {pipeline_mode = #tpu.pipeline_mode<synchronous>, transform_indices = @transform_2, window_bounds = array<i64: 1, 768>}, {pipeline_mode = #tpu.pipeline_mode<synchronous>, transform_indices = @transform_3, window_bounds = array<i64: 192, 256>}, {pipeline_mode = #tpu.pipeline_mode<synchronous>, transform_indices = @transform_4, window_bounds = array<i64: 1, 256>}, {pipeline_mode = #tpu.pipeline_mode<synchronous>, transform_indices = @transform_5, window_bounds = array<i64: 1, 256>}, {pipeline_mode = #tpu.pipeline_mode<synchronous>, transform_indices = @transform_6, window_bounds = array<i64: 1, 256>}, {transform_indices = @transform_7, window_bounds = array<i64: 1, 8, 256>}]} {
    %c0 = arith.constant 0 : index
    %c0_0 = arith.constant 0 : index
    %c0_1 = arith.constant 0 : index
    %0 = vector.load %arg1[%c0, %c0_0, %c0_1] : memref<1x8x256xf32, #tpu.memory_space<vmem>>, vector<1x8x256xf32>
    %1 = vector.shape_cast %0 : vector<1x8x256xf32> to vector<8x256xf32>
    %c0_2 = arith.constant 0 : index
    %c0_3 = arith.constant 0 : index
    %2 = vector.load %arg2[%c0_2, %c0_3] : memref<256x768xf32, #tpu.memory_space<vmem>>, vector<256x768xf32>
    %cst = arith.constant dense<0.000000e+00> : vector<8x768xf32>
    %3 = tpu.matmul %1, %2, %cst {dimension_numbers = #tpu.dot_dimension_numbers<[1], [0], [0], [1], [0, 0, 1, 1], [], []>} : vector<8x256xf32>, vector<256x768xf32>, vector<8x768xf32> -> vector<8x768xf32>
    %c0_4 = arith.constant 0 : index
    %c0_5 = arith.constant 0 : index
    %4 = vector.load %arg3[%c0_4, %c0_5] : memref<1x768xf32, #tpu.memory_space<vmem>>, vector<1x768xf32>
    %5 = vector.broadcast %4 : vector<1x768xf32> to vector<8x768xf32>
    %6 = arith.addf %3, %5 : vector<8x768xf32>
    %7 = vector.extract_strided_slice %6 {offsets = [0, 0], sizes = [8, 256], strides = [1, 1]} : vector<8x768xf32> to vector<8x256xf32>
    %cst_6 = arith.constant 0.288675129 : f32
    %8 = vector.broadcast %cst_6 : f32 to vector<8x256xf32>
    %9 = arith.mulf %7, %8 : vector<8x256xf32>
    %10 = vector.extract_strided_slice %6 {offsets = [0, 256], sizes = [8, 256], strides = [1, 1]} : vector<8x768xf32> to vector<8x256xf32>
    %11 = vector.extract_strided_slice %6 {offsets = [0, 512], sizes = [8, 256], strides = [1, 1]} : vector<8x768xf32> to vector<8x256xf32>
    %c0_7 = arith.constant 0 : index
    %c0_8 = arith.constant 0 : index
    %12 = vector.load %arg4[%c0_7, %c0_8] : memref<192x256xf32, #tpu.memory_space<vmem>>, vector<192x256xf32>
    %c0_9 = arith.constant 0 : index
    %c0_10 = arith.constant 0 : index
    %13 = vector.load %arg5[%c0_9, %c0_10] : memref<1x256xf32, #tpu.memory_space<vmem>>, vector<1x256xf32>
    %c0_11 = arith.constant 0 : index
    %c0_12 = arith.constant 0 : index
    %14 = vector.load %arg6[%c0_11, %c0_12] : memref<1x256xf32, #tpu.memory_space<vmem>>, vector<1x256xf32>
    %c0_13 = arith.constant 0 : index
    %c0_14 = arith.constant 0 : index
    %15 = vector.load %arg7[%c0_13, %c0_14] : memref<1x256xf32, #tpu.memory_space<vmem>>, vector<1x256xf32>
    %16 = vector.extract_strided_slice %9 {offsets = [0, 0], sizes = [8, 12], strides = [1, 1]} : vector<8x256xf32> to vector<8x12xf32>
    %17 = vector.extract_strided_slice %10 {offsets = [0, 0], sizes = [8, 12], strides = [1, 1]} : vector<8x256xf32> to vector<8x12xf32>
    %18 = vector.extract_strided_slice %11 {offsets = [0, 0], sizes = [8, 12], strides = [1, 1]} : vector<8x256xf32> to vector<8x12xf32>
    %cst_15 = arith.constant dense<0.000000e+00> : vector<8x8xf32>
    %19 = tpu.matmul %16, %17, %cst_15 {dimension_numbers = #tpu.dot_dimension_numbers<[1], [1], [0], [0], [0, 0, 1, 0], [], []>} : vector<8x12xf32>, vector<8x12xf32>, vector<8x8xf32> -> vector<8x8xf32>
    %cst_16 = arith.constant dense<0xFF800000> : vector<8xf32>
    %20 = vector.multi_reduction <maximumf>, %19, %cst_16 [1] : vector<8x8xf32> to vector<8xf32>
    %21 = vector.shape_cast %20 : vector<8xf32> to vector<8x1xf32>
    %22 = vector.broadcast %21 : vector<8x1xf32> to vector<8x8xf32>
    %23 = arith.subf %19, %22 : vector<8x8xf32>
    %24 = math.exp %23 : vector<8x8xf32>
    %cst_17 = arith.constant dense<0.000000e+00> : vector<8xf32>
    %25 = vector.multi_reduction <add>, %24, %cst_17 [1] : vector<8x8xf32> to vector<8xf32>
    %26 = vector.shape_cast %25 : vector<8xf32> to vector<8x1xf32>
    %27 = tpu.reciprocal %26 : vector<8x1xf32> -> vector<8x1xf32>
    %28 = vector.broadcast %27 : vector<8x1xf32> to vector<8x8xf32>
    %29 = arith.mulf %24, %28 : vector<8x8xf32>
    %cst_18 = arith.constant dense<0.000000e+00> : vector<8x12xf32>
    %30 = tpu.matmul %29, %18, %cst_18 {dimension_numbers = #tpu.dot_dimension_numbers<[1], [0], [0], [1], [0, 0, 1, 1], [], []>} : vector<8x8xf32>, vector<8x12xf32>, vector<8x12xf32> -> vector<8x12xf32>
    %31 = vector.extract_strided_slice %9 {offsets = [0, 12], sizes = [8, 12], strides = [1, 1]} : vector<8x256xf32> to vector<8x12xf32>
    %32 = vector.extract_strided_slice %10 {offsets = [0, 12], sizes = [8, 12], strides = [1, 1]} : vector<8x256xf32> to vector<8x12xf32>
    %33 = vector.extract_strided_slice %11 {offsets = [0, 12], sizes = [8, 12], strides = [1, 1]} : vector<8x256xf32> to vector<8x12xf32>
    %cst_19 = arith.constant dense<0.000000e+00> : vector<8x8xf32>
    %34 = tpu.matmul %31, %32, %cst_19 {dimension_numbers = #tpu.dot_dimension_numbers<[1], [1], [0], [0], [0, 0, 1, 0], [], []>} : vector<8x12xf32>, vector<8x12xf32>, vector<8x8xf32> -> vector<8x8xf32>
    %cst_20 = arith.constant dense<0xFF800000> : vector<8xf32>
    %35 = vector.multi_reduction <maximumf>, %34, %cst_20 [1] : vector<8x8xf32> to vector<8xf32>
    %36 = vector.shape_cast %35 : vector<8xf32> to vector<8x1xf32>
    %37 = vector.broadcast %36 : vector<8x1xf32> to vector<8x8xf32>
    %38 = arith.subf %34, %37 : vector<8x8xf32>
    %39 = math.exp %38 : vector<8x8xf32>
    %cst_21 = arith.constant dense<0.000000e+00> : vector<8xf32>
    %40 = vector.multi_reduction <add>, %39, %cst_21 [1] : vector<8x8xf32> to vector<8xf32>
    %41 = vector.shape_cast %40 : vector<8xf32> to vector<8x1xf32>
    %42 = tpu.reciprocal %41 : vector<8x1xf32> -> vector<8x1xf32>
    %43 = vector.broadcast %42 : vector<8x1xf32> to vector<8x8xf32>
    %44 = arith.mulf %39, %43 : vector<8x8xf32>
    %cst_22 = arith.constant dense<0.000000e+00> : vector<8x12xf32>
    %45 = tpu.matmul %44, %33, %cst_22 {dimension_numbers = #tpu.dot_dimension_numbers<[1], [0], [0], [1], [0, 0, 1, 1], [], []>} : vector<8x8xf32>, vector<8x12xf32>, vector<8x12xf32> -> vector<8x12xf32>
    %46 = vector.extract_strided_slice %9 {offsets = [0, 24], sizes = [8, 12], strides = [1, 1]} : vector<8x256xf32> to vector<8x12xf32>
    %47 = vector.extract_strided_slice %10 {offsets = [0, 24], sizes = [8, 12], strides = [1, 1]} : vector<8x256xf32> to vector<8x12xf32>
    %48 = vector.extract_strided_slice %11 {offsets = [0, 24], sizes = [8, 12], strides = [1, 1]} : vector<8x256xf32> to vector<8x12xf32>
    %cst_23 = arith.constant dense<0.000000e+00> : vector<8x8xf32>
    %49 = tpu.matmul %46, %47, %cst_23 {dimension_numbers = #tpu.dot_dimension_numbers<[1], [1], [0], [0], [0, 0, 1, 0], [], []>} : vector<8x12xf32>, vector<8x12xf32>, vector<8x8xf32> -> vector<8x8xf32>
    %cst_24 = arith.constant dense<0xFF800000> : vector<8xf32>
    %50 = vector.multi_reduction <maximumf>, %49, %cst_24 [1] : vector<8x8xf32> to vector<8xf32>
    %51 = vector.shape_cast %50 : vector<8xf32> to vector<8x1xf32>
    %52 = vector.broadcast %51 : vector<8x1xf32> to vector<8x8xf32>
    %53 = arith.subf %49, %52 : vector<8x8xf32>
    %54 = math.exp %53 : vector<8x8xf32>
    %cst_25 = arith.constant dense<0.000000e+00> : vector<8xf32>
    %55 = vector.multi_reduction <add>, %54, %cst_25 [1] : vector<8x8xf32> to vector<8xf32>
    %56 = vector.shape_cast %55 : vector<8xf32> to vector<8x1xf32>
    %57 = tpu.reciprocal %56 : vector<8x1xf32> -> vector<8x1xf32>
    %58 = vector.broadcast %57 : vector<8x1xf32> to vector<8x8xf32>
    %59 = arith.mulf %54, %58 : vector<8x8xf32>
    %cst_26 = arith.constant dense<0.000000e+00> : vector<8x12xf32>
    %60 = tpu.matmul %59, %48, %cst_26 {dimension_numbers = #tpu.dot_dimension_numbers<[1], [0], [0], [1], [0, 0, 1, 1], [], []>} : vector<8x8xf32>, vector<8x12xf32>, vector<8x12xf32> -> vector<8x12xf32>
    %61 = vector.extract_strided_slice %9 {offsets = [0, 36], sizes = [8, 12], strides = [1, 1]} : vector<8x256xf32> to vector<8x12xf32>
    %62 = vector.extract_strided_slice %10 {offsets = [0, 36], sizes = [8, 12], strides = [1, 1]} : vector<8x256xf32> to vector<8x12xf32>
    %63 = vector.extract_strided_slice %11 {offsets = [0, 36], sizes = [8, 12], strides = [1, 1]} : vector<8x256xf32> to vector<8x12xf32>
    %cst_27 = arith.constant dense<0.000000e+00> : vector<8x8xf32>
    %64 = tpu.matmul %61, %62, %cst_27 {dimension_numbers = #tpu.dot_dimension_numbers<[1], [1], [0], [0], [0, 0, 1, 0], [], []>} : vector<8x12xf32>, vector<8x12xf32>, vector<8x8xf32> -> vector<8x8xf32>
    %cst_28 = arith.constant dense<0xFF800000> : vector<8xf32>
    %65 = vector.multi_reduction <maximumf>, %64, %cst_28 [1] : vector<8x8xf32> to vector<8xf32>
    %66 = vector.shape_cast %65 : vector<8xf32> to vector<8x1xf32>
    %67 = vector.broadcast %66 : vector<8x1xf32> to vector<8x8xf32>
    %68 = arith.subf %64, %67 : vector<8x8xf32>
    %69 = math.exp %68 : vector<8x8xf32>
    %cst_29 = arith.constant dense<0.000000e+00> : vector<8xf32>
    %70 = vector.multi_reduction <add>, %69, %cst_29 [1] : vector<8x8xf32> to vector<8xf32>
    %71 = vector.shape_cast %70 : vector<8xf32> to vector<8x1xf32>
    %72 = tpu.reciprocal %71 : vector<8x1xf32> -> vector<8x1xf32>
    %73 = vector.broadcast %72 : vector<8x1xf32> to vector<8x8xf32>
    %74 = arith.mulf %69, %73 : vector<8x8xf32>
    %cst_30 = arith.constant dense<0.000000e+00> : vector<8x12xf32>
    %75 = tpu.matmul %74, %63, %cst_30 {dimension_numbers = #tpu.dot_dimension_numbers<[1], [0], [0], [1], [0, 0, 1, 1], [], []>} : vector<8x8xf32>, vector<8x12xf32>, vector<8x12xf32> -> vector<8x12xf32>
    %76 = vector.extract_strided_slice %9 {offsets = [0, 48], sizes = [8, 12], strides = [1, 1]} : vector<8x256xf32> to vector<8x12xf32>
    %77 = vector.extract_strided_slice %10 {offsets = [0, 48], sizes = [8, 12], strides = [1, 1]} : vector<8x256xf32> to vector<8x12xf32>
    %78 = vector.extract_strided_slice %11 {offsets = [0, 48], sizes = [8, 12], strides = [1, 1]} : vector<8x256xf32> to vector<8x12xf32>
    %cst_31 = arith.constant dense<0.000000e+00> : vector<8x8xf32>
    %79 = tpu.matmul %76, %77, %cst_31 {dimension_numbers = #tpu.dot_dimension_numbers<[1], [1], [0], [0], [0, 0, 1, 0], [], []>} : vector<8x12xf32>, vector<8x12xf32>, vector<8x8xf32> -> vector<8x8xf32>
    %cst_32 = arith.constant dense<0xFF800000> : vector<8xf32>
    %80 = vector.multi_reduction <maximumf>, %79, %cst_32 [1] : vector<8x8xf32> to vector<8xf32>
    %81 = vector.shape_cast %80 : vector<8xf32> to vector<8x1xf32>
    %82 = vector.broadcast %81 : vector<8x1xf32> to vector<8x8xf32>
    %83 = arith.subf %79, %82 : vector<8x8xf32>
    %84 = math.exp %83 : vector<8x8xf32>
    %cst_33 = arith.constant dense<0.000000e+00> : vector<8xf32>
    %85 = vector.multi_reduction <add>, %84, %cst_33 [1] : vector<8x8xf32> to vector<8xf32>
    %86 = vector.shape_cast %85 : vector<8xf32> to vector<8x1xf32>
    %87 = tpu.reciprocal %86 : vector<8x1xf32> -> vector<8x1xf32>
    %88 = vector.broadcast %87 : vector<8x1xf32> to vector<8x8xf32>
    %89 = arith.mulf %84, %88 : vector<8x8xf32>
    %cst_34 = arith.constant dense<0.000000e+00> : vector<8x12xf32>
    %90 = tpu.matmul %89, %78, %cst_34 {dimension_numbers = #tpu.dot_dimension_numbers<[1], [0], [0], [1], [0, 0, 1, 1], [], []>} : vector<8x8xf32>, vector<8x12xf32>, vector<8x12xf32> -> vector<8x12xf32>
    %91 = vector.extract_strided_slice %9 {offsets = [0, 60], sizes = [8, 12], strides = [1, 1]} : vector<8x256xf32> to vector<8x12xf32>
    %92 = vector.extract_strided_slice %10 {offsets = [0, 60], sizes = [8, 12], strides = [1, 1]} : vector<8x256xf32> to vector<8x12xf32>
    %93 = vector.extract_strided_slice %11 {offsets = [0, 60], sizes = [8, 12], strides = [1, 1]} : vector<8x256xf32> to vector<8x12xf32>
    %cst_35 = arith.constant dense<0.000000e+00> : vector<8x8xf32>
    %94 = tpu.matmul %91, %92, %cst_35 {dimension_numbers = #tpu.dot_dimension_numbers<[1], [1], [0], [0], [0, 0, 1, 0], [], []>} : vector<8x12xf32>, vector<8x12xf32>, vector<8x8xf32> -> vector<8x8xf32>
    %cst_36 = arith.constant dense<0xFF800000> : vector<8xf32>
    %95 = vector.multi_reduction <maximumf>, %94, %cst_36 [1] : vector<8x8xf32> to vector<8xf32>
    %96 = vector.shape_cast %95 : vector<8xf32> to vector<8x1xf32>
    %97 = vector.broadcast %96 : vector<8x1xf32> to vector<8x8xf32>
    %98 = arith.subf %94, %97 : vector<8x8xf32>
    %99 = math.exp %98 : vector<8x8xf32>
    %cst_37 = arith.constant dense<0.000000e+00> : vector<8xf32>
    %100 = vector.multi_reduction <add>, %99, %cst_37 [1] : vector<8x8xf32> to vector<8xf32>
    %101 = vector.shape_cast %100 : vector<8xf32> to vector<8x1xf32>
    %102 = tpu.reciprocal %101 : vector<8x1xf32> -> vector<8x1xf32>
    %103 = vector.broadcast %102 : vector<8x1xf32> to vector<8x8xf32>
    %104 = arith.mulf %99, %103 : vector<8x8xf32>
    %cst_38 = arith.constant dense<0.000000e+00> : vector<8x12xf32>
    %105 = tpu.matmul %104, %93, %cst_38 {dimension_numbers = #tpu.dot_dimension_numbers<[1], [0], [0], [1], [0, 0, 1, 1], [], []>} : vector<8x8xf32>, vector<8x12xf32>, vector<8x12xf32> -> vector<8x12xf32>
    %106 = vector.extract_strided_slice %9 {offsets = [0, 72], sizes = [8, 12], strides = [1, 1]} : vector<8x256xf32> to vector<8x12xf32>
    %107 = vector.extract_strided_slice %10 {offsets = [0, 72], sizes = [8, 12], strides = [1, 1]} : vector<8x256xf32> to vector<8x12xf32>
    %108 = vector.extract_strided_slice %11 {offsets = [0, 72], sizes = [8, 12], strides = [1, 1]} : vector<8x256xf32> to vector<8x12xf32>
    %cst_39 = arith.constant dense<0.000000e+00> : vector<8x8xf32>
    %109 = tpu.matmul %106, %107, %cst_39 {dimension_numbers = #tpu.dot_dimension_numbers<[1], [1], [0], [0], [0, 0, 1, 0], [], []>} : vector<8x12xf32>, vector<8x12xf32>, vector<8x8xf32> -> vector<8x8xf32>
    %cst_40 = arith.constant dense<0xFF800000> : vector<8xf32>
    %110 = vector.multi_reduction <maximumf>, %109, %cst_40 [1] : vector<8x8xf32> to vector<8xf32>
    %111 = vector.shape_cast %110 : vector<8xf32> to vector<8x1xf32>
    %112 = vector.broadcast %111 : vector<8x1xf32> to vector<8x8xf32>
    %113 = arith.subf %109, %112 : vector<8x8xf32>
    %114 = math.exp %113 : vector<8x8xf32>
    %cst_41 = arith.constant dense<0.000000e+00> : vector<8xf32>
    %115 = vector.multi_reduction <add>, %114, %cst_41 [1] : vector<8x8xf32> to vector<8xf32>
    %116 = vector.shape_cast %115 : vector<8xf32> to vector<8x1xf32>
    %117 = tpu.reciprocal %116 : vector<8x1xf32> -> vector<8x1xf32>
    %118 = vector.broadcast %117 : vector<8x1xf32> to vector<8x8xf32>
    %119 = arith.mulf %114, %118 : vector<8x8xf32>
    %cst_42 = arith.constant dense<0.000000e+00> : vector<8x12xf32>
    %120 = tpu.matmul %119, %108, %cst_42 {dimension_numbers = #tpu.dot_dimension_numbers<[1], [0], [0], [1], [0, 0, 1, 1], [], []>} : vector<8x8xf32>, vector<8x12xf32>, vector<8x12xf32> -> vector<8x12xf32>
    %121 = vector.extract_strided_slice %9 {offsets = [0, 84], sizes = [8, 12], strides = [1, 1]} : vector<8x256xf32> to vector<8x12xf32>
    %122 = vector.extract_strided_slice %10 {offsets = [0, 84], sizes = [8, 12], strides = [1, 1]} : vector<8x256xf32> to vector<8x12xf32>
    %123 = vector.extract_strided_slice %11 {offsets = [0, 84], sizes = [8, 12], strides = [1, 1]} : vector<8x256xf32> to vector<8x12xf32>
    %cst_43 = arith.constant dense<0.000000e+00> : vector<8x8xf32>
    %124 = tpu.matmul %121, %122, %cst_43 {dimension_numbers = #tpu.dot_dimension_numbers<[1], [1], [0], [0], [0, 0, 1, 0], [], []>} : vector<8x12xf32>, vector<8x12xf32>, vector<8x8xf32> -> vector<8x8xf32>
    %cst_44 = arith.constant dense<0xFF800000> : vector<8xf32>
    %125 = vector.multi_reduction <maximumf>, %124, %cst_44 [1] : vector<8x8xf32> to vector<8xf32>
    %126 = vector.shape_cast %125 : vector<8xf32> to vector<8x1xf32>
    %127 = vector.broadcast %126 : vector<8x1xf32> to vector<8x8xf32>
    %128 = arith.subf %124, %127 : vector<8x8xf32>
    %129 = math.exp %128 : vector<8x8xf32>
    %cst_45 = arith.constant dense<0.000000e+00> : vector<8xf32>
    %130 = vector.multi_reduction <add>, %129, %cst_45 [1] : vector<8x8xf32> to vector<8xf32>
    %131 = vector.shape_cast %130 : vector<8xf32> to vector<8x1xf32>
    %132 = tpu.reciprocal %131 : vector<8x1xf32> -> vector<8x1xf32>
    %133 = vector.broadcast %132 : vector<8x1xf32> to vector<8x8xf32>
    %134 = arith.mulf %129, %133 : vector<8x8xf32>
    %cst_46 = arith.constant dense<0.000000e+00> : vector<8x12xf32>
    %135 = tpu.matmul %134, %123, %cst_46 {dimension_numbers = #tpu.dot_dimension_numbers<[1], [0], [0], [1], [0, 0, 1, 1], [], []>} : vector<8x8xf32>, vector<8x12xf32>, vector<8x12xf32> -> vector<8x12xf32>
    %136 = vector.extract_strided_slice %9 {offsets = [0, 96], sizes = [8, 12], strides = [1, 1]} : vector<8x256xf32> to vector<8x12xf32>
    %137 = vector.extract_strided_slice %10 {offsets = [0, 96], sizes = [8, 12], strides = [1, 1]} : vector<8x256xf32> to vector<8x12xf32>
    %138 = vector.extract_strided_slice %11 {offsets = [0, 96], sizes = [8, 12], strides = [1, 1]} : vector<8x256xf32> to vector<8x12xf32>
    %cst_47 = arith.constant dense<0.000000e+00> : vector<8x8xf32>
    %139 = tpu.matmul %136, %137, %cst_47 {dimension_numbers = #tpu.dot_dimension_numbers<[1], [1], [0], [0], [0, 0, 1, 0], [], []>} : vector<8x12xf32>, vector<8x12xf32>, vector<8x8xf32> -> vector<8x8xf32>
    %cst_48 = arith.constant dense<0xFF800000> : vector<8xf32>
    %140 = vector.multi_reduction <maximumf>, %139, %cst_48 [1] : vector<8x8xf32> to vector<8xf32>
    %141 = vector.shape_cast %140 : vector<8xf32> to vector<8x1xf32>
    %142 = vector.broadcast %141 : vector<8x1xf32> to vector<8x8xf32>
    %143 = arith.subf %139, %142 : vector<8x8xf32>
    %144 = math.exp %143 : vector<8x8xf32>
    %cst_49 = arith.constant dense<0.000000e+00> : vector<8xf32>
    %145 = vector.multi_reduction <add>, %144, %cst_49 [1] : vector<8x8xf32> to vector<8xf32>
    %146 = vector.shape_cast %145 : vector<8xf32> to vector<8x1xf32>
    %147 = tpu.reciprocal %146 : vector<8x1xf32> -> vector<8x1xf32>
    %148 = vector.broadcast %147 : vector<8x1xf32> to vector<8x8xf32>
    %149 = arith.mulf %144, %148 : vector<8x8xf32>
    %cst_50 = arith.constant dense<0.000000e+00> : vector<8x12xf32>
    %150 = tpu.matmul %149, %138, %cst_50 {dimension_numbers = #tpu.dot_dimension_numbers<[1], [0], [0], [1], [0, 0, 1, 1], [], []>} : vector<8x8xf32>, vector<8x12xf32>, vector<8x12xf32> -> vector<8x12xf32>
    %151 = vector.extract_strided_slice %9 {offsets = [0, 108], sizes = [8, 12], strides = [1, 1]} : vector<8x256xf32> to vector<8x12xf32>
    %152 = vector.extract_strided_slice %10 {offsets = [0, 108], sizes = [8, 12], strides = [1, 1]} : vector<8x256xf32> to vector<8x12xf32>
    %153 = vector.extract_strided_slice %11 {offsets = [0, 108], sizes = [8, 12], strides = [1, 1]} : vector<8x256xf32> to vector<8x12xf32>
    %cst_51 = arith.constant dense<0.000000e+00> : vector<8x8xf32>
    %154 = tpu.matmul %151, %152, %cst_51 {dimension_numbers = #tpu.dot_dimension_numbers<[1], [1], [0], [0], [0, 0, 1, 0], [], []>} : vector<8x12xf32>, vector<8x12xf32>, vector<8x8xf32> -> vector<8x8xf32>
    %cst_52 = arith.constant dense<0xFF800000> : vector<8xf32>
    %155 = vector.multi_reduction <maximumf>, %154, %cst_52 [1] : vector<8x8xf32> to vector<8xf32>
    %156 = vector.shape_cast %155 : vector<8xf32> to vector<8x1xf32>
    %157 = vector.broadcast %156 : vector<8x1xf32> to vector<8x8xf32>
    %158 = arith.subf %154, %157 : vector<8x8xf32>
    %159 = math.exp %158 : vector<8x8xf32>
    %cst_53 = arith.constant dense<0.000000e+00> : vector<8xf32>
    %160 = vector.multi_reduction <add>, %159, %cst_53 [1] : vector<8x8xf32> to vector<8xf32>
    %161 = vector.shape_cast %160 : vector<8xf32> to vector<8x1xf32>
    %162 = tpu.reciprocal %161 : vector<8x1xf32> -> vector<8x1xf32>
    %163 = vector.broadcast %162 : vector<8x1xf32> to vector<8x8xf32>
    %164 = arith.mulf %159, %163 : vector<8x8xf32>
    %cst_54 = arith.constant dense<0.000000e+00> : vector<8x12xf32>
    %165 = tpu.matmul %164, %153, %cst_54 {dimension_numbers = #tpu.dot_dimension_numbers<[1], [0], [0], [1], [0, 0, 1, 1], [], []>} : vector<8x8xf32>, vector<8x12xf32>, vector<8x12xf32> -> vector<8x12xf32>
    %166 = vector.extract_strided_slice %9 {offsets = [0, 120], sizes = [8, 12], strides = [1, 1]} : vector<8x256xf32> to vector<8x12xf32>
    %167 = vector.extract_strided_slice %10 {offsets = [0, 120], sizes = [8, 12], strides = [1, 1]} : vector<8x256xf32> to vector<8x12xf32>
    %168 = vector.extract_strided_slice %11 {offsets = [0, 120], sizes = [8, 12], strides = [1, 1]} : vector<8x256xf32> to vector<8x12xf32>
    %cst_55 = arith.constant dense<0.000000e+00> : vector<8x8xf32>
    %169 = tpu.matmul %166, %167, %cst_55 {dimension_numbers = #tpu.dot_dimension_numbers<[1], [1], [0], [0], [0, 0, 1, 0], [], []>} : vector<8x12xf32>, vector<8x12xf32>, vector<8x8xf32> -> vector<8x8xf32>
    %cst_56 = arith.constant dense<0xFF800000> : vector<8xf32>
    %170 = vector.multi_reduction <maximumf>, %169, %cst_56 [1] : vector<8x8xf32> to vector<8xf32>
    %171 = vector.shape_cast %170 : vector<8xf32> to vector<8x1xf32>
    %172 = vector.broadcast %171 : vector<8x1xf32> to vector<8x8xf32>
    %173 = arith.subf %169, %172 : vector<8x8xf32>
    %174 = math.exp %173 : vector<8x8xf32>
    %cst_57 = arith.constant dense<0.000000e+00> : vector<8xf32>
    %175 = vector.multi_reduction <add>, %174, %cst_57 [1] : vector<8x8xf32> to vector<8xf32>
    %176 = vector.shape_cast %175 : vector<8xf32> to vector<8x1xf32>
    %177 = tpu.reciprocal %176 : vector<8x1xf32> -> vector<8x1xf32>
    %178 = vector.broadcast %177 : vector<8x1xf32> to vector<8x8xf32>
    %179 = arith.mulf %174, %178 : vector<8x8xf32>
    %cst_58 = arith.constant dense<0.000000e+00> : vector<8x12xf32>
    %180 = tpu.matmul %179, %168, %cst_58 {dimension_numbers = #tpu.dot_dimension_numbers<[1], [0], [0], [1], [0, 0, 1, 1], [], []>} : vector<8x8xf32>, vector<8x12xf32>, vector<8x12xf32> -> vector<8x12xf32>
    %181 = vector.extract_strided_slice %9 {offsets = [0, 132], sizes = [8, 12], strides = [1, 1]} : vector<8x256xf32> to vector<8x12xf32>
    %182 = vector.extract_strided_slice %10 {offsets = [0, 132], sizes = [8, 12], strides = [1, 1]} : vector<8x256xf32> to vector<8x12xf32>
    %183 = vector.extract_strided_slice %11 {offsets = [0, 132], sizes = [8, 12], strides = [1, 1]} : vector<8x256xf32> to vector<8x12xf32>
    %cst_59 = arith.constant dense<0.000000e+00> : vector<8x8xf32>
    %184 = tpu.matmul %181, %182, %cst_59 {dimension_numbers = #tpu.dot_dimension_numbers<[1], [1], [0], [0], [0, 0, 1, 0], [], []>} : vector<8x12xf32>, vector<8x12xf32>, vector<8x8xf32> -> vector<8x8xf32>
    %cst_60 = arith.constant dense<0xFF800000> : vector<8xf32>
    %185 = vector.multi_reduction <maximumf>, %184, %cst_60 [1] : vector<8x8xf32> to vector<8xf32>
    %186 = vector.shape_cast %185 : vector<8xf32> to vector<8x1xf32>
    %187 = vector.broadcast %186 : vector<8x1xf32> to vector<8x8xf32>
    %188 = arith.subf %184, %187 : vector<8x8xf32>
    %189 = math.exp %188 : vector<8x8xf32>
    %cst_61 = arith.constant dense<0.000000e+00> : vector<8xf32>
    %190 = vector.multi_reduction <add>, %189, %cst_61 [1] : vector<8x8xf32> to vector<8xf32>
    %191 = vector.shape_cast %190 : vector<8xf32> to vector<8x1xf32>
    %192 = tpu.reciprocal %191 : vector<8x1xf32> -> vector<8x1xf32>
    %193 = vector.broadcast %192 : vector<8x1xf32> to vector<8x8xf32>
    %194 = arith.mulf %189, %193 : vector<8x8xf32>
    %cst_62 = arith.constant dense<0.000000e+00> : vector<8x12xf32>
    %195 = tpu.matmul %194, %183, %cst_62 {dimension_numbers = #tpu.dot_dimension_numbers<[1], [0], [0], [1], [0, 0, 1, 1], [], []>} : vector<8x8xf32>, vector<8x12xf32>, vector<8x12xf32> -> vector<8x12xf32>
    %196 = vector.extract_strided_slice %9 {offsets = [0, 144], sizes = [8, 12], strides = [1, 1]} : vector<8x256xf32> to vector<8x12xf32>
    %197 = vector.extract_strided_slice %10 {offsets = [0, 144], sizes = [8, 12], strides = [1, 1]} : vector<8x256xf32> to vector<8x12xf32>
    %198 = vector.extract_strided_slice %11 {offsets = [0, 144], sizes = [8, 12], strides = [1, 1]} : vector<8x256xf32> to vector<8x12xf32>
    %cst_63 = arith.constant dense<0.000000e+00> : vector<8x8xf32>
    %199 = tpu.matmul %196, %197, %cst_63 {dimension_numbers = #tpu.dot_dimension_numbers<[1], [1], [0], [0], [0, 0, 1, 0], [], []>} : vector<8x12xf32>, vector<8x12xf32>, vector<8x8xf32> -> vector<8x8xf32>
    %cst_64 = arith.constant dense<0xFF800000> : vector<8xf32>
    %200 = vector.multi_reduction <maximumf>, %199, %cst_64 [1] : vector<8x8xf32> to vector<8xf32>
    %201 = vector.shape_cast %200 : vector<8xf32> to vector<8x1xf32>
    %202 = vector.broadcast %201 : vector<8x1xf32> to vector<8x8xf32>
    %203 = arith.subf %199, %202 : vector<8x8xf32>
    %204 = math.exp %203 : vector<8x8xf32>
    %cst_65 = arith.constant dense<0.000000e+00> : vector<8xf32>
    %205 = vector.multi_reduction <add>, %204, %cst_65 [1] : vector<8x8xf32> to vector<8xf32>
    %206 = vector.shape_cast %205 : vector<8xf32> to vector<8x1xf32>
    %207 = tpu.reciprocal %206 : vector<8x1xf32> -> vector<8x1xf32>
    %208 = vector.broadcast %207 : vector<8x1xf32> to vector<8x8xf32>
    %209 = arith.mulf %204, %208 : vector<8x8xf32>
    %cst_66 = arith.constant dense<0.000000e+00> : vector<8x12xf32>
    %210 = tpu.matmul %209, %198, %cst_66 {dimension_numbers = #tpu.dot_dimension_numbers<[1], [0], [0], [1], [0, 0, 1, 1], [], []>} : vector<8x8xf32>, vector<8x12xf32>, vector<8x12xf32> -> vector<8x12xf32>
    %211 = vector.extract_strided_slice %9 {offsets = [0, 156], sizes = [8, 12], strides = [1, 1]} : vector<8x256xf32> to vector<8x12xf32>
    %212 = vector.extract_strided_slice %10 {offsets = [0, 156], sizes = [8, 12], strides = [1, 1]} : vector<8x256xf32> to vector<8x12xf32>
    %213 = vector.extract_strided_slice %11 {offsets = [0, 156], sizes = [8, 12], strides = [1, 1]} : vector<8x256xf32> to vector<8x12xf32>
    %cst_67 = arith.constant dense<0.000000e+00> : vector<8x8xf32>
    %214 = tpu.matmul %211, %212, %cst_67 {dimension_numbers = #tpu.dot_dimension_numbers<[1], [1], [0], [0], [0, 0, 1, 0], [], []>} : vector<8x12xf32>, vector<8x12xf32>, vector<8x8xf32> -> vector<8x8xf32>
    %cst_68 = arith.constant dense<0xFF800000> : vector<8xf32>
    %215 = vector.multi_reduction <maximumf>, %214, %cst_68 [1] : vector<8x8xf32> to vector<8xf32>
    %216 = vector.shape_cast %215 : vector<8xf32> to vector<8x1xf32>
    %217 = vector.broadcast %216 : vector<8x1xf32> to vector<8x8xf32>
    %218 = arith.subf %214, %217 : vector<8x8xf32>
    %219 = math.exp %218 : vector<8x8xf32>
    %cst_69 = arith.constant dense<0.000000e+00> : vector<8xf32>
    %220 = vector.multi_reduction <add>, %219, %cst_69 [1] : vector<8x8xf32> to vector<8xf32>
    %221 = vector.shape_cast %220 : vector<8xf32> to vector<8x1xf32>
    %222 = tpu.reciprocal %221 : vector<8x1xf32> -> vector<8x1xf32>
    %223 = vector.broadcast %222 : vector<8x1xf32> to vector<8x8xf32>
    %224 = arith.mulf %219, %223 : vector<8x8xf32>
    %cst_70 = arith.constant dense<0.000000e+00> : vector<8x12xf32>
    %225 = tpu.matmul %224, %213, %cst_70 {dimension_numbers = #tpu.dot_dimension_numbers<[1], [0], [0], [1], [0, 0, 1, 1], [], []>} : vector<8x8xf32>, vector<8x12xf32>, vector<8x12xf32> -> vector<8x12xf32>
    %226 = vector.extract_strided_slice %9 {offsets = [0, 168], sizes = [8, 12], strides = [1, 1]} : vector<8x256xf32> to vector<8x12xf32>
    %227 = vector.extract_strided_slice %10 {offsets = [0, 168], sizes = [8, 12], strides = [1, 1]} : vector<8x256xf32> to vector<8x12xf32>
    %228 = vector.extract_strided_slice %11 {offsets = [0, 168], sizes = [8, 12], strides = [1, 1]} : vector<8x256xf32> to vector<8x12xf32>
    %cst_71 = arith.constant dense<0.000000e+00> : vector<8x8xf32>
    %229 = tpu.matmul %226, %227, %cst_71 {dimension_numbers = #tpu.dot_dimension_numbers<[1], [1], [0], [0], [0, 0, 1, 0], [], []>} : vector<8x12xf32>, vector<8x12xf32>, vector<8x8xf32> -> vector<8x8xf32>
    %cst_72 = arith.constant dense<0xFF800000> : vector<8xf32>
    %230 = vector.multi_reduction <maximumf>, %229, %cst_72 [1] : vector<8x8xf32> to vector<8xf32>
    %231 = vector.shape_cast %230 : vector<8xf32> to vector<8x1xf32>
    %232 = vector.broadcast %231 : vector<8x1xf32> to vector<8x8xf32>
    %233 = arith.subf %229, %232 : vector<8x8xf32>
    %234 = math.exp %233 : vector<8x8xf32>
    %cst_73 = arith.constant dense<0.000000e+00> : vector<8xf32>
    %235 = vector.multi_reduction <add>, %234, %cst_73 [1] : vector<8x8xf32> to vector<8xf32>
    %236 = vector.shape_cast %235 : vector<8xf32> to vector<8x1xf32>
    %237 = tpu.reciprocal %236 : vector<8x1xf32> -> vector<8x1xf32>
    %238 = vector.broadcast %237 : vector<8x1xf32> to vector<8x8xf32>
    %239 = arith.mulf %234, %238 : vector<8x8xf32>
    %cst_74 = arith.constant dense<0.000000e+00> : vector<8x12xf32>
    %240 = tpu.matmul %239, %228, %cst_74 {dimension_numbers = #tpu.dot_dimension_numbers<[1], [0], [0], [1], [0, 0, 1, 1], [], []>} : vector<8x8xf32>, vector<8x12xf32>, vector<8x12xf32> -> vector<8x12xf32>
    %241 = vector.extract_strided_slice %9 {offsets = [0, 180], sizes = [8, 12], strides = [1, 1]} : vector<8x256xf32> to vector<8x12xf32>
    %242 = vector.extract_strided_slice %10 {offsets = [0, 180], sizes = [8, 12], strides = [1, 1]} : vector<8x256xf32> to vector<8x12xf32>
    %243 = vector.extract_strided_slice %11 {offsets = [0, 180], sizes = [8, 12], strides = [1, 1]} : vector<8x256xf32> to vector<8x12xf32>
    %cst_75 = arith.constant dense<0.000000e+00> : vector<8x8xf32>
    %244 = tpu.matmul %241, %242, %cst_75 {dimension_numbers = #tpu.dot_dimension_numbers<[1], [1], [0], [0], [0, 0, 1, 0], [], []>} : vector<8x12xf32>, vector<8x12xf32>, vector<8x8xf32> -> vector<8x8xf32>
    %cst_76 = arith.constant dense<0xFF800000> : vector<8xf32>
    %245 = vector.multi_reduction <maximumf>, %244, %cst_76 [1] : vector<8x8xf32> to vector<8xf32>
    %246 = vector.shape_cast %245 : vector<8xf32> to vector<8x1xf32>
    %247 = vector.broadcast %246 : vector<8x1xf32> to vector<8x8xf32>
    %248 = arith.subf %244, %247 : vector<8x8xf32>
    %249 = math.exp %248 : vector<8x8xf32>
    %cst_77 = arith.constant dense<0.000000e+00> : vector<8xf32>
    %250 = vector.multi_reduction <add>, %249, %cst_77 [1] : vector<8x8xf32> to vector<8xf32>
    %251 = vector.shape_cast %250 : vector<8xf32> to vector<8x1xf32>
    %252 = tpu.reciprocal %251 : vector<8x1xf32> -> vector<8x1xf32>
    %253 = vector.broadcast %252 : vector<8x1xf32> to vector<8x8xf32>
    %254 = arith.mulf %249, %253 : vector<8x8xf32>
    %cst_78 = arith.constant dense<0.000000e+00> : vector<8x12xf32>
    %255 = tpu.matmul %254, %243, %cst_78 {dimension_numbers = #tpu.dot_dimension_numbers<[1], [0], [0], [1], [0, 0, 1, 1], [], []>} : vector<8x8xf32>, vector<8x12xf32>, vector<8x12xf32> -> vector<8x12xf32>
    %256 = tpu.concatenate %30, %45, %60, %75, %90, %105, %120, %135, %150, %165, %180, %195, %210, %225, %240, %255 in 1 : vector<8x12xf32>, vector<8x12xf32>, vector<8x12xf32>, vector<8x12xf32>, vector<8x12xf32>, vector<8x12xf32>, vector<8x12xf32>, vector<8x12xf32>, vector<8x12xf32>, vector<8x12xf32>, vector<8x12xf32>, vector<8x12xf32>, vector<8x12xf32>, vector<8x12xf32>, vector<8x12xf32>, vector<8x12xf32> -> vector<8x192xf32>
    %cst_79 = arith.constant dense<0.000000e+00> : vector<8x256xf32>
    %257 = tpu.matmul %256, %12, %cst_79 {dimension_numbers = #tpu.dot_dimension_numbers<[1], [0], [0], [1], [0, 0, 1, 1], [], []>} : vector<8x192xf32>, vector<192x256xf32>, vector<8x256xf32> -> vector<8x256xf32>
    %258 = vector.broadcast %13 : vector<1x256xf32> to vector<8x256xf32>
    %259 = arith.addf %257, %258 : vector<8x256xf32>
    %260 = arith.addf %259, %1 : vector<8x256xf32>
    %cst_80 = arith.constant dense<0.000000e+00> : vector<8xf32>
    %261 = vector.multi_reduction <add>, %260, %cst_80 [1] : vector<8x256xf32> to vector<8xf32>
    %262 = vector.shape_cast %261 : vector<8xf32> to vector<8x1xf32>
    %cst_81 = arith.constant 0.00520833349 : f32
    %263 = vector.broadcast %cst_81 : f32 to vector<8x1xf32>
    %264 = arith.mulf %262, %263 : vector<8x1xf32>
    %265 = arith.mulf %260, %260 : vector<8x256xf32>
    %cst_82 = arith.constant dense<0.000000e+00> : vector<8xf32>
    %266 = vector.multi_reduction <add>, %265, %cst_82 [1] : vector<8x256xf32> to vector<8xf32>
    %267 = vector.shape_cast %266 : vector<8xf32> to vector<8x1xf32>
    %cst_83 = arith.constant 0.00520833349 : f32
    %268 = vector.broadcast %cst_83 : f32 to vector<8x1xf32>
    %269 = arith.mulf %267, %268 : vector<8x1xf32>
    %270 = arith.mulf %264, %264 : vector<8x1xf32>
    %271 = arith.subf %269, %270 : vector<8x1xf32>
    %272 = vector.broadcast %264 : vector<8x1xf32> to vector<8x256xf32>
    %273 = arith.subf %260, %272 : vector<8x256xf32>
    %cst_84 = arith.constant 9.99999996E-13 : f32
    %274 = vector.broadcast %cst_84 : f32 to vector<8x1xf32>
    %275 = arith.addf %271, %274 : vector<8x1xf32>
    %276 = math.rsqrt %275 : vector<8x1xf32>
    %277 = vector.broadcast %276 : vector<8x1xf32> to vector<8x256xf32>
    %278 = arith.mulf %273, %277 : vector<8x256xf32>
    %279 = vector.broadcast %14 : vector<1x256xf32> to vector<8x256xf32>
    %280 = arith.mulf %278, %279 : vector<8x256xf32>
    %281 = vector.broadcast %15 : vector<1x256xf32> to vector<8x256xf32>
    %282 = arith.addf %280, %281 : vector<8x256xf32>
    %c0_85 = arith.constant 0 : index
    %c0_86 = arith.constant 0 : index
    %c0_87 = arith.constant 0 : index
    %283 = vector.load %arg8[%c0_85, %c0_86, %c0_87] : memref<1x8x256xf32, #tpu.memory_space<vmem>>, vector<1x8x256xf32>
    %284 = vector.shape_cast %283 : vector<1x8x256xf32> to vector<8x256xf32>
    %285 = vector.shape_cast %282 : vector<8x256xf32> to vector<1x8x256xf32>
    tpu.vector_store %arg8[%c0_85, %c0_86, %c0_87], %285 {strides = array<i32>} : memref<1x8x256xf32, #tpu.memory_space<vmem>>, vector<1x8x256xf32>,
    return
  }
  func.func @transform_0(%arg0: i32) -> (i32, i32, i32) {
    %c0_i32 = arith.constant 0 : i32
    %c0_i32_0 = arith.constant 0 : i32
    %c0_i32_1 = arith.constant 0 : i32
    return %arg0, %c0_i32, %c0_i32_0 : i32, i32, i32
  }
  func.func @transform_1(%arg0: i32) -> (i32, i32) {
    %c0_i32 = arith.constant 0 : i32
    %c0_i32_0 = arith.constant 0 : i32
    %c0_i32_1 = arith.constant 0 : i32
    return %c0_i32, %c0_i32_0 : i32, i32
  }
  func.func @transform_2(%arg0: i32) -> (i32, i32) {
    %c0_i32 = arith.constant 0 : i32
    %c0_i32_0 = arith.constant 0 : i32
    %c0_i32_1 = arith.constant 0 : i32
    return %c0_i32, %c0_i32_0 : i32, i32
  }
  func.func @transform_3(%arg0: i32) -> (i32, i32) {
    %c0_i32 = arith.constant 0 : i32
    %c0_i32_0 = arith.constant 0 : i32
    %c0_i32_1 = arith.constant 0 : i32
    return %c0_i32, %c0_i32_0 : i32, i32
  }
  func.func @transform_4(%arg0: i32) -> (i32, i32) {
    %c0_i32 = arith.constant 0 : i32
    %c0_i32_0 = arith.constant 0 : i32
    %c0_i32_1 = arith.constant 0 : i32
    return %c0_i32, %c0_i32_0 : i32, i32
  }
  func.func @transform_5(%arg0: i32) -> (i32, i32) {
    %c0_i32 = arith.constant 0 : i32
    %c0_i32_0 = arith.constant 0 : i32
    %c0_i32_1 = arith.constant 0 : i32
    return %c0_i32, %c0_i32_0 : i32, i32
  }
  func.func @transform_6(%arg0: i32) -> (i32, i32) {
    %c0_i32 = arith.constant 0 : i32
    %c0_i32_0 = arith.constant 0 : i32
    %c0_i32_1 = arith.constant 0 : i32
    return %c0_i32, %c0_i32_0 : i32, i32
  }
  func.func @transform_7(%arg0: i32) -> (i32, i32, i32) {
    %c0_i32 = arith.constant 0 : i32
    %c0_i32_0 = arith.constant 0 : i32
    %c0_i32_1 = arith.constant 0 : i32
    return %arg0, %c0_i32, %c0_i32_0 : i32, i32, i32
  }
}

</mosaic_0001>

<llo_original>
// kernel: tpu_custom_call.1
$region0: #{tpu_custom_call.1}
  #allocation0 [shape = 'u32[]', space=smem, size = 0x4, offset = 0x4, fixed_abs, tag = 'smem constant byte address 0x4 - core index']
  #allocation1 [shape = 'u32[144,128]{1,0:T(1,128)}', space=vmem, size = 0x12000, scoped, tag = 'internal scratch']
  %s0 = inlined_call_operand.hbm [shape: f32[2,8,256], index: 0, kind: input, shape index: {}]
  %s1 = inlined_call_operand.hbm [shape: f32[256,768], index: 1, kind: input, shape index: {}]
  %s2 = inlined_call_operand.vmem [shape: f32[1,768], index: 2, kind: input, shape index: {}]
  %s3 = inlined_call_operand.hbm [shape: f32[192,256], index: 3, kind: input, shape index: {}]
  %s4 = inlined_call_operand.vmem [shape: f32[1,256], index: 4, kind: input, shape index: {}]
  %s5 = inlined_call_operand.vmem [shape: f32[1,256], index: 5, kind: input, shape index: {}]
  %s6 = inlined_call_operand.vmem [shape: f32[1,256], index: 6, kind: input, shape index: {}]
  %s7 = inlined_call_operand.hbm [shape: f32[2,8,256], index: 7, kind: output, shape index: {}]
  %s8 = sld [smem:[#allocation0]]
  $region73: #{tpu_custom_call.1} parent=0
    _
  %s10 = ssub.s32 1, %s8
  %s11 = scalar_select 0, %s10, %s8
  $region1: #{tpu_custom_call.1} parent=0
    #allocation2 [shape = 'u8[16384]{0}', space=vmem, size = 0x4000, scoped, tag = 'input window, operand 0']
    #allocation3 [shape = 's32[2]{0}', space=sflag, size = 0x8, scoped, tag = 'scoped memory for tpu_custom_call.1']
    #allocation4 [shape = 's32[2]{0}', space=sflag, size = 0x8, scoped, tag = 'scoped memory for tpu_custom_call.1']
    #allocation5 [shape = 'u8[786432]{0}', space=vmem, size = 0xc0000, scoped, tag = 'input window, operand 1, single buffered']
    #allocation6 [shape = 's32[1]{0}', space=sflag, size = 0x4, scoped, tag = 'scoped memory for tpu_custom_call.1']
    #allocation7 [shape = 'u8[196608]{0}', space=vmem, size = 0x30000, scoped, tag = 'input window, operand 3, single buffered']
    #allocation8 [shape = 'u8[16384]{0}', space=vmem, size = 0x4000, scoped, tag = 'output window, operand 0']
    %12 = vsyncpa [#allocation3], 0
    %s13 = scalar_lea.sflag [#allocation3], 1
    %14 = vsyncpa %s13, 0
    %15 = vsyncpa [#allocation6], 0
    %16 = vsyncpa [#allocation4], 0
    %s17 = scalar_lea.sflag [#allocation4], 1
    %18 = vsyncpa %s17, 0
    loop: start=0, step=1, limit=4
    $region2: #{tpu_custom_call.1} parent=1 // loop_pre_header
      _
    $region3: #{tpu_custom_call.1} parent=1 // loop_header
      %s20 = sphi 0, %s24
      %p21 = scmp.ge.s32.totalorder %s20, 4
      %s30 = sphi 0, %s32
      %s33 = sphi 0, %s30
      %s34 = sphi 0, %s33
      %s50 = sphi 0, %s34
      %s54 = sphi 0, %s54
      %s56 = sphi 0, %s54
      %s57 = sphi 0, %s56
      %s71 = sphi 0, %s57
      %s75 = sphi 0, %s75
      %s77 = sphi 0, %s75
      %s78 = sphi 0, %s77
      %s92 = sphi 0, %s78
      %s96 = sphi 0, %s96
      %s98 = sphi 0, %s96
      %s99 = sphi 0, %s98
      %s113 = sphi 0, %s99
      %s117 = sphi 0, %s117
      %s119 = sphi 0, %s117
      %s120 = sphi 0, %s119
      %s134 = sphi 0, %s120
      %s138 = sphi 0, %s138
      %s140 = sphi 0, %s138
      %s141 = sphi 0, %s140
      %s155 = sphi 0, %s141
      %s159 = sphi 0, %s159
      %s161 = sphi 0, %s159
      %s162 = sphi 0, %s161
      %s176 = sphi 0, %s162
      %s182 = sphi 0, %s184
      %s185 = sphi 0, %s182
      %s186 = sphi 0, %s185
      %s202 = sphi 0, %s186
    $region4: #{tpu_custom_call.1} parent=1 // loop_header_branch
      %23 = sbr.rel (%p21) target = $region8
    $region5: #{tpu_custom_call.1} parent=1 // loop_body
      %s25 = ssub.s32 %s20, 1
      %s26 = ssub.s32 %s20, 2
      %s27 = sadd.s32 %s20, 1
      %s28 = ssub.s32 %s20, %s27
      %p29 = scmp.eq.s32.totalorder %s28, 0
      %s31 = sadd.s32 %s30, 1
      %s32 = scalar_select %p29, %s30, %s31
      %p35 = pneg %p29
      %p36 = scmp.eq.s32.totalorder %s20, 1
      %p37 = por %p35, %p36
      %p38 = scmp.ne.s32.totalorder %s30, %s33
      %p39 = scmp.eq.s32.totalorder %s20, 0
      %p40 = por %p38, %p39
      %p41 = scmp.ne.s32.totalorder %s30, %s33
      %p42 = scmp.eq.s32.totalorder %s25, 1
      %p43 = por %p41, %p42
      %p44 = scmp.ne.s32.totalorder %s33, %s34
      %p45 = scmp.eq.s32.totalorder %s25, 0
      %p46 = por %p44, %p45
      %p47 = scmp.ne.s32.totalorder %s33, %s34
      %p48 = scmp.eq.s32.totalorder %s26, 1
      %p49 = por %p47, %p48
      %p51 = scmp.ne.s32.totalorder %s34, %s50
      %p52 = scmp.eq.s32.totalorder %s26, 0
      %p53 = por %p51, %p52
      %s55 = sadd.s32 %s54, 1
      %p58 = scmp.eq.s32.totalorder %s20, 1
      %p59 = scmp.ne.s32.totalorder %s54, %s56
      %p60 = scmp.eq.s32.totalorder %s20, 0
      %p61 = por %p59, %p60
      %p62 = scmp.ne.s32.totalorder %s54, %s56
      %p63 = scmp.eq.s32.totalorder %s25, 1
      %p64 = por %p62, %p63
      %p65 = scmp.ne.s32.totalorder %s56, %s57
      %p66 = scmp.eq.s32.totalorder %s25, 0
      %p67 = por %p65, %p66
      %p68 = scmp.ne.s32.totalorder %s56, %s57
      %p69 = scmp.eq.s32.totalorder %s26, 1
      %p70 = por %p68, %p69
      %p72 = scmp.ne.s32.totalorder %s57, %s71
      %p73 = scmp.eq.s32.totalorder %s26, 0
      %p74 = por %p72, %p73
      %s76 = sadd.s32 %s75, 1
      %p79 = scmp.eq.s32.totalorder %s20, 1
      %p80 = scmp.ne.s32.totalorder %s75, %s77
      %p81 = scmp.eq.s32.totalorder %s20, 0
      %p82 = por %p80, %p81
      %p83 = scmp.ne.s32.totalorder %s75, %s77
      %p84 = scmp.eq.s32.totalorder %s25, 1
      %p85 = por %p83, %p84
      %p86 = scmp.ne.s32.totalorder %s77, %s78
      %p87 = scmp.eq.s32.totalorder %s25, 0
      %p88 = por %p86, %p87
      %p89 = scmp.ne.s32.totalorder %s77, %s78
      %p90 = scmp.eq.s32.totalorder %s26, 1
      %p91 = por %p89, %p90
      %p93 = scmp.ne.s32.totalorder %s78, %s92
      %p94 = scmp.eq.s32.totalorder %s26, 0
      %p95 = por %p93, %p94
      %s97 = sadd.s32 %s96, 1
      %p100 = scmp.eq.s32.totalorder %s20, 1
      %p101 = scmp.ne.s32.totalorder %s96, %s98
      %p102 = scmp.eq.s32.totalorder %s20, 0
      %p103 = por %p101, %p102
      %p104 = scmp.ne.s32.totalorder %s96, %s98
      %p105 = scmp.eq.s32.totalorder %s25, 1
      %p106 = por %p104, %p105
      %p107 = scmp.ne.s32.totalorder %s98, %s99
      %p108 = scmp.eq.s32.totalorder %s25, 0
      %p109 = por %p107, %p108
      %p110 = scmp.ne.s32.totalorder %s98, %s99
      %p111 = scmp.eq.s32.totalorder %s26, 1
      %p112 = por %p110, %p111
      %p114 = scmp.ne.s32.totalorder %s99, %s113
      %p115 = scmp.eq.s32.totalorder %s26, 0
      %p116 = por %p114, %p115
      %s118 = sadd.s32 %s117, 1
      %p121 = scmp.eq.s32.totalorder %s20, 1
      %p122 = scmp.ne.s32.totalorder %s117, %s119
      %p123 = scmp.eq.s32.totalorder %s20, 0
      %p124 = por %p122, %p123
      %p125 = scmp.ne.s32.totalorder %s117, %s119
      %p126 = scmp.eq.s32.totalorder %s25, 1
      %p127 = por %p125, %p126
      %p128 = scmp.ne.s32.totalorder %s119, %s120
      %p129 = scmp.eq.s32.totalorder %s25, 0
      %p130 = por %p128, %p129
      %p131 = scmp.ne.s32.totalorder %s119, %s120
      %p132 = scmp.eq.s32.totalorder %s26, 1
      %p133 = por %p131, %p132
      %p135 = scmp.ne.s32.totalorder %s120, %s134
      %p136 = scmp.eq.s32.totalorder %s26, 0
      %p137 = por %p135, %p136
      %s139 = sadd.s32 %s138, 1
      %p142 = scmp.eq.s32.totalorder %s20, 1
      %p143 = scmp.ne.s32.totalorder %s138, %s140
      %p144 = scmp.eq.s32.totalorder %s20, 0
      %p145 = por %p143, %p144
      %p146 = scmp.ne.s32.totalorder %s138, %s140
      %p147 = scmp.eq.s32.totalorder %s25, 1
      %p148 = por %p146, %p147
      %p149 = scmp.ne.s32.totalorder %s140, %s141
      %p150 = scmp.eq.s32.totalorder %s25, 0
      %p151 = por %p149, %p150
      %p152 = scmp.ne.s32.totalorder %s140, %s141
      %p153 = scmp.eq.s32.totalorder %s26, 1
      %p154 = por %p152, %p153
      %p156 = scmp.ne.s32.totalorder %s141, %s155
      %p157 = scmp.eq.s32.totalorder %s26, 0
      %p158 = por %p156, %p157
      %s160 = sadd.s32 %s159, 1
      %p163 = scmp.eq.s32.totalorder %s20, 1
      %p164 = scmp.ne.s32.totalorder %s159, %s161
      %p165 = scmp.eq.s32.totalorder %s20, 0
      %p166 = por %p164, %p165
      %p167 = scmp.ne.s32.totalorder %s159, %s161
      %p168 = scmp.eq.s32.totalorder %s25, 1
      %p169 = por %p167, %p168
      %p170 = scmp.ne.s32.totalorder %s161, %s162
      %p171 = scmp.eq.s32.totalorder %s25, 0
      %p172 = por %p170, %p171
      %p173 = scmp.ne.s32.totalorder %s161, %s162
      %p174 = scmp.eq.s32.totalorder %s26, 1
      %p175 = por %p173, %p174
      %p177 = scmp.ne.s32.totalorder %s162, %s176
      %p178 = scmp.eq.s32.totalorder %s26, 0
      %p179 = por %p177, %p178
      %s180 = ssub.s32 %s20, %s27
      %p181 = scmp.eq.s32.totalorder %s180, 0
      %s183 = sadd.s32 %s182, 1
      %s184 = scalar_select %p181, %s182, %s183
      %p187 = pneg %p181
      %p188 = scmp.eq.s32.totalorder %s20, 1
      %p189 = por %p187, %p188
      %p190 = scmp.ne.s32.totalorder %s182, %s185
      %p191 = scmp.eq.s32.totalorder %s20, 0
      %p192 = por %p190, %p191
      %p193 = scmp.ne.s32.totalorder %s182, %s185
      %p194 = scmp.eq.s32.totalorder %s25, 1
      %p195 = por %p193, %p194
      %p196 = scmp.ne.s32.totalorder %s185, %s186
      %p197 = scmp.eq.s32.totalorder %s25, 0
      %p198 = por %p196, %p197
      %p199 = scmp.ne.s32.totalorder %s185, %s186
      %p200 = scmp.eq.s32.totalorder %s26, 1
      %p201 = por %p199, %p200
      %p203 = scmp.ne.s32.totalorder %s186, %s202
      %p204 = scmp.eq.s32.totalorder %s26, 0
      %p205 = por %p203, %p204
      %p206 = scmp.le.s32.totalorder 1, %s20
      %p207 = scmp.lt.s32.totalorder %s20, 3
      %p208 = pnand %p206, %p207
      %p209 = pneg %p208
      // Predicated region
      $region9: #{tpu_custom_call.1} parent=5 // pred_check
        _
      $region10: #{tpu_custom_call.1} parent=5 // pred_check_branch
        %211 = sbr.rel (%p208) target = $region12
      $region11: #{tpu_custom_call.1} parent=5 // pred_region
        %s212 = ssub.s32 %s20, 1
        // Predicated region
        $region13: #{tpu_custom_call.1} parent=11 // pred_check
          %p213 = pneg %p67
        $region14: #{tpu_custom_call.1} parent=11 // pred_check_branch
          %215 = sbr.rel (%p213) target = $region16
        $region15: #{tpu_custom_call.1} parent=11 // pred_region
          %s217 = ssub.s32 24576, 24576
          %218 = vsyncadd [#allocation6], %s217
          %s219 = sshll.u32 [#allocation5], 4
          %s220 = int_to_ptr.vmem [resolvable:$true] %s219
          %225 = dma.hbm_to_vmem [thread:$0]  %s1, 24576, %s220, [#allocation6], 768, 768, 48
        $region16: #{tpu_custom_call.1} parent=11 // pred_fallthru
          _
        // Predicated region
        $region17: #{tpu_custom_call.1} parent=11 // pred_check
          %p226 = pneg %p88
        $region18: #{tpu_custom_call.1} parent=11 // pred_check_branch
          %228 = sbr.rel (%p226) target = $region20
        $region19: #{tpu_custom_call.1} parent=11 // pred_region
          _
        $region20: #{tpu_custom_call.1} parent=11 // pred_fallthru
          _
        // Predicated region
        $region21: #{tpu_custom_call.1} parent=11 // pred_check
          %p229 = pneg %p109
        $region22: #{tpu_custom_call.1} parent=11 // pred_check_branch
          %231 = sbr.rel (%p229) target = $region24
        $region23: #{tpu_custom_call.1} parent=11 // pred_region
          %s233 = ssub.s32 6144, 6144
          %234 = vsyncadd [#allocation6], %s233
          %s235 = sshll.u32 [#allocation7], 4
          %s236 = int_to_ptr.vmem [resolvable:$true] %s235
          %241 = dma.hbm_to_vmem [thread:$0]  %s3, 6144, %s236, [#allocation6], 256, 256, 16
        $region24: #{tpu_custom_call.1} parent=11 // pred_fallthru
          _
        // Predicated region
        $region25: #{tpu_custom_call.1} parent=11 // pred_check
          %p242 = pneg %p130
        $region26: #{tpu_custom_call.1} parent=11 // pred_check_branch
          %244 = sbr.rel (%p242) target = $region28
        $region27: #{tpu_custom_call.1} parent=11 // pred_region
          _
        $region28: #{tpu_custom_call.1} parent=11 // pred_fallthru
          _
        // Predicated region
        $region29: #{tpu_custom_call.1} parent=11 // pred_check
          %p245 = pneg %p151
        $region30: #{tpu_custom_call.1} parent=11 // pred_check_branch
          %247 = sbr.rel (%p245) target = $region32
        $region31: #{tpu_custom_call.1} parent=11 // pred_region
          _
        $region32: #{tpu_custom_call.1} parent=11 // pred_fallthru
          _
        // Predicated region
        $region33: #{tpu_custom_call.1} parent=11 // pred_check
          %p248 = pneg %p172
        $region34: #{tpu_custom_call.1} parent=11 // pred_check_branch
          %250 = sbr.rel (%p248) target = $region36
        $region35: #{tpu_custom_call.1} parent=11 // pred_region
          _
        $region36: #{tpu_custom_call.1} parent=11 // pred_fallthru
          _
      $region12: #{tpu_custom_call.1} parent=5 // pred_fallthru
        _
      %p251 = scmp.lt.s32.totalorder %s20, 2
      // Predicated region
      $region37: #{tpu_custom_call.1} parent=5 // pred_check
        %p252 = pneg %p251
      $region38: #{tpu_custom_call.1} parent=5 // pred_check_branch
        %254 = sbr.rel (%p252) target = $region40
      $region39: #{tpu_custom_call.1} parent=5 // pred_region
        // Predicated region
        $region41: #{tpu_custom_call.1} parent=39 // pred_check
          %p255 = pneg %p40
        $region42: #{tpu_custom_call.1} parent=39 // pred_check_branch
          %257 = sbr.rel (%p255) target = $region44
        $region43: #{tpu_custom_call.1} parent=39 // pred_region
          %s258 = sand.u32 %s30, 1
          %s259 = scalar_lea.sflag [#allocation3], %s258
          %s260 = sand.u32 %s30, 1
          %s261 = smul.addr %s260, 16
          %s262 = scalar_lea.vmem [#allocation2], %s261
          %s264 = ssub.s32 256, 256
          %265 = vsyncadd %s259, %s264
          %s266 = smul.addr %s20, 2
          %s267 = smul.addr %s266, 128
          %s268 = scalar_lea.hbm %s0, %s267
          %s270 = sshll.u32 %s262, 4
          %s271 = int_to_ptr.vmem [resolvable:$true] %s270
          %273 = dma.hbm_to_vmem [thread:$0]  %s268, 256, %s271, %s259
        $region44: #{tpu_custom_call.1} parent=39 // pred_fallthru
          _
      $region40: #{tpu_custom_call.1} parent=5 // pred_fallthru
        _
      %p274 = scmp.le.s32.totalorder 1, %s20
      %p275 = scmp.lt.s32.totalorder %s20, 3
      %p276 = pnand %p274, %p275
      %p277 = pneg %p276
      // Predicated region
      $region45: #{tpu_custom_call.1} parent=5 // pred_check
        _
      $region46: #{tpu_custom_call.1} parent=5 // pred_check_branch
        %279 = sbr.rel (%p276) target = $region48
      $region47: #{tpu_custom_call.1} parent=5 // pred_region
        %s280 = ssub.s32 %s20, 1
        %s281 = sand.u32 %s33, 1
        %s282 = scalar_lea.sflag [#allocation3], %s281
        %s283 = sand.u32 %s33, 1
        %s284 = smul.addr %s283, 16
        %s285 = scalar_lea.vmem [#allocation2], %s284
        // Predicated region
        $region49: #{tpu_custom_call.1} parent=47 // pred_check
          %p286 = pneg %p46
        $region50: #{tpu_custom_call.1} parent=47 // pred_check_branch
          %288 = sbr.rel (%p286) target = $region52
        $region51: #{tpu_custom_call.1} parent=47 // pred_region
          %289 = dma.done %s282, 256
        $region52: #{tpu_custom_call.1} parent=47 // pred_fallthru
          _
        // Predicated region
        $region53: #{tpu_custom_call.1} parent=47 // pred_check
          %p290 = pneg %p67
        $region54: #{tpu_custom_call.1} parent=47 // pred_check_branch
          %292 = sbr.rel (%p290) target = $region56
        $region55: #{tpu_custom_call.1} parent=47 // pred_region
          %293 = dma.done [#allocation6], 24576
        $region56: #{tpu_custom_call.1} parent=47 // pred_fallthru
          _
        // Predicated region
        $region57: #{tpu_custom_call.1} parent=47 // pred_check
          %p294 = pneg %p109
        $region58: #{tpu_custom_call.1} parent=47 // pred_check_branch
          %296 = sbr.rel (%p294) target = $region60
        $region59: #{tpu_custom_call.1} parent=47 // pred_region
          %297 = dma.done [#allocation6], 6144
        $region60: #{tpu_custom_call.1} parent=47 // pred_fallthru
          _
        %s298 = sand.u32 %s33, 1
        %s299 = scalar_lea.sflag [#allocation3], %s298
        %s300 = sand.u32 %s33, 1
        %s301 = smul.addr %s300, 16
        %s302 = scalar_lea.vmem [#allocation2], %s301
        %p303 = pneg %p46
        %p304 = pneg %p43
        %p305 = pneg %p67
        %p306 = pneg %p64
        %p307 = pneg %p88
        %p308 = pneg %p85
        %p309 = pneg %p109
        %p310 = pneg %p106
        %p311 = pneg %p130
        %p312 = pneg %p127
        %p313 = pneg %p151
        %p314 = pneg %p148
        %p315 = pneg %p172
        %p316 = pneg %p169
        %p317 = pneg %p198
        %p318 = pneg %p195
        %s319 = sand.u32 %s185, 1
        %s320 = scalar_lea.sflag [#allocation4], %s319
        %s321 = sand.u32 %s185, 1
        %s322 = smul.addr %s321, 16
        %s323 = scalar_lea.vmem [#allocation8], %s322
        %v324 = vld [vmem:[%s285] sm:$0xff]
        %v325 = vld [vmem:[%s285 + $0x8] sm:$0xff]
        %v326 = vld [vmem:[#allocation5] sm:$0xff]
        %v327 = vld [vmem:[#allocation5 + $0x8] sm:$0xff]
        %v328 = vld [vmem:[#allocation5 + $0x10] sm:$0xff]
        %v329 = vld [vmem:[#allocation5 + $0x18] sm:$0xff]
        %v330 = vld [vmem:[#allocation5 + $0x20] sm:$0xff]
        %v331 = vld [vmem:[#allocation5 + $0x28] sm:$0xff]
        %v332 = vld [vmem:[#allocation5 + $0x30] sm:$0xff]
        %v333 = vld [vmem:[#allocation5 + $0x38] sm:$0xff]
        %v334 = vld [vmem:[#allocation5 + $0x40] sm:$0xff]
        %v335 = vld [vmem:[#allocation5 + $0x48] sm:$0xff]
        %v336 = vld [vmem:[#allocation5 + $0x50] sm:$0xff]
        %v337 = vld [vmem:[#allocation5 + $0x58] sm:$0xff]
        %v338 = vld [vmem:[#allocation5 + $0x60] sm:$0xff]
        %v339 = vld [vmem:[#allocation5 + $0x68] sm:$0xff]
        %v340 = vld [vmem:[#allocation5 + $0x70] sm:$0xff]
        %v341 = vld [vmem:[#allocation5 + $0x78] sm:$0xff]
        %v342 = vld [vmem:[#allocation5 + $0x80] sm:$0xff]
        %v343 = vld [vmem:[#allocation5 + $0x88] sm:$0xff]
        %v344 = vld [vmem:[#allocation5 + $0x90] sm:$0xff]
        %v345 = vld [vmem:[#allocation5 + $0x98] sm:$0xff]
        %v346 = vld [vmem:[#allocation5 + $0xa0] sm:$0xff]
        %v347 = vld [vmem:[#allocation5 + $0xa8] sm:$0xff]
        %v348 = vld [vmem:[#allocation5 + $0xb0] sm:$0xff]
        %v349 = vld [vmem:[#allocation5 + $0xb8] sm:$0xff]
        %v350 = vld [vmem:[#allocation5 + $0xc0] sm:$0xff]
        %v351 = vld [vmem:[#allocation5 + $0xc8] sm:$0xff]
        %v352 = vld [vmem:[#allocation5 + $0xd0] sm:$0xff]
        %v353 = vld [vmem:[#allocation5 + $0xd8] sm:$0xff]
        %v354 = vld [vmem:[#allocation5 + $0xe0] sm:$0xff]
        %v355 = vld [vmem:[#allocation5 + $0xe8] sm:$0xff]
        %v356 = vld [vmem:[#allocation5 + $0xf0] sm:$0xff]
        %v357 = vld [vmem:[#allocation5 + $0xf8] sm:$0xff]
        %v358 = vld [vmem:[#allocation5 + $0x100] sm:$0xff]
        %v359 = vld [vmem:[#allocation5 + $0x108] sm:$0xff]
        %v360 = vld [vmem:[#allocation5 + $0x110] sm:$0xff]
        %v361 = vld [vmem:[#allocation5 + $0x118] sm:$0xff]
        %v362 = vld [vmem:[#allocation5 + $0x120] sm:$0xff]
        %v363 = vld [vmem:[#allocation5 + $0x128] sm:$0xff]
        %v364 = vld [vmem:[#allocation5 + $0x130] sm:$0xff]
        %v365 = vld [vmem:[#allocation5 + $0x138] sm:$0xff]
        %v366 = vld [vmem:[#allocation5 + $0x140] sm:$0xff]
        %v367 = vld [vmem:[#allocation5 + $0x148] sm:$0xff]
        %v368 = vld [vmem:[#allocation5 + $0x150] sm:$0xff]
        %v369 = vld [vmem:[#allocation5 + $0x158] sm:$0xff]
        %v370 = vld [vmem:[#allocation5 + $0x160] sm:$0xff]
        %v371 = vld [vmem:[#allocation5 + $0x168] sm:$0xff]
        %v372 = vld [vmem:[#allocation5 + $0x170] sm:$0xff]
        %v373 = vld [vmem:[#allocation5 + $0x178] sm:$0xff]
        %v374 = vld [vmem:[#allocation5 + $0x180] sm:$0xff]
        %v375 = vld [vmem:[#allocation5 + $0x188] sm:$0xff]
        %v376 = vld [vmem:[#allocation5 + $0x190] sm:$0xff]
        %v377 = vld [vmem:[#allocation5 + $0x198] sm:$0xff]
        %v378 = vld [vmem:[#allocation5 + $0x1a0] sm:$0xff]
        %v379 = vld [vmem:[#allocation5 + $0x1a8] sm:$0xff]
        %v380 = vld [vmem:[#allocation5 + $0x1b0] sm:$0xff]
        %v381 = vld [vmem:[#allocation5 + $0x1b8] sm:$0xff]
        %v382 = vld [vmem:[#allocation5 + $0x1c0] sm:$0xff]
        %v383 = vld [vmem:[#allocation5 + $0x1c8] sm:$0xff]
        %v384 = vld [vmem:[#allocation5 + $0x1d0] sm:$0xff]
        %v385 = vld [vmem:[#allocation5 + $0x1d8] sm:$0xff]
        %v386 = vld [vmem:[#allocation5 + $0x1e0] sm:$0xff]
        %v387 = vld [vmem:[#allocation5 + $0x1e8] sm:$0xff]
        %v388 = vld [vmem:[#allocation5 + $0x1f0] sm:$0xff]
        %v389 = vld [vmem:[#allocation5 + $0x1f8] sm:$0xff]
        %v390 = vld [vmem:[#allocation5 + $0x200] sm:$0xff]
        %v391 = vld [vmem:[#allocation5 + $0x208] sm:$0xff]
        %v392 = vld [vmem:[#allocation5 + $0x210] sm:$0xff]
        %v393 = vld [vmem:[#allocation5 + $0x218] sm:$0xff]
        %v394 = vld [vmem:[#allocation5 + $0x220] sm:$0xff]
        %v395 = vld [vmem:[#allocation5 + $0x228] sm:$0xff]
        %v396 = vld [vmem:[#allocation5 + $0x230] sm:$0xff]
        %v397 = vld [vmem:[#allocation5 + $0x238] sm:$0xff]
        %v398 = vld [vmem:[#allocation5 + $0x240] sm:$0xff]
        %v399 = vld [vmem:[#allocation5 + $0x248] sm:$0xff]
        %v400 = vld [vmem:[#allocation5 + $0x250] sm:$0xff]
        %v401 = vld [vmem:[#allocation5 + $0x258] sm:$0xff]
        %v402 = vld [vmem:[#allocation5 + $0x260] sm:$0xff]
        %v403 = vld [vmem:[#allocation5 + $0x268] sm:$0xff]
        %v404 = vld [vmem:[#allocation5 + $0x270] sm:$0xff]
        %v405 = vld [vmem:[#allocation5 + $0x278] sm:$0xff]
        %v406 = vld [vmem:[#allocation5 + $0x280] sm:$0xff]
        %v407 = vld [vmem:[#allocation5 + $0x288] sm:$0xff]
        %v408 = vld [vmem:[#allocation5 + $0x290] sm:$0xff]
        %v409 = vld [vmem:[#allocation5 + $0x298] sm:$0xff]
        %v410 = vld [vmem:[#allocation5 + $0x2a0] sm:$0xff]
        %v411 = vld [vmem:[#allocation5 + $0x2a8] sm:$0xff]
        %v412 = vld [vmem:[#allocation5 + $0x2b0] sm:$0xff]
        %v413 = vld [vmem:[#allocation5 + $0x2b8] sm:$0xff]
        %v414 = vld [vmem:[#allocation5 + $0x2c0] sm:$0xff]
        %v415 = vld [vmem:[#allocation5 + $0x2c8] sm:$0xff]
        %v416 = vld [vmem:[#allocation5 + $0x2d0] sm:$0xff]
        %v417 = vld [vmem:[#allocation5 + $0x2d8] sm:$0xff]
        %v418 = vld [vmem:[#allocation5 + $0x2e0] sm:$0xff]
        %v419 = vld [vmem:[#allocation5 + $0x2e8] sm:$0xff]
        %v420 = vld [vmem:[#allocation5 + $0x2f0] sm:$0xff]
        %v421 = vld [vmem:[#allocation5 + $0x2f8] sm:$0xff]
        %v422 = vld [vmem:[#allocation5 + $0x300] sm:$0xff]
        %v423 = vld [vmem:[#allocation5 + $0x308] sm:$0xff]
        %v424 = vld [vmem:[#allocation5 + $0x310] sm:$0xff]
        %v425 = vld [vmem:[#allocation5 + $0x318] sm:$0xff]
        %v426 = vld [vmem:[#allocation5 + $0x320] sm:$0xff]
        %v427 = vld [vmem:[#allocation5 + $0x328] sm:$0xff]
        %v428 = vld [vmem:[#allocation5 + $0x330] sm:$0xff]
        %v429 = vld [vmem:[#allocation5 + $0x338] sm:$0xff]
        %v430 = vld [vmem:[#allocation5 + $0x340] sm:$0xff]
        %v431 = vld [vmem:[#allocation5 + $0x348] sm:$0xff]
        %v432 = vld [vmem:[#allocation5 + $0x350] sm:$0xff]
        %v433 = vld [vmem:[#allocation5 + $0x358] sm:$0xff]
        %v434 = vld [vmem:[#allocation5 + $0x360] sm:$0xff]
        %v435 = vld [vmem:[#allocation5 + $0x368] sm:$0xff]
        %v436 = vld [vmem:[#allocation5 + $0x370] sm:$0xff]
        %v437 = vld [vmem:[#allocation5 + $0x378] sm:$0xff]
        %v438 = vld [vmem:[#allocation5 + $0x380] sm:$0xff]
        %v439 = vld [vmem:[#allocation5 + $0x388] sm:$0xff]
        %v440 = vld [vmem:[#allocation5 + $0x390] sm:$0xff]
        %v441 = vld [vmem:[#allocation5 + $0x398] sm:$0xff]
        %v442 = vld [vmem:[#allocation5 + $0x3a0] sm:$0xff]
        %v443 = vld [vmem:[#allocation5 + $0x3a8] sm:$0xff]
        %v444 = vld [vmem:[#allocation5 + $0x3b0] sm:$0xff]
        %v445 = vld [vmem:[#allocation5 + $0x3b8] sm:$0xff]
        %v446 = vld [vmem:[#allocation5 + $0x3c0] sm:$0xff]
        %v447 = vld [vmem:[#allocation5 + $0x3c8] sm:$0xff]
        %v448 = vld [vmem:[#allocation5 + $0x3d0] sm:$0xff]
        %v449 = vld [vmem:[#allocation5 + $0x3d8] sm:$0xff]
        %v450 = vld [vmem:[#allocation5 + $0x3e0] sm:$0xff]
        %v451 = vld [vmem:[#allocation5 + $0x3e8] sm:$0xff]
        %v452 = vld [vmem:[#allocation5 + $0x3f0] sm:$0xff]
        %v453 = vld [vmem:[#allocation5 + $0x3f8] sm:$0xff]
        %v454 = vld [vmem:[#allocation5 + $0x400] sm:$0xff]
        %v455 = vld [vmem:[#allocation5 + $0x408] sm:$0xff]
        %v456 = vld [vmem:[#allocation5 + $0x410] sm:$0xff]
        %v457 = vld [vmem:[#allocation5 + $0x418] sm:$0xff]
        %v458 = vld [vmem:[#allocation5 + $0x420] sm:$0xff]
        %v459 = vld [vmem:[#allocation5 + $0x428] sm:$0xff]
        %v460 = vld [vmem:[#allocation5 + $0x430] sm:$0xff]
        %v461 = vld [vmem:[#allocation5 + $0x438] sm:$0xff]
        %v462 = vld [vmem:[#allocation5 + $0x440] sm:$0xff]
        %v463 = vld [vmem:[#allocation5 + $0x448] sm:$0xff]
        %v464 = vld [vmem:[#allocation5 + $0x450] sm:$0xff]
        %v465 = vld [vmem:[#allocation5 + $0x458] sm:$0xff]
        %v466 = vld [vmem:[#allocation5 + $0x460] sm:$0xff]
        %v467 = vld [vmem:[#allocation5 + $0x468] sm:$0xff]
        %v468 = vld [vmem:[#allocation5 + $0x470] sm:$0xff]
        %v469 = vld [vmem:[#allocation5 + $0x478] sm:$0xff]
        %v470 = vld [vmem:[#allocation5 + $0x480] sm:$0xff]
        %v471 = vld [vmem:[#allocation5 + $0x488] sm:$0xff]
        %v472 = vld [vmem:[#allocation5 + $0x490] sm:$0xff]
        %v473 = vld [vmem:[#allocation5 + $0x498] sm:$0xff]
        %v474 = vld [vmem:[#allocation5 + $0x4a0] sm:$0xff]
        %v475 = vld [vmem:[#allocation5 + $0x4a8] sm:$0xff]
        %v476 = vld [vmem:[#allocation5 + $0x4b0] sm:$0xff]
        %v477 = vld [vmem:[#allocation5 + $0x4b8] sm:$0xff]
        %v478 = vld [vmem:[#allocation5 + $0x4c0] sm:$0xff]
        %v479 = vld [vmem:[#allocation5 + $0x4c8] sm:$0xff]
        %v480 = vld [vmem:[#allocation5 + $0x4d0] sm:$0xff]
        %v481 = vld [vmem:[#allocation5 + $0x4d8] sm:$0xff]
        %v482 = vld [vmem:[#allocation5 + $0x4e0] sm:$0xff]
        %v483 = vld [vmem:[#allocation5 + $0x4e8] sm:$0xff]
        %v484 = vld [vmem:[#allocation5 + $0x4f0] sm:$0xff]
        %v485 = vld [vmem:[#allocation5 + $0x4f8] sm:$0xff]
        %v486 = vld [vmem:[#allocation5 + $0x500] sm:$0xff]
        %v487 = vld [vmem:[#allocation5 + $0x508] sm:$0xff]
        %v488 = vld [vmem:[#allocation5 + $0x510] sm:$0xff]
        %v489 = vld [vmem:[#allocation5 + $0x518] sm:$0xff]
        %v490 = vld [vmem:[#allocation5 + $0x520] sm:$0xff]
        %v491 = vld [vmem:[#allocation5 + $0x528] sm:$0xff]
        %v492 = vld [vmem:[#allocation5 + $0x530] sm:$0xff]
        %v493 = vld [vmem:[#allocation5 + $0x538] sm:$0xff]
        %v494 = vld [vmem:[#allocation5 + $0x540] sm:$0xff]
        %v495 = vld [vmem:[#allocation5 + $0x548] sm:$0xff]
        %v496 = vld [vmem:[#allocation5 + $0x550] sm:$0xff]
        %v497 = vld [vmem:[#allocation5 + $0x558] sm:$0xff]
        %v498 = vld [vmem:[#allocation5 + $0x560] sm:$0xff]
        %v499 = vld [vmem:[#allocation5 + $0x568] sm:$0xff]
        %v500 = vld [vmem:[#allocation5 + $0x570] sm:$0xff]
        %v501 = vld [vmem:[#allocation5 + $0x578] sm:$0xff]
        %v502 = vld [vmem:[#allocation5 + $0x580] sm:$0xff]
        %v503 = vld [vmem:[#allocation5 + $0x588] sm:$0xff]
        %v504 = vld [vmem:[#allocation5 + $0x590] sm:$0xff]
        %v505 = vld [vmem:[#allocation5 + $0x598] sm:$0xff]
        %v506 = vld [vmem:[#allocation5 + $0x5a0] sm:$0xff]
        %v507 = vld [vmem:[#allocation5 + $0x5a8] sm:$0xff]
        %v508 = vld [vmem:[#allocation5 + $0x5b0] sm:$0xff]
        %v509 = vld [vmem:[#allocation5 + $0x5b8] sm:$0xff]
        %v510 = vld [vmem:[#allocation5 + $0x5c0] sm:$0xff]
        %v511 = vld [vmem:[#allocation5 + $0x5c8] sm:$0xff]
        %v512 = vld [vmem:[#allocation5 + $0x5d0] sm:$0xff]
        %v513 = vld [vmem:[#allocation5 + $0x5d8] sm:$0xff]
        %v514 = vld [vmem:[#allocation5 + $0x5e0] sm:$0xff]
        %v515 = vld [vmem:[#allocation5 + $0x5e8] sm:$0xff]
        %v516 = vld [vmem:[#allocation5 + $0x5f0] sm:$0xff]
        %v517 = vld [vmem:[#allocation5 + $0x5f8] sm:$0xff]
        %v518 = vld [vmem:[%s2] sm:$0x3f]
        %v520 = vlaneseq
        %v521 = vshrl.u32 %v520, 7
        %v522 = vsub.s32 0, %v521
        %v523 = vrot.slane %v518, %v522
        %v524 = vlaneseq
        %v525 = vshrl.u32 %v524, 7
        %v526 = vsub.s32 1, %v525
        %v527 = vrot.slane %v518, %v526
        %v528 = vlaneseq
        %v529 = vshrl.u32 %v528, 7
        %v530 = vsub.s32 2, %v529
        %v531 = vrot.slane %v518, %v530
        %v532 = vlaneseq
        %v533 = vshrl.u32 %v532, 7
        %v534 = vsub.s32 3, %v533
        %v535 = vrot.slane %v518, %v534
        %v536 = vlaneseq
        %v537 = vshrl.u32 %v536, 7
        %v538 = vsub.s32 4, %v537
        %v539 = vrot.slane %v518, %v538
        %v540 = vlaneseq
        %v541 = vshrl.u32 %v540, 7
        %v542 = vsub.s32 5, %v541
        %v543 = vrot.slane %v518, %v542
        %550 = vmatprep.subr.mxu0 %v327
        %551 = vmatpush1.msra.mxu0 %v326
        %552 = vmatprep.subr.mxu0 %v333
        %553 = vmatpush1.msra.mxu0 %v332
        %554 = vmatprep.subr.mxu0 %v339
        %555 = vmatpush1.msra.mxu0 %v338
        %556 = vmatprep.subr.mxu0 %v345
        %557 = vmatpush1.msra.mxu0 %v344
        %558 = vmatprep.subr.mxu0 %v351
        %559 = vmatpush1.msra.mxu0 %v350
        %560 = vmatprep.subr.mxu0 %v357
        %561 = vmatpush1.msra.mxu0 %v356
        %562 = vmatprep.subr.mxu0 %v363
        %563 = vmatpush1.msra.mxu0 %v362
        %564 = vmatprep.subr.mxu0 %v369
        %565 = vmatpush1.msra.mxu0 %v368
        %566 = vmatprep.subr.mxu0 %v375
        %567 = vmatpush1.msra.mxu0 %v374
        %568 = vmatprep.subr.mxu0 %v381
        %569 = vmatpush1.msra.mxu0 %v380
        %570 = vmatprep.subr.mxu0 %v387
        %571 = vmatpush1.msra.mxu0 %v386
        %572 = vmatprep.subr.mxu0 %v393
        %573 = vmatpush1.msra.mxu0 %v392
        %574 = vmatprep.subr.mxu0 %v399
        %575 = vmatpush1.msra.mxu0 %v398
        %576 = vmatprep.subr.mxu0 %v405
        %577 = vmatpush1.msra.mxu0 %v404
        %578 = vmatprep.subr.mxu0 %v411
        %579 = vmatpush1.msra.mxu0 %v410
        %580 = vmatprep.subr.mxu0 %v417
        %581 = vmatpush1.msra.mxu0 %v416
        %582 = vmatprep.subr.mxu0 %v423
        %583 = vmatpush1.msra.mxu0 %v422
        %584 = vmatprep.subr.mxu0 %v429
        %585 = vmatpush1.msra.mxu0 %v428
        %586 = vmatprep.subr.mxu0 %v435
        %587 = vmatpush1.msra.mxu0 %v434
        %588 = vmatprep.subr.mxu0 %v441
        %589 = vmatpush1.msra.mxu0 %v440
        %590 = vmatprep.subr.mxu0 %v447
        %591 = vmatpush1.msra.mxu0 %v446
        %592 = vmatprep.subr.mxu0 %v453
        %593 = vmatpush1.msra.mxu0 %v452
        %594 = vmatprep.subr.mxu0 %v459
        %595 = vmatpush1.msra.mxu0 %v458
        %596 = vmatprep.subr.mxu0 %v465
        %597 = vmatpush1.msra.mxu0 %v464
        %598 = vmatprep.subr.mxu0 %v471
        %599 = vmatpush1.msra.mxu0 %v470
        %600 = vmatprep.subr.mxu0 %v477
        %601 = vmatpush1.msra.mxu0 %v476
        %602 = vmatprep.subr.mxu0 %v483
        %603 = vmatpush1.msra.mxu0 %v482
        %604 = vmatprep.subr.mxu0 %v489
        %605 = vmatpush1.msra.mxu0 %v488
        %606 = vmatprep.subr.mxu0 %v495
        %607 = vmatpush1.msra.mxu0 %v494
        %608 = vmatprep.subr.mxu0 %v501
        %609 = vmatpush1.msra.mxu0 %v500
        %610 = vmatprep.subr.mxu0 %v507
        %611 = vmatpush1.msra.mxu0 %v506
        %612 = vmatprep.subr.mxu0 %v513
        %613 = vmatpush1.msra.mxu0 %v512
        %614 = vmatprep.mubr.f32.mxu0 %v325
        %615 = vmatmul.mubr.f32.gmra.mrb[0].mxu0 %v324
        %v616 = vpop.f32.mrb[0].mxu0
        %v617 = vadd.f32 %v523, %v616
        %v618 = vpop.f32.mrb[0].mxu0
        %v619 = vadd.f32 %v527, %v618
        %620 = vdwg.mxu0
        %621 = vmatprep.subr.mxu0 %v329
        %622 = vmatpush1.msra.mxu0 %v328
        %623 = vmatprep.subr.mxu0 %v335
        %624 = vmatpush1.msra.mxu0 %v334
        %625 = vmatprep.subr.mxu0 %v341
        %626 = vmatpush1.msra.mxu0 %v340
        %627 = vmatprep.subr.mxu0 %v347
        %628 = vmatpush1.msra.mxu0 %v346
        %629 = vmatprep.subr.mxu0 %v353
        %630 = vmatpush1.msra.mxu0 %v352
        %631 = vmatprep.subr.mxu0 %v359
        %632 = vmatpush1.msra.mxu0 %v358
        %633 = vmatprep.subr.mxu0 %v365
        %634 = vmatpush1.msra.mxu0 %v364
        %635 = vmatprep.subr.mxu0 %v371
        %636 = vmatpush1.msra.mxu0 %v370
        %637 = vmatprep.subr.mxu0 %v377
        %638 = vmatpush1.msra.mxu0 %v376
        %639 = vmatprep.subr.mxu0 %v383
        %640 = vmatpush1.msra.mxu0 %v382
        %641 = vmatprep.subr.mxu0 %v389
        %642 = vmatpush1.msra.mxu0 %v388
        %643 = vmatprep.subr.mxu0 %v395
        %644 = vmatpush1.msra.mxu0 %v394
        %645 = vmatprep.subr.mxu0 %v401
        %646 = vmatpush1.msra.mxu0 %v400
        %647 = vmatprep.subr.mxu0 %v407
        %648 = vmatpush1.msra.mxu0 %v406
        %649 = vmatprep.subr.mxu0 %v413
        %650 = vmatpush1.msra.mxu0 %v412
        %651 = vmatprep.subr.mxu0 %v419
        %652 = vmatpush1.msra.mxu0 %v418
        %653 = vmatprep.subr.mxu0 %v425
        %654 = vmatpush1.msra.mxu0 %v424
        %655 = vmatprep.subr.mxu0 %v431
        %656 = vmatpush1.msra.mxu0 %v430
        %657 = vmatprep.subr.mxu0 %v437
        %658 = vmatpush1.msra.mxu0 %v436
        %659 = vmatprep.subr.mxu0 %v443
        %660 = vmatpush1.msra.mxu0 %v442
        %661 = vmatprep.subr.mxu0 %v449
        %662 = vmatpush1.msra.mxu0 %v448
        %663 = vmatprep.subr.mxu0 %v455
        %664 = vmatpush1.msra.mxu0 %v454
        %665 = vmatprep.subr.mxu0 %v461
        %666 = vmatpush1.msra.mxu0 %v460
        %667 = vmatprep.subr.mxu0 %v467
        %668 = vmatpush1.msra.mxu0 %v466
        %669 = vmatprep.subr.mxu0 %v473
        %670 = vmatpush1.msra.mxu0 %v472
        %671 = vmatprep.subr.mxu0 %v479
        %672 = vmatpush1.msra.mxu0 %v478
        %673 = vmatprep.subr.mxu0 %v485
        %674 = vmatpush1.msra.mxu0 %v484
        %675 = vmatprep.subr.mxu0 %v491
        %676 = vmatpush1.msra.mxu0 %v490
        %677 = vmatprep.subr.mxu0 %v497
        %678 = vmatpush1.msra.mxu0 %v496
        %679 = vmatprep.subr.mxu0 %v503
        %680 = vmatpush1.msra.mxu0 %v502
        %681 = vmatprep.subr.mxu0 %v509
        %682 = vmatpush1.msra.mxu0 %v508
        %683 = vmatprep.subr.mxu0 %v515
        %684 = vmatpush1.msra.mxu0 %v514
        %685 = vmatprep.mubr.f32.mxu0 %v325
        %686 = vmatmul.mubr.f32.gmra.mrb[0].mxu0 %v324
        %v687 = vpop.f32.mrb[0].mxu0
        %v688 = vadd.f32 %v531, %v687
        %v689 = vpop.f32.mrb[0].mxu0
        %v690 = vadd.f32 %v535, %v689
        %691 = vdwg.mxu0
        %692 = vmatprep.subr.mxu0 %v331
        %693 = vmatpush1.msra.mxu0 %v330
        %694 = vmatprep.subr.mxu0 %v337
        %695 = vmatpush1.msra.mxu0 %v336
        %696 = vmatprep.subr.mxu0 %v343
        %697 = vmatpush1.msra.mxu0 %v342
        %698 = vmatprep.subr.mxu0 %v349
        %699 = vmatpush1.msra.mxu0 %v348
        %700 = vmatprep.subr.mxu0 %v355
        %701 = vmatpush1.msra.mxu0 %v354
        %702 = vmatprep.subr.mxu0 %v361
        %703 = vmatpush1.msra.mxu0 %v360
        %704 = vmatprep.subr.mxu0 %v367
        %705 = vmatpush1.msra.mxu0 %v366
        %706 = vmatprep.subr.mxu0 %v373
        %707 = vmatpush1.msra.mxu0 %v372
        %708 = vmatprep.subr.mxu0 %v379
        %709 = vmatpush1.msra.mxu0 %v378
        %710 = vmatprep.subr.mxu0 %v385
        %711 = vmatpush1.msra.mxu0 %v384
        %712 = vmatprep.subr.mxu0 %v391
        %713 = vmatpush1.msra.mxu0 %v390
        %714 = vmatprep.subr.mxu0 %v397
        %715 = vmatpush1.msra.mxu0 %v396
        %716 = vmatprep.subr.mxu0 %v403
        %717 = vmatpush1.msra.mxu0 %v402
        %718 = vmatprep.subr.mxu0 %v409
        %719 = vmatpush1.msra.mxu0 %v408
        %720 = vmatprep.subr.mxu0 %v415
        %721 = vmatpush1.msra.mxu0 %v414
        %722 = vmatprep.subr.mxu0 %v421
        %723 = vmatpush1.msra.mxu0 %v420
        %724 = vmatprep.subr.mxu0 %v427
        %725 = vmatpush1.msra.mxu0 %v426
        %726 = vmatprep.subr.mxu0 %v433
        %727 = vmatpush1.msra.mxu0 %v432
        %728 = vmatprep.subr.mxu0 %v439
        %729 = vmatpush1.msra.mxu0 %v438
        %730 = vmatprep.subr.mxu0 %v445
        %731 = vmatpush1.msra.mxu0 %v444
        %732 = vmatprep.subr.mxu0 %v451
        %733 = vmatpush1.msra.mxu0 %v450
        %734 = vmatprep.subr.mxu0 %v457
        %735 = vmatpush1.msra.mxu0 %v456
        %736 = vmatprep.subr.mxu0 %v463
        %737 = vmatpush1.msra.mxu0 %v462
        %738 = vmatprep.subr.mxu0 %v469
        %739 = vmatpush1.msra.mxu0 %v468
        %740 = vmatprep.subr.mxu0 %v475
        %741 = vmatpush1.msra.mxu0 %v474
        %742 = vmatprep.subr.mxu0 %v481
        %743 = vmatpush1.msra.mxu0 %v480
        %744 = vmatprep.subr.mxu0 %v487
        %745 = vmatpush1.msra.mxu0 %v486
        %746 = vmatprep.subr.mxu0 %v493
        %747 = vmatpush1.msra.mxu0 %v492
        %748 = vmatprep.subr.mxu0 %v499
        %749 = vmatpush1.msra.mxu0 %v498
        %750 = vmatprep.subr.mxu0 %v505
        %751 = vmatpush1.msra.mxu0 %v504
        %752 = vmatprep.subr.mxu0 %v511
        %753 = vmatpush1.msra.mxu0 %v510
        %754 = vmatprep.subr.mxu0 %v517
        %755 = vmatpush1.msra.mxu0 %v516
        %756 = vmatprep.mubr.f32.mxu0 %v325
        %757 = vmatmul.mubr.f32.gmra.mrb[0].mxu0 %v324
        %v758 = vpop.f32.mrb[0].mxu0
        %v759 = vadd.f32 %v539, %v758
        %v760 = vpop.f32.mrb[0].mxu0
        %v761 = vadd.f32 %v543, %v760
        %762 = vdwg.mxu0
        %v763 = vmul.f32 %v617, 0.28867513
        %v764 = vmul.f32 %v619, 0.28867513
        %v765 = vld [vmem:[#allocation7] sm:$0xff]
        %v766 = vld [vmem:[#allocation7 + $0x8] sm:$0xff]
        %v767 = vld [vmem:[#allocation7 + $0x10] sm:$0xff]
        %v768 = vld [vmem:[#allocation7 + $0x18] sm:$0xff]
        %v769 = vld [vmem:[#allocation7 + $0x20] sm:$0xff]
        %v770 = vld [vmem:[#allocation7 + $0x28] sm:$0xff]
        %v771 = vld [vmem:[#allocation7 + $0x30] sm:$0xff]
        %v772 = vld [vmem:[#allocation7 + $0x38] sm:$0xff]
        %v773 = vld [vmem:[#allocation7 + $0x40] sm:$0xff]
        %v774 = vld [vmem:[#allocation7 + $0x48] sm:$0xff]
        %v775 = vld [vmem:[#allocation7 + $0x50] sm:$0xff]
        %v776 = vld [vmem:[#allocation7 + $0x58] sm:$0xff]
        %v777 = vld [vmem:[#allocation7 + $0x60] sm:$0xff]
        %v778 = vld [vmem:[#allocation7 + $0x68] sm:$0xff]
        %v779 = vld [vmem:[#allocation7 + $0x70] sm:$0xff]
        %v780 = vld [vmem:[#allocation7 + $0x78] sm:$0xff]
        %v781 = vld [vmem:[#allocation7 + $0x80] sm:$0xff]
        %v782 = vld [vmem:[#allocation7 + $0x88] sm:$0xff]
        %v783 = vld [vmem:[#allocation7 + $0x90] sm:$0xff]
        %v784 = vld [vmem:[#allocation7 + $0x98] sm:$0xff]
        %v785 = vld [vmem:[#allocation7 + $0xa0] sm:$0xff]
        %v786 = vld [vmem:[#allocation7 + $0xa8] sm:$0xff]
        %v787 = vld [vmem:[#allocation7 + $0xb0] sm:$0xff]
        %v788 = vld [vmem:[#allocation7 + $0xb8] sm:$0xff]
        %v789 = vld [vmem:[#allocation7 + $0xc0] sm:$0xff]
        %v790 = vld [vmem:[#allocation7 + $0xc8] sm:$0xff]
        %v791 = vld [vmem:[#allocation7 + $0xd0] sm:$0xff]
        %v792 = vld [vmem:[#allocation7 + $0xd8] sm:$0xff]
        %v793 = vld [vmem:[#allocation7 + $0xe0] sm:$0xff]
        %v794 = vld [vmem:[#allocation7 + $0xe8] sm:$0xff]
        %v795 = vld [vmem:[#allocation7 + $0xf0] sm:$0xff]
        %v796 = vld [vmem:[#allocation7 + $0xf8] sm:$0xff]
        %v797 = vld [vmem:[#allocation7 + $0x100] sm:$0xff]
        %v798 = vld [vmem:[#allocation7 + $0x108] sm:$0xff]
        %v799 = vld [vmem:[#allocation7 + $0x110] sm:$0xff]
        %v800 = vld [vmem:[#allocation7 + $0x118] sm:$0xff]
        %v801 = vld [vmem:[#allocation7 + $0x120] sm:$0xff]
        %v802 = vld [vmem:[#allocation7 + $0x128] sm:$0xff]
        %v803 = vld [vmem:[#allocation7 + $0x130] sm:$0xff]
        %v804 = vld [vmem:[#allocation7 + $0x138] sm:$0xff]
        %v805 = vld [vmem:[#allocation7 + $0x140] sm:$0xff]
        %v806 = vld [vmem:[#allocation7 + $0x148] sm:$0xff]
        %v807 = vld [vmem:[#allocation7 + $0x150] sm:$0xff]
        %v808 = vld [vmem:[#allocation7 + $0x158] sm:$0xff]
        %v809 = vld [vmem:[#allocation7 + $0x160] sm:$0xff]
        %v810 = vld [vmem:[#allocation7 + $0x168] sm:$0xff]
        %v811 = vld [vmem:[#allocation7 + $0x170] sm:$0xff]
        %v812 = vld [vmem:[#allocation7 + $0x178] sm:$0xff]
        %v813 = vld [vmem:[%s4] sm:$0x3]
        %v814 = vld [vmem:[%s5] sm:$0x3]
        %v815 = vld [vmem:[%s6] sm:$0x3]
        %vm816 = vcmask 97280
        %v818 = vsel %vm816, %v763, 0
        %v821 = vsel %vm816, %v688, 0
        %823 = vmatprep.subr.mxu0 0.0
        %824 = vmatpush1.xpose.msra.mxu0 %v821
        %825 = vmatprep.subr.mxu0 0.0
        %826 = vmatpush1.xpose.msra.mxu0 0.0
        %827 = vmatprep.subr.mxu0 0.0
        %828 = vmatpush1.xpose.msra.mxu0 0.0
        %829 = vmatprep.subr.mxu0 0.0
        %830 = vmatpush1.xpose.msra.mxu0 0.0
        %831 = vmatprep.subr.mxu0 0.0
        %832 = vmatpush1.xpose.msra.mxu0 0.0
        %833 = vmatprep.subr.mxu0 0.0
        %834 = vmatpush1.xpose.msra.mxu0 0.0
        %835 = vmatprep.subr.mxu0 0.0
        %836 = vmatpush1.xpose.msra.mxu0 0.0
        %837 = vmatprep.subr.mxu0 0.0
        %838 = vmatpush1.xpose.msra.mxu0 0.0
        %839 = vmatprep.subr.mxu0 0.0
        %840 = vmatpush1.xpose.msra.mxu0 0.0
        %841 = vmatprep.subr.mxu0 0.0
        %842 = vmatpush1.xpose.msra.mxu0 0.0
        %843 = vmatprep.subr.mxu0 0.0
        %844 = vmatpush1.xpose.msra.mxu0 0.0
        %845 = vmatprep.subr.mxu0 0.0
        %846 = vmatpush1.xpose.msra.mxu0 0.0
        %847 = vmatprep.subr.mxu0 0.0
        %848 = vmatpush1.xpose.msra.mxu0 0.0
        %849 = vmatprep.subr.mxu0 0.0
        %850 = vmatpush1.xpose.msra.mxu0 0.0
        %851 = vmatprep.subr.mxu0 0.0
        %852 = vmatpush1.xpose.msra.mxu0 0.0
        %853 = vmatprep.subr.mxu0 0.0
        %854 = vmatpush1.xpose.msra.mxu0 0.0
        %855 = vmatprep.subr.mxu0 0.0
        %856 = vmatpush1.xpose.msra.mxu0 0.0
        %857 = vmatprep.subr.mxu0 0.0
        %858 = vmatpush1.xpose.msra.mxu0 0.0
        %859 = vmatprep.subr.mxu0 0.0
        %860 = vmatpush1.xpose.msra.mxu0 0.0
        %861 = vmatprep.subr.mxu0 0.0
        %862 = vmatpush1.xpose.msra.mxu0 0.0
        %863 = vmatprep.subr.mxu0 0.0
        %864 = vmatpush1.xpose.msra.mxu0 0.0
        %865 = vmatprep.subr.mxu0 0.0
        %866 = vmatpush1.xpose.msra.mxu0 0.0
        %867 = vmatprep.subr.mxu0 0.0
        %868 = vmatpush1.xpose.msra.mxu0 0.0
        %869 = vmatprep.subr.mxu0 0.0
        %870 = vmatpush1.xpose.msra.mxu0 0.0
        %871 = vmatprep.subr.mxu0 0.0
        %872 = vmatpush1.xpose.msra.mxu0 0.0
        %873 = vmatprep.subr.mxu0 0.0
        %874 = vmatpush1.xpose.msra.mxu0 0.0
        %875 = vmatprep.subr.mxu0 0.0
        %876 = vmatpush1.xpose.msra.mxu0 0.0
        %877 = vmatprep.subr.mxu0 0.0
        %878 = vmatpush1.xpose.msra.mxu0 0.0
        %879 = vmatprep.subr.mxu0 0.0
        %880 = vmatpush1.xpose.msra.mxu0 0.0
        %881 = vmatprep.subr.mxu0 0.0
        %882 = vmatpush1.xpose.msra.mxu0 0.0
        %883 = vmatprep.subr.mxu0 0.0
        %884 = vmatpush1.xpose.msra.mxu0 0.0
        %885 = vmatprep.subr.mxu0 0.0
        %886 = vmatpush1.xpose.msra.mxu0 0.0
        %887 = vmatprep.mubr.f32.mxu0 0.0
        %888 = vmatmul.mubr.f32.gmra.mrb[0].mxu0 %v818
        %v889 = vpop.f32.mrb[0].mxu0
        %v890 = vadd.f32 0.0, %v889
        %v891 = vpop.f32.mrb[0].mxu0
        %892 = vdwg.mxu0
        %vm893 = vcmask 64512
        %v894 = vsel %vm893, %v890, -inf
        %895 = vmax.xlane.f32.xlu0 %v894
        %v896 = vpop.xlane.xlu0 %895
        %v897 = vsub.f32 %v890, %v896
        %v898 = vmul.f32 %v897, 1.442695
        %v899 = vpow.pop %v898
        %v900 = vsel %vm893, %v899, 0.0
        %901 = vadd.xlane.f32.xlu0 %v900
        %v902 = vpop.xlane.xlu0 %901
        %v903 = vrcp.pop %v902
        %v904 = vmul.f32 %v899, %v903
        %v906 = vsel %vm893, %v904, 0
        %908 = vmatprep.subr.mxu0 0.0
        %909 = vmatpush1.msra.mxu0 %v759
        %910 = vmatprep.subr.mxu0 0.0
        %911 = vmatpush1.msra.mxu0 0.0
        %912 = vmatprep.subr.mxu0 0.0
        %913 = vmatpush1.msra.mxu0 0.0
        %914 = vmatprep.subr.mxu0 0.0
        %915 = vmatpush1.msra.mxu0 0.0
        %916 = vmatprep.subr.mxu0 0.0
        %917 = vmatpush1.msra.mxu0 0.0
        %918 = vmatprep.subr.mxu0 0.0
        %919 = vmatpush1.msra.mxu0 0.0
        %920 = vmatprep.subr.mxu0 0.0
        %921 = vmatpush1.msra.mxu0 0.0
        %922 = vmatprep.subr.mxu0 0.0
        %923 = vmatpush1.msra.mxu0 0.0
        %924 = vmatprep.subr.mxu0 0.0
        %925 = vmatpush1.msra.mxu0 0.0
        %926 = vmatprep.subr.mxu0 0.0
        %927 = vmatpush1.msra.mxu0 0.0
        %928 = vmatprep.subr.mxu0 0.0
        %929 = vmatpush1.msra.mxu0 0.0
        %930 = vmatprep.subr.mxu0 0.0
        %931 = vmatpush1.msra.mxu0 0.0
        %932 = vmatprep.subr.mxu0 0.0
        %933 = vmatpush1.msra.mxu0 0.0
        %934 = vmatprep.subr.mxu0 0.0
        %935 = vmatpush1.msra.mxu0 0.0
        %936 = vmatprep.subr.mxu0 0.0
        %937 = vmatpush1.msra.mxu0 0.0
        %938 = vmatprep.subr.mxu0 0.0
        %939 = vmatpush1.msra.mxu0 0.0
        %940 = vmatprep.subr.mxu0 0.0
        %941 = vmatpush1.msra.mxu0 0.0
        %942 = vmatprep.subr.mxu0 0.0
        %943 = vmatpush1.msra.mxu0 0.0
        %944 = vmatprep.subr.mxu0 0.0
        %945 = vmatpush1.msra.mxu0 0.0
        %946 = vmatprep.subr.mxu0 0.0
        %947 = vmatpush1.msra.mxu0 0.0
        %948 = vmatprep.subr.mxu0 0.0
        %949 = vmatpush1.msra.mxu0 0.0
        %950 = vmatprep.subr.mxu0 0.0
        %951 = vmatpush1.msra.mxu0 0.0
        %952 = vmatprep.subr.mxu0 0.0
        %953 = vmatpush1.msra.mxu0 0.0
        %954 = vmatprep.subr.mxu0 0.0
        %955 = vmatpush1.msra.mxu0 0.0
        %956 = vmatprep.subr.mxu0 0.0
        %957 = vmatpush1.msra.mxu0 0.0
        %958 = vmatprep.subr.mxu0 0.0
        %959 = vmatpush1.msra.mxu0 0.0
        %960 = vmatprep.subr.mxu0 0.0
        %961 = vmatpush1.msra.mxu0 0.0
        %962 = vmatprep.subr.mxu0 0.0
        %963 = vmatpush1.msra.mxu0 0.0
        %964 = vmatprep.subr.mxu0 0.0
        %965 = vmatpush1.msra.mxu0 0.0
        %966 = vmatprep.subr.mxu0 0.0
        %967 = vmatpush1.msra.mxu0 0.0
        %968 = vmatprep.subr.mxu0 0.0
        %969 = vmatpush1.msra.mxu0 0.0
        %970 = vmatprep.subr.mxu0 0.0
        %971 = vmatpush1.msra.mxu0 0.0
        %972 = vmatprep.mubr.f32.mxu0 0.0
        %973 = vmatmul.mubr.f32.gmra.mrb[0].mxu0 %v906
        %v974 = vpop.f32.mrb[0].mxu0
        %v975 = vadd.f32 0.0, %v974
        %v976 = vpop.f32.mrb[0].mxu0
        %977 = vdwg.mxu0
        %978 = vrot.lane.b32.xlu0 %v763, 116
        %v979 = vpop.permute.xlu0 %978
        %980 = vrot.lane.b32.xlu0 %v688, 116
        %v981 = vpop.permute.xlu0 %980
        %v982 = vsel %vm816, %v979, 0
        %v984 = vsel %vm816, %v981, 0
        %986 = vmatprep.subr.mxu0 0.0
        %987 = vmatpush1.xpose.msra.mxu0 %v984
        %988 = vmatprep.subr.mxu0 0.0
        %989 = vmatpush1.xpose.msra.mxu0 0.0
        %990 = vmatprep.subr.mxu0 0.0
        %991 = vmatpush1.xpose.msra.mxu0 0.0
        %992 = vmatprep.subr.mxu0 0.0
        %993 = vmatpush1.xpose.msra.mxu0 0.0
        %994 = vmatprep.subr.mxu0 0.0
        %995 = vmatpush1.xpose.msra.mxu0 0.0
        %996 = vmatprep.subr.mxu0 0.0
        %997 = vmatpush1.xpose.msra.mxu0 0.0
        %998 = vmatprep.subr.mxu0 0.0
        %999 = vmatpush1.xpose.msra.mxu0 0.0
        %1000 = vmatprep.subr.mxu0 0.0
        %1001 = vmatpush1.xpose.msra.mxu0 0.0
        %1002 = vmatprep.subr.mxu0 0.0
        %1003 = vmatpush1.xpose.msra.mxu0 0.0
        %1004 = vmatprep.subr.mxu0 0.0
        %1005 = vmatpush1.xpose.msra.mxu0 0.0
        %1006 = vmatprep.subr.mxu0 0.0
        %1007 = vmatpush1.xpose.msra.mxu0 0.0
        %1008 = vmatprep.subr.mxu0 0.0
        %1009 = vmatpush1.xpose.msra.mxu0 0.0
        %1010 = vmatprep.subr.mxu0 0.0
        %1011 = vmatpush1.xpose.msra.mxu0 0.0
        %1012 = vmatprep.subr.mxu0 0.0
        %1013 = vmatpush1.xpose.msra.mxu0 0.0
        %1014 = vmatprep.subr.mxu0 0.0
        %1015 = vmatpush1.xpose.msra.mxu0 0.0
        %1016 = vmatprep.subr.mxu0 0.0
        %1017 = vmatpush1.xpose.msra.mxu0 0.0
        %1018 = vmatprep.subr.mxu0 0.0
        %1019 = vmatpush1.xpose.msra.mxu0 0.0
        %1020 = vmatprep.subr.mxu0 0.0
        %1021 = vmatpush1.xpose.msra.mxu0 0.0
        %1022 = vmatprep.subr.mxu0 0.0
        %1023 = vmatpush1.xpose.msra.mxu0 0.0
        %1024 = vmatprep.subr.mxu0 0.0
        %1025 = vmatpush1.xpose.msra.mxu0 0.0
        %1026 = vmatprep.subr.mxu0 0.0
        %1027 = vmatpush1.xpose.msra.mxu0 0.0
        %1028 = vmatprep.subr.mxu0 0.0
        %1029 = vmatpush1.xpose.msra.mxu0 0.0
        %1030 = vmatprep.subr.mxu0 0.0
        %1031 = vmatpush1.xpose.msra.mxu0 0.0
        %1032 = vmatprep.subr.mxu0 0.0
        %1033 = vmatpush1.xpose.msra.mxu0 0.0
        %1034 = vmatprep.subr.mxu0 0.0
        %1035 = vmatpush1.xpose.msra.mxu0 0.0
        %1036 = vmatprep.subr.mxu0 0.0
        %1037 = vmatpush1.xpose.msra.mxu0 0.0
        %1038 = vmatprep.subr.mxu0 0.0
        %1039 = vmatpush1.xpose.msra.mxu0 0.0
        %1040 = vmatprep.subr.mxu0 0.0
        %1041 = vmatpush1.xpose.msra.mxu0 0.0
        %1042 = vmatprep.subr.mxu0 0.0
        %1043 = vmatpush1.xpose.msra.mxu0 0.0
        %1044 = vmatprep.subr.mxu0 0.0
        %1045 = vmatpush1.xpose.msra.mxu0 0.0
        %1046 = vmatprep.subr.mxu0 0.0
        %1047 = vmatpush1.xpose.msra.mxu0 0.0
        %1048 = vmatprep.subr.mxu0 0.0
        %1049 = vmatpush1.xpose.msra.mxu0 0.0
        %1050 = vmatprep.mubr.f32.mxu0 0.0
        %1051 = vmatmul.mubr.f32.gmra.mrb[0].mxu0 %v982
        %v1052 = vpop.f32.mrb[0].mxu0
        %v1053 = vadd.f32 0.0, %v1052
        %v1054 = vpop.f32.mrb[0].mxu0
        %1055 = vdwg.mxu0
        %v1056 = vsel %vm893, %v1053, -inf
        %1057 = vmax.xlane.f32.xlu0 %v1056
        %v1058 = vpop.xlane.xlu0 %1057
        %v1059 = vsub.f32 %v1053, %v1058
        %v1060 = vmul.f32 %v1059, 1.442695
        %v1061 = vpow.pop %v1060
        %v1062 = vsel %vm893, %v1061, 0.0
        %1063 = vadd.xlane.f32.xlu0 %v1062
        %v1064 = vpop.xlane.xlu0 %1063
        %v1065 = vrcp.pop %v1064
        %v1066 = vmul.f32 %v1061, %v1065
        %1068 = vrot.lane.b32.xlu0 %v759, 116
        %v1069 = vpop.permute.xlu0 %1068
        %v1072 = vsel %vm893, %v1066, 0
        %1074 = vmatprep.subr.mxu0 0.0
        %1075 = vmatpush1.msra.mxu0 %v1069
        %1076 = vmatprep.subr.mxu0 0.0
        %1077 = vmatpush1.msra.mxu0 0.0
        %1078 = vmatprep.subr.mxu0 0.0
        %1079 = vmatpush1.msra.mxu0 0.0
        %1080 = vmatprep.subr.mxu0 0.0
        %1081 = vmatpush1.msra.mxu0 0.0
        %1082 = vmatprep.subr.mxu0 0.0
        %1083 = vmatpush1.msra.mxu0 0.0
        %1084 = vmatprep.subr.mxu0 0.0
        %1085 = vmatpush1.msra.mxu0 0.0
        %1086 = vmatprep.subr.mxu0 0.0
        %1087 = vmatpush1.msra.mxu0 0.0
        %1088 = vmatprep.subr.mxu0 0.0
        %1089 = vmatpush1.msra.mxu0 0.0
        %1090 = vmatprep.subr.mxu0 0.0
        %1091 = vmatpush1.msra.mxu0 0.0
        %1092 = vmatprep.subr.mxu0 0.0
        %1093 = vmatpush1.msra.mxu0 0.0
        %1094 = vmatprep.subr.mxu0 0.0
        %1095 = vmatpush1.msra.mxu0 0.0
        %1096 = vmatprep.subr.mxu0 0.0
        %1097 = vmatpush1.msra.mxu0 0.0
        %1098 = vmatprep.subr.mxu0 0.0
        %1099 = vmatpush1.msra.mxu0 0.0
        %1100 = vmatprep.subr.mxu0 0.0
        %1101 = vmatpush1.msra.mxu0 0.0
        %1102 = vmatprep.subr.mxu0 0.0
        %1103 = vmatpush1.msra.mxu0 0.0
        %1104 = vmatprep.subr.mxu0 0.0
        %1105 = vmatpush1.msra.mxu0 0.0
        %1106 = vmatprep.subr.mxu0 0.0
        %1107 = vmatpush1.msra.mxu0 0.0
        %1108 = vmatprep.subr.mxu0 0.0
        %1109 = vmatpush1.msra.mxu0 0.0
        %1110 = vmatprep.subr.mxu0 0.0
        %1111 = vmatpush1.msra.mxu0 0.0
        %1112 = vmatprep.subr.mxu0 0.0
        %1113 = vmatpush1.msra.mxu0 0.0
        %1114 = vmatprep.subr.mxu0 0.0
        %1115 = vmatpush1.msra.mxu0 0.0
        %1116 = vmatprep.subr.mxu0 0.0
        %1117 = vmatpush1.msra.mxu0 0.0
        %1118 = vmatprep.subr.mxu0 0.0
        %1119 = vmatpush1.msra.mxu0 0.0
        %1120 = vmatprep.subr.mxu0 0.0
        %1121 = vmatpush1.msra.mxu0 0.0
        %1122 = vmatprep.subr.mxu0 0.0
        %1123 = vmatpush1.msra.mxu0 0.0
        %1124 = vmatprep.subr.mxu0 0.0
        %1125 = vmatpush1.msra.mxu0 0.0
        %1126 = vmatprep.subr.mxu0 0.0
        %1127 = vmatpush1.msra.mxu0 0.0
        %1128 = vmatprep.subr.mxu0 0.0
        %1129 = vmatpush1.msra.mxu0 0.0
        %1130 = vmatprep.subr.mxu0 0.0
        %1131 = vmatpush1.msra.mxu0 0.0
        %1132 = vmatprep.subr.mxu0 0.0
        %1133 = vmatpush1.msra.mxu0 0.0
        %1134 = vmatprep.subr.mxu0 0.0
        %1135 = vmatpush1.msra.mxu0 0.0
        %1136 = vmatprep.subr.mxu0 0.0
        %1137 = vmatpush1.msra.mxu0 0.0
        %1138 = vmatprep.mubr.f32.mxu0 0.0
        %1139 = vmatmul.mubr.f32.gmra.mrb[0].mxu0 %v1072
        %v1140 = vpop.f32.mrb[0].mxu0
        %v1141 = vadd.f32 0.0, %v1140
        %v1142 = vpop.f32.mrb[0].mxu0
        %1143 = vdwg.mxu0
        %1144 = vrot.lane.b32.xlu0 %v763, 104
        %v1145 = vpop.permute.xlu0 %1144
        %1146 = vrot.lane.b32.xlu0 %v688, 104
        %v1147 = vpop.permute.xlu0 %1146
        %v1148 = vsel %vm816, %v1145, 0
        %v1150 = vsel %vm816, %v1147, 0
        %1152 = vmatprep.subr.mxu0 0.0
        %1153 = vmatpush1.xpose.msra.mxu0 %v1150
        %1154 = vmatprep.subr.mxu0 0.0
        %1155 = vmatpush1.xpose.msra.mxu0 0.0
        %1156 = vmatprep.subr.mxu0 0.0
        %1157 = vmatpush1.xpose.msra.mxu0 0.0
        %1158 = vmatprep.subr.mxu0 0.0
        %1159 = vmatpush1.xpose.msra.mxu0 0.0
        %1160 = vmatprep.subr.mxu0 0.0
        %1161 = vmatpush1.xpose.msra.mxu0 0.0
        %1162 = vmatprep.subr.mxu0 0.0
        %1163 = vmatpush1.xpose.msra.mxu0 0.0
        %1164 = vmatprep.subr.mxu0 0.0
        %1165 = vmatpush1.xpose.msra.mxu0 0.0
        %1166 = vmatprep.subr.mxu0 0.0
        %1167 = vmatpush1.xpose.msra.mxu0 0.0
        %1168 = vmatprep.subr.mxu0 0.0
        %1169 = vmatpush1.xpose.msra.mxu0 0.0
        %1170 = vmatprep.subr.mxu0 0.0
        %1171 = vmatpush1.xpose.msra.mxu0 0.0
        %1172 = vmatprep.subr.mxu0 0.0
        %1173 = vmatpush1.xpose.msra.mxu0 0.0
        %1174 = vmatprep.subr.mxu0 0.0
        %1175 = vmatpush1.xpose.msra.mxu0 0.0
        %1176 = vmatprep.subr.mxu0 0.0
        %1177 = vmatpush1.xpose.msra.mxu0 0.0
        %1178 = vmatprep.subr.mxu0 0.0
        %1179 = vmatpush1.xpose.msra.mxu0 0.0
        %1180 = vmatprep.subr.mxu0 0.0
        %1181 = vmatpush1.xpose.msra.mxu0 0.0
        %1182 = vmatprep.subr.mxu0 0.0
        %1183 = vmatpush1.xpose.msra.mxu0 0.0
        %1184 = vmatprep.subr.mxu0 0.0
        %1185 = vmatpush1.xpose.msra.mxu0 0.0
        %1186 = vmatprep.subr.mxu0 0.0
        %1187 = vmatpush1.xpose.msra.mxu0 0.0
        %1188 = vmatprep.subr.mxu0 0.0
        %1189 = vmatpush1.xpose.msra.mxu0 0.0
        %1190 = vmatprep.subr.mxu0 0.0
        %1191 = vmatpush1.xpose.msra.mxu0 0.0
        %1192 = vmatprep.subr.mxu0 0.0
        %1193 = vmatpush1.xpose.msra.mxu0 0.0
        %1194 = vmatprep.subr.mxu0 0.0
        %1195 = vmatpush1.xpose.msra.mxu0 0.0
        %1196 = vmatprep.subr.mxu0 0.0
        %1197 = vmatpush1.xpose.msra.mxu0 0.0
        %1198 = vmatprep.subr.mxu0 0.0
        %1199 = vmatpush1.xpose.msra.mxu0 0.0
        %1200 = vmatprep.subr.mxu0 0.0
        %1201 = vmatpush1.xpose.msra.mxu0 0.0
        %1202 = vmatprep.subr.mxu0 0.0
        %1203 = vmatpush1.xpose.msra.mxu0 0.0
        %1204 = vmatprep.subr.mxu0 0.0
        %1205 = vmatpush1.xpose.msra.mxu0 0.0
        %1206 = vmatprep.subr.mxu0 0.0
        %1207 = vmatpush1.xpose.msra.mxu0 0.0
        %1208 = vmatprep.subr.mxu0 0.0
        %1209 = vmatpush1.xpose.msra.mxu0 0.0
        %1210 = vmatprep.subr.mxu0 0.0
        %1211 = vmatpush1.xpose.msra.mxu0 0.0
        %1212 = vmatprep.subr.mxu0 0.0
        %1213 = vmatpush1.xpose.msra.mxu0 0.0
        %1214 = vmatprep.subr.mxu0 0.0
        %1215 = vmatpush1.xpose.msra.mxu0 0.0
        %1216 = vmatprep.mubr.f32.mxu0 0.0
        %1217 = vmatmul.mubr.f32.gmra.mrb[0].mxu0 %v1148
        %v1218 = vpop.f32.mrb[0].mxu0
        %v1219 = vadd.f32 0.0, %v1218
        %v1220 = vpop.f32.mrb[0].mxu0
        %1221 = vdwg.mxu0
        %v1222 = vsel %vm893, %v1219, -inf
        %1223 = vmax.xlane.f32.xlu0 %v1222
        %v1224 = vpop.xlane.xlu0 %1223
        %v1225 = vsub.f32 %v1219, %v1224
        %v1226 = vmul.f32 %v1225, 1.442695
        %v1227 = vpow.pop %v1226
        %v1228 = vsel %vm893, %v1227, 0.0
        %1229 = vadd.xlane.f32.xlu0 %v1228
        %v1230 = vpop.xlane.xlu0 %1229
        %v1231 = vrcp.pop %v1230
        %v1232 = vmul.f32 %v1227, %v1231
        %1233 = vrot.lane.b32.xlu0 %v759, 104
        %v1234 = vpop.permute.xlu0 %1233
        %v1237 = vsel %vm893, %v1232, 0
        %1239 = vmatprep.subr.mxu0 0.0
        %1240 = vmatpush1.msra.mxu0 %v1234
        %1241 = vmatprep.subr.mxu0 0.0
        %1242 = vmatpush1.msra.mxu0 0.0
        %1243 = vmatprep.subr.mxu0 0.0
        %1244 = vmatpush1.msra.mxu0 0.0
        %1245 = vmatprep.subr.mxu0 0.0
        %1246 = vmatpush1.msra.mxu0 0.0
        %1247 = vmatprep.subr.mxu0 0.0
        %1248 = vmatpush1.msra.mxu0 0.0
        %1249 = vmatprep.subr.mxu0 0.0
        %1250 = vmatpush1.msra.mxu0 0.0
        %1251 = vmatprep.subr.mxu0 0.0
        %1252 = vmatpush1.msra.mxu0 0.0
        %1253 = vmatprep.subr.mxu0 0.0
        %1254 = vmatpush1.msra.mxu0 0.0
        %1255 = vmatprep.subr.mxu0 0.0
        %1256 = vmatpush1.msra.mxu0 0.0
        %1257 = vmatprep.subr.mxu0 0.0
        %1258 = vmatpush1.msra.mxu0 0.0
        %1259 = vmatprep.subr.mxu0 0.0
        %1260 = vmatpush1.msra.mxu0 0.0
        %1261 = vmatprep.subr.mxu0 0.0
        %1262 = vmatpush1.msra.mxu0 0.0
        %1263 = vmatprep.subr.mxu0 0.0
        %1264 = vmatpush1.msra.mxu0 0.0
        %1265 = vmatprep.subr.mxu0 0.0
        %1266 = vmatpush1.msra.mxu0 0.0
        %1267 = vmatprep.subr.mxu0 0.0
        %1268 = vmatpush1.msra.mxu0 0.0
        %1269 = vmatprep.subr.mxu0 0.0
        %1270 = vmatpush1.msra.mxu0 0.0
        %1271 = vmatprep.subr.mxu0 0.0
        %1272 = vmatpush1.msra.mxu0 0.0
        %1273 = vmatprep.subr.mxu0 0.0
        %1274 = vmatpush1.msra.mxu0 0.0
        %1275 = vmatprep.subr.mxu0 0.0
        %1276 = vmatpush1.msra.mxu0 0.0
        %1277 = vmatprep.subr.mxu0 0.0
        %1278 = vmatpush1.msra.mxu0 0.0
        %1279 = vmatprep.subr.mxu0 0.0
        %1280 = vmatpush1.msra.mxu0 0.0
        %1281 = vmatprep.subr.mxu0 0.0
        %1282 = vmatpush1.msra.mxu0 0.0
        %1283 = vmatprep.subr.mxu0 0.0
        %1284 = vmatpush1.msra.mxu0 0.0
        %1285 = vmatprep.subr.mxu0 0.0
        %1286 = vmatpush1.msra.mxu0 0.0
        %1287 = vmatprep.subr.mxu0 0.0
        %1288 = vmatpush1.msra.mxu0 0.0
        %1289 = vmatprep.subr.mxu0 0.0
        %1290 = vmatpush1.msra.mxu0 0.0
        %1291 = vmatprep.subr.mxu0 0.0
        %1292 = vmatpush1.msra.mxu0 0.0
        %1293 = vmatprep.subr.mxu0 0.0
        %1294 = vmatpush1.msra.mxu0 0.0
        %1295 = vmatprep.subr.mxu0 0.0
        %1296 = vmatpush1.msra.mxu0 0.0
        %1297 = vmatprep.subr.mxu0 0.0
        %1298 = vmatpush1.msra.mxu0 0.0
        %1299 = vmatprep.subr.mxu0 0.0
        %1300 = vmatpush1.msra.mxu0 0.0
        %1301 = vmatprep.subr.mxu0 0.0
        %1302 = vmatpush1.msra.mxu0 0.0
        %1303 = vmatprep.mubr.f32.mxu0 0.0
        %1304 = vmatmul.mubr.f32.gmra.mrb[0].mxu0 %v1237
        %v1305 = vpop.f32.mrb[0].mxu0
        %v1306 = vadd.f32 0.0, %v1305
        %v1307 = vpop.f32.mrb[0].mxu0
        %1308 = vdwg.mxu0
        %1309 = vrot.lane.b32.xlu0 %v763, 92
        %v1310 = vpop.permute.xlu0 %1309
        %1311 = vrot.lane.b32.xlu0 %v688, 92
        %v1312 = vpop.permute.xlu0 %1311
        %v1313 = vsel %vm816, %v1310, 0
        %v1315 = vsel %vm816, %v1312, 0
        %1317 = vmatprep.subr.mxu0 0.0
        %1318 = vmatpush1.xpose.msra.mxu0 %v1315
        %1319 = vmatprep.subr.mxu0 0.0
        %1320 = vmatpush1.xpose.msra.mxu0 0.0
        %1321 = vmatprep.subr.mxu0 0.0
        %1322 = vmatpush1.xpose.msra.mxu0 0.0
        %1323 = vmatprep.subr.mxu0 0.0
        %1324 = vmatpush1.xpose.msra.mxu0 0.0
        %1325 = vmatprep.subr.mxu0 0.0
        %1326 = vmatpush1.xpose.msra.mxu0 0.0
        %1327 = vmatprep.subr.mxu0 0.0
        %1328 = vmatpush1.xpose.msra.mxu0 0.0
        %1329 = vmatprep.subr.mxu0 0.0
        %1330 = vmatpush1.xpose.msra.mxu0 0.0
        %1331 = vmatprep.subr.mxu0 0.0
        %1332 = vmatpush1.xpose.msra.mxu0 0.0
        %1333 = vmatprep.subr.mxu0 0.0
        %1334 = vmatpush1.xpose.msra.mxu0 0.0
        %1335 = vmatprep.subr.mxu0 0.0
        %1336 = vmatpush1.xpose.msra.mxu0 0.0
        %1337 = vmatprep.subr.mxu0 0.0
        %1338 = vmatpush1.xpose.msra.mxu0 0.0
        %1339 = vmatprep.subr.mxu0 0.0
        %1340 = vmatpush1.xpose.msra.mxu0 0.0
        %1341 = vmatprep.subr.mxu0 0.0
        %1342 = vmatpush1.xpose.msra.mxu0 0.0
        %1343 = vmatprep.subr.mxu0 0.0
        %1344 = vmatpush1.xpose.msra.mxu0 0.0
        %1345 = vmatprep.subr.mxu0 0.0
        %1346 = vmatpush1.xpose.msra.mxu0 0.0
        %1347 = vmatprep.subr.mxu0 0.0
        %1348 = vmatpush1.xpose.msra.mxu0 0.0
        %1349 = vmatprep.subr.mxu0 0.0
        %1350 = vmatpush1.xpose.msra.mxu0 0.0
        %1351 = vmatprep.subr.mxu0 0.0
        %1352 = vmatpush1.xpose.msra.mxu0 0.0
        %1353 = vmatprep.subr.mxu0 0.0
        %1354 = vmatpush1.xpose.msra.mxu0 0.0
        %1355 = vmatprep.subr.mxu0 0.0
        %1356 = vmatpush1.xpose.msra.mxu0 0.0
        %1357 = vmatprep.subr.mxu0 0.0
        %1358 = vmatpush1.xpose.msra.mxu0 0.0
        %1359 = vmatprep.subr.mxu0 0.0
        %1360 = vmatpush1.xpose.msra.mxu0 0.0
        %1361 = vmatprep.subr.mxu0 0.0
        %1362 = vmatpush1.xpose.msra.mxu0 0.0
        %1363 = vmatprep.subr.mxu0 0.0
        %1364 = vmatpush1.xpose.msra.mxu0 0.0
        %1365 = vmatprep.subr.mxu0 0.0
        %1366 = vmatpush1.xpose.msra.mxu0 0.0
        %1367 = vmatprep.subr.mxu0 0.0
        %1368 = vmatpush1.xpose.msra.mxu0 0.0
        %1369 = vmatprep.subr.mxu0 0.0
        %1370 = vmatpush1.xpose.msra.mxu0 0.0
        %1371 = vmatprep.subr.mxu0 0.0
        %1372 = vmatpush1.xpose.msra.mxu0 0.0
        %1373 = vmatprep.subr.mxu0 0.0
        %1374 = vmatpush1.xpose.msra.mxu0 0.0
        %1375 = vmatprep.subr.mxu0 0.0
        %1376 = vmatpush1.xpose.msra.mxu0 0.0
        %1377 = vmatprep.subr.mxu0 0.0
        %1378 = vmatpush1.xpose.msra.mxu0 0.0
        %1379 = vmatprep.subr.mxu0 0.0
        %1380 = vmatpush1.xpose.msra.mxu0 0.0
        %1381 = vmatprep.mubr.f32.mxu0 0.0
        %1382 = vmatmul.mubr.f32.gmra.mrb[0].mxu0 %v1313
        %v1383 = vpop.f32.mrb[0].mxu0
        %v1384 = vadd.f32 0.0, %v1383
        %v1385 = vpop.f32.mrb[0].mxu0
        %1386 = vdwg.mxu0
        %v1387 = vsel %vm893, %v1384, -inf
        %1388 = vmax.xlane.f32.xlu0 %v1387
        %v1389 = vpop.xlane.xlu0 %1388
        %v1390 = vsub.f32 %v1384, %v1389
        %v1391 = vmul.f32 %v1390, 1.442695
        %v1392 = vpow.pop %v1391
        %v1393 = vsel %vm893, %v1392, 0.0
        %1394 = vadd.xlane.f32.xlu0 %v1393
        %v1395 = vpop.xlane.xlu0 %1394
        %v1396 = vrcp.pop %v1395
        %v1397 = vmul.f32 %v1392, %v1396
        %1398 = vrot.lane.b32.xlu0 %v759, 92
        %v1399 = vpop.permute.xlu0 %1398
        %v1402 = vsel %vm893, %v1397, 0
        %1404 = vmatprep.subr.mxu0 0.0
        %1405 = vmatpush1.msra.mxu0 %v1399
        %1406 = vmatprep.subr.mxu0 0.0
        %1407 = vmatpush1.msra.mxu0 0.0
        %1408 = vmatprep.subr.mxu0 0.0
        %1409 = vmatpush1.msra.mxu0 0.0
        %1410 = vmatprep.subr.mxu0 0.0
        %1411 = vmatpush1.msra.mxu0 0.0
        %1412 = vmatprep.subr.mxu0 0.0
        %1413 = vmatpush1.msra.mxu0 0.0
        %1414 = vmatprep.subr.mxu0 0.0
        %1415 = vmatpush1.msra.mxu0 0.0
        %1416 = vmatprep.subr.mxu0 0.0
        %1417 = vmatpush1.msra.mxu0 0.0
        %1418 = vmatprep.subr.mxu0 0.0
        %1419 = vmatpush1.msra.mxu0 0.0
        %1420 = vmatprep.subr.mxu0 0.0
        %1421 = vmatpush1.msra.mxu0 0.0
        %1422 = vmatprep.subr.mxu0 0.0
        %1423 = vmatpush1.msra.mxu0 0.0
        %1424 = vmatprep.subr.mxu0 0.0
        %1425 = vmatpush1.msra.mxu0 0.0
        %1426 = vmatprep.subr.mxu0 0.0
        %1427 = vmatpush1.msra.mxu0 0.0
        %1428 = vmatprep.subr.mxu0 0.0
        %1429 = vmatpush1.msra.mxu0 0.0
        %1430 = vmatprep.subr.mxu0 0.0
        %1431 = vmatpush1.msra.mxu0 0.0
        %1432 = vmatprep.subr.mxu0 0.0
        %1433 = vmatpush1.msra.mxu0 0.0
        %1434 = vmatprep.subr.mxu0 0.0
        %1435 = vmatpush1.msra.mxu0 0.0
        %1436 = vmatprep.subr.mxu0 0.0
        %1437 = vmatpush1.msra.mxu0 0.0
        %1438 = vmatprep.subr.mxu0 0.0
        %1439 = vmatpush1.msra.mxu0 0.0
        %1440 = vmatprep.subr.mxu0 0.0
        %1441 = vmatpush1.msra.mxu0 0.0
        %1442 = vmatprep.subr.mxu0 0.0
        %1443 = vmatpush1.msra.mxu0 0.0
        %1444 = vmatprep.subr.mxu0 0.0
        %1445 = vmatpush1.msra.mxu0 0.0
        %1446 = vmatprep.subr.mxu0 0.0
        %1447 = vmatpush1.msra.mxu0 0.0
        %1448 = vmatprep.subr.mxu0 0.0
        %1449 = vmatpush1.msra.mxu0 0.0
        %1450 = vmatprep.subr.mxu0 0.0
        %1451 = vmatpush1.msra.mxu0 0.0
        %1452 = vmatprep.subr.mxu0 0.0
        %1453 = vmatpush1.msra.mxu0 0.0
        %1454 = vmatprep.subr.mxu0 0.0
        %1455 = vmatpush1.msra.mxu0 0.0
        %1456 = vmatprep.subr.mxu0 0.0
        %1457 = vmatpush1.msra.mxu0 0.0
        %1458 = vmatprep.subr.mxu0 0.0
        %1459 = vmatpush1.msra.mxu0 0.0
        %1460 = vmatprep.subr.mxu0 0.0
        %1461 = vmatpush1.msra.mxu0 0.0
        %1462 = vmatprep.subr.mxu0 0.0
        %1463 = vmatpush1.msra.mxu0 0.0
        %1464 = vmatprep.subr.mxu0 0.0
        %1465 = vmatpush1.msra.mxu0 0.0
        %1466 = vmatprep.subr.mxu0 0.0
        %1467 = vmatpush1.msra.mxu0 0.0
        %1468 = vmatprep.mubr.f32.mxu0 0.0
        %1469 = vmatmul.mubr.f32.gmra.mrb[0].mxu0 %v1402
        %v1470 = vpop.f32.mrb[0].mxu0
        %v1471 = vadd.f32 0.0, %v1470
        %v1472 = vpop.f32.mrb[0].mxu0
        %1473 = vdwg.mxu0
        %1474 = vrot.lane.b32.xlu0 %v763, 80
        %v1475 = vpop.permute.xlu0 %1474
        %1476 = vrot.lane.b32.xlu0 %v688, 80
        %v1477 = vpop.permute.xlu0 %1476
        %v1478 = vsel %vm816, %v1475, 0
        %v1480 = vsel %vm816, %v1477, 0
        %1482 = vmatprep.subr.mxu0 0.0
        %1483 = vmatpush1.xpose.msra.mxu0 %v1480
        %1484 = vmatprep.subr.mxu0 0.0
        %1485 = vmatpush1.xpose.msra.mxu0 0.0
        %1486 = vmatprep.subr.mxu0 0.0
        %1487 = vmatpush1.xpose.msra.mxu0 0.0
        %1488 = vmatprep.subr.mxu0 0.0
        %1489 = vmatpush1.xpose.msra.mxu0 0.0
        %1490 = vmatprep.subr.mxu0 0.0
        %1491 = vmatpush1.xpose.msra.mxu0 0.0
        %1492 = vmatprep.subr.mxu0 0.0
        %1493 = vmatpush1.xpose.msra.mxu0 0.0
        %1494 = vmatprep.subr.mxu0 0.0
        %1495 = vmatpush1.xpose.msra.mxu0 0.0
        %1496 = vmatprep.subr.mxu0 0.0
        %1497 = vmatpush1.xpose.msra.mxu0 0.0
        %1498 = vmatprep.subr.mxu0 0.0
        %1499 = vmatpush1.xpose.msra.mxu0 0.0
        %1500 = vmatprep.subr.mxu0 0.0
        %1501 = vmatpush1.xpose.msra.mxu0 0.0
        %1502 = vmatprep.subr.mxu0 0.0
        %1503 = vmatpush1.xpose.msra.mxu0 0.0
        %1504 = vmatprep.subr.mxu0 0.0
        %1505 = vmatpush1.xpose.msra.mxu0 0.0
        %1506 = vmatprep.subr.mxu0 0.0
        %1507 = vmatpush1.xpose.msra.mxu0 0.0
        %1508 = vmatprep.subr.mxu0 0.0
        %1509 = vmatpush1.xpose.msra.mxu0 0.0
        %1510 = vmatprep.subr.mxu0 0.0
        %1511 = vmatpush1.xpose.msra.mxu0 0.0
        %1512 = vmatprep.subr.mxu0 0.0
        %1513 = vmatpush1.xpose.msra.mxu0 0.0
        %1514 = vmatprep.subr.mxu0 0.0
        %1515 = vmatpush1.xpose.msra.mxu0 0.0
        %1516 = vmatprep.subr.mxu0 0.0
        %1517 = vmatpush1.xpose.msra.mxu0 0.0
        %1518 = vmatprep.subr.mxu0 0.0
        %1519 = vmatpush1.xpose.msra.mxu0 0.0
        %1520 = vmatprep.subr.mxu0 0.0
        %1521 = vmatpush1.xpose.msra.mxu0 0.0
        %1522 = vmatprep.subr.mxu0 0.0
        %1523 = vmatpush1.xpose.msra.mxu0 0.0
        %1524 = vmatprep.subr.mxu0 0.0
        %1525 = vmatpush1.xpose.msra.mxu0 0.0
        %1526 = vmatprep.subr.mxu0 0.0
        %1527 = vmatpush1.xpose.msra.mxu0 0.0
        %1528 = vmatprep.subr.mxu0 0.0
        %1529 = vmatpush1.xpose.msra.mxu0 0.0
        %1530 = vmatprep.subr.mxu0 0.0
        %1531 = vmatpush1.xpose.msra.mxu0 0.0
        %1532 = vmatprep.subr.mxu0 0.0
        %1533 = vmatpush1.xpose.msra.mxu0 0.0
        %1534 = vmatprep.subr.mxu0 0.0
        %1535 = vmatpush1.xpose.msra.mxu0 0.0
        %1536 = vmatprep.subr.mxu0 0.0
        %1537 = vmatpush1.xpose.msra.mxu0 0.0
        %1538 = vmatprep.subr.mxu0 0.0
        %1539 = vmatpush1.xpose.msra.mxu0 0.0
        %1540 = vmatprep.subr.mxu0 0.0
        %1541 = vmatpush1.xpose.msra.mxu0 0.0
        %1542 = vmatprep.subr.mxu0 0.0
        %1543 = vmatpush1.xpose.msra.mxu0 0.0
        %1544 = vmatprep.subr.mxu0 0.0
        %1545 = vmatpush1.xpose.msra.mxu0 0.0
        %1546 = vmatprep.mubr.f32.mxu0 0.0
        %1547 = vmatmul.mubr.f32.gmra.mrb[0].mxu0 %v1478
        %v1548 = vpop.f32.mrb[0].mxu0
        %v1549 = vadd.f32 0.0, %v1548
        %v1550 = vpop.f32.mrb[0].mxu0
        %1551 = vdwg.mxu0
        %v1552 = vsel %vm893, %v1549, -inf
        %1553 = vmax.xlane.f32.xlu0 %v1552
        %v1554 = vpop.xlane.xlu0 %1553
        %v1555 = vsub.f32 %v1549, %v1554
        %v1556 = vmul.f32 %v1555, 1.442695
        %v1557 = vpow.pop %v1556
        %v1558 = vsel %vm893, %v1557, 0.0
        %1559 = vadd.xlane.f32.xlu0 %v1558
        %v1560 = vpop.xlane.xlu0 %1559
        %v1561 = vrcp.pop %v1560
        %v1562 = vmul.f32 %v1557, %v1561
        %1563 = vrot.lane.b32.xlu0 %v759, 80
        %v1564 = vpop.permute.xlu0 %1563
        %v1567 = vsel %vm893, %v1562, 0
        %1569 = vmatprep.subr.mxu0 0.0
        %1570 = vmatpush1.msra.mxu0 %v1564
        %1571 = vmatprep.subr.mxu0 0.0
        %1572 = vmatpush1.msra.mxu0 0.0
        %1573 = vmatprep.subr.mxu0 0.0
        %1574 = vmatpush1.msra.mxu0 0.0
        %1575 = vmatprep.subr.mxu0 0.0
        %1576 = vmatpush1.msra.mxu0 0.0
        %1577 = vmatprep.subr.mxu0 0.0
        %1578 = vmatpush1.msra.mxu0 0.0
        %1579 = vmatprep.subr.mxu0 0.0
        %1580 = vmatpush1.msra.mxu0 0.0
        %1581 = vmatprep.subr.mxu0 0.0
        %1582 = vmatpush1.msra.mxu0 0.0
        %1583 = vmatprep.subr.mxu0 0.0
        %1584 = vmatpush1.msra.mxu0 0.0
        %1585 = vmatprep.subr.mxu0 0.0
        %1586 = vmatpush1.msra.mxu0 0.0
        %1587 = vmatprep.subr.mxu0 0.0
        %1588 = vmatpush1.msra.mxu0 0.0
        %1589 = vmatprep.subr.mxu0 0.0
        %1590 = vmatpush1.msra.mxu0 0.0
        %1591 = vmatprep.subr.mxu0 0.0
        %1592 = vmatpush1.msra.mxu0 0.0
        %1593 = vmatprep.subr.mxu0 0.0
        %1594 = vmatpush1.msra.mxu0 0.0
        %1595 = vmatprep.subr.mxu0 0.0
        %1596 = vmatpush1.msra.mxu0 0.0
        %1597 = vmatprep.subr.mxu0 0.0
        %1598 = vmatpush1.msra.mxu0 0.0
        %1599 = vmatprep.subr.mxu0 0.0
        %1600 = vmatpush1.msra.mxu0 0.0
        %1601 = vmatprep.subr.mxu0 0.0
        %1602 = vmatpush1.msra.mxu0 0.0
        %1603 = vmatprep.subr.mxu0 0.0
        %1604 = vmatpush1.msra.mxu0 0.0
        %1605 = vmatprep.subr.mxu0 0.0
        %1606 = vmatpush1.msra.mxu0 0.0
        %1607 = vmatprep.subr.mxu0 0.0
        %1608 = vmatpush1.msra.mxu0 0.0
        %1609 = vmatprep.subr.mxu0 0.0
        %1610 = vmatpush1.msra.mxu0 0.0
        %1611 = vmatprep.subr.mxu0 0.0
        %1612 = vmatpush1.msra.mxu0 0.0
        %1613 = vmatprep.subr.mxu0 0.0
        %1614 = vmatpush1.msra.mxu0 0.0
        %1615 = vmatprep.subr.mxu0 0.0
        %1616 = vmatpush1.msra.mxu0 0.0
        %1617 = vmatprep.subr.mxu0 0.0
        %1618 = vmatpush1.msra.mxu0 0.0
        %1619 = vmatprep.subr.mxu0 0.0
        %1620 = vmatpush1.msra.mxu0 0.0
        %1621 = vmatprep.subr.mxu0 0.0
        %1622 = vmatpush1.msra.mxu0 0.0
        %1623 = vmatprep.subr.mxu0 0.0
        %1624 = vmatpush1.msra.mxu0 0.0
        %1625 = vmatprep.subr.mxu0 0.0
        %1626 = vmatpush1.msra.mxu0 0.0
        %1627 = vmatprep.subr.mxu0 0.0
        %1628 = vmatpush1.msra.mxu0 0.0
        %1629 = vmatprep.subr.mxu0 0.0
        %1630 = vmatpush1.msra.mxu0 0.0
        %1631 = vmatprep.subr.mxu0 0.0
        %1632 = vmatpush1.msra.mxu0 0.0
        %1633 = vmatprep.mubr.f32.mxu0 0.0
        %1634 = vmatmul.mubr.f32.gmra.mrb[0].mxu0 %v1567
        %v1635 = vpop.f32.mrb[0].mxu0
        %v1636 = vadd.f32 0.0, %v1635
        %v1637 = vpop.f32.mrb[0].mxu0
        %1638 = vdwg.mxu0
        %1639 = vrot.lane.b32.xlu0 %v763, 68
        %v1640 = vpop.permute.xlu0 %1639
        %1641 = vrot.lane.b32.xlu0 %v688, 68
        %v1642 = vpop.permute.xlu0 %1641
        %v1643 = vsel %vm816, %v1640, 0
        %v1645 = vsel %vm816, %v1642, 0
        %1647 = vmatprep.subr.mxu0 0.0
        %1648 = vmatpush1.xpose.msra.mxu0 %v1645
        %1649 = vmatprep.subr.mxu0 0.0
        %1650 = vmatpush1.xpose.msra.mxu0 0.0
        %1651 = vmatprep.subr.mxu0 0.0
        %1652 = vmatpush1.xpose.msra.mxu0 0.0
        %1653 = vmatprep.subr.mxu0 0.0
        %1654 = vmatpush1.xpose.msra.mxu0 0.0
        %1655 = vmatprep.subr.mxu0 0.0
        %1656 = vmatpush1.xpose.msra.mxu0 0.0
        %1657 = vmatprep.subr.mxu0 0.0
        %1658 = vmatpush1.xpose.msra.mxu0 0.0
        %1659 = vmatprep.subr.mxu0 0.0
        %1660 = vmatpush1.xpose.msra.mxu0 0.0
        %1661 = vmatprep.subr.mxu0 0.0
        %1662 = vmatpush1.xpose.msra.mxu0 0.0
        %1663 = vmatprep.subr.mxu0 0.0
        %1664 = vmatpush1.xpose.msra.mxu0 0.0
        %1665 = vmatprep.subr.mxu0 0.0
        %1666 = vmatpush1.xpose.msra.mxu0 0.0
        %1667 = vmatprep.subr.mxu0 0.0
        %1668 = vmatpush1.xpose.msra.mxu0 0.0
        %1669 = vmatprep.subr.mxu0 0.0
        %1670 = vmatpush1.xpose.msra.mxu0 0.0
        %1671 = vmatprep.subr.mxu0 0.0
        %1672 = vmatpush1.xpose.msra.mxu0 0.0
        %1673 = vmatprep.subr.mxu0 0.0
        %1674 = vmatpush1.xpose.msra.mxu0 0.0
        %1675 = vmatprep.subr.mxu0 0.0
        %1676 = vmatpush1.xpose.msra.mxu0 0.0
        %1677 = vmatprep.subr.mxu0 0.0
        %1678 = vmatpush1.xpose.msra.mxu0 0.0
        %1679 = vmatprep.subr.mxu0 0.0
        %1680 = vmatpush1.xpose.msra.mxu0 0.0
        %1681 = vmatprep.subr.mxu0 0.0
        %1682 = vmatpush1.xpose.msra.mxu0 0.0
        %1683 = vmatprep.subr.mxu0 0.0
        %1684 = vmatpush1.xpose.msra.mxu0 0.0
        %1685 = vmatprep.subr.mxu0 0.0
        %1686 = vmatpush1.xpose.msra.mxu0 0.0
        %1687 = vmatprep.subr.mxu0 0.0
        %1688 = vmatpush1.xpose.msra.mxu0 0.0
        %1689 = vmatprep.subr.mxu0 0.0
        %1690 = vmatpush1.xpose.msra.mxu0 0.0
        %1691 = vmatprep.subr.mxu0 0.0
        %1692 = vmatpush1.xpose.msra.mxu0 0.0
        %1693 = vmatprep.subr.mxu0 0.0
        %1694 = vmatpush1.xpose.msra.mxu0 0.0
        %1695 = vmatprep.subr.mxu0 0.0
        %1696 = vmatpush1.xpose.msra.mxu0 0.0
        %1697 = vmatprep.subr.mxu0 0.0
        %1698 = vmatpush1.xpose.msra.mxu0 0.0
        %1699 = vmatprep.subr.mxu0 0.0
        %1700 = vmatpush1.xpose.msra.mxu0 0.0
        %1701 = vmatprep.subr.mxu0 0.0
        %1702 = vmatpush1.xpose.msra.mxu0 0.0
        %1703 = vmatprep.subr.mxu0 0.0
        %1704 = vmatpush1.xpose.msra.mxu0 0.0
        %1705 = vmatprep.subr.mxu0 0.0
        %1706 = vmatpush1.xpose.msra.mxu0 0.0
        %1707 = vmatprep.subr.mxu0 0.0
        %1708 = vmatpush1.xpose.msra.mxu0 0.0
        %1709 = vmatprep.subr.mxu0 0.0
        %1710 = vmatpush1.xpose.msra.mxu0 0.0
        %1711 = vmatprep.mubr.f32.mxu0 0.0
        %1712 = vmatmul.mubr.f32.gmra.mrb[0].mxu0 %v1643
        %v1713 = vpop.f32.mrb[0].mxu0
        %v1714 = vadd.f32 0.0, %v1713
        %v1715 = vpop.f32.mrb[0].mxu0
        %1716 = vdwg.mxu0
        %v1717 = vsel %vm893, %v1714, -inf
        %1718 = vmax.xlane.f32.xlu0 %v1717
        %v1719 = vpop.xlane.xlu0 %1718
        %v1720 = vsub.f32 %v1714, %v1719
        %v1721 = vmul.f32 %v1720, 1.442695
        %v1722 = vpow.pop %v1721
        %v1723 = vsel %vm893, %v1722, 0.0
        %1724 = vadd.xlane.f32.xlu0 %v1723
        %v1725 = vpop.xlane.xlu0 %1724
        %v1726 = vrcp.pop %v1725
        %v1727 = vmul.f32 %v1722, %v1726
        %1728 = vrot.lane.b32.xlu0 %v759, 68
        %v1729 = vpop.permute.xlu0 %1728
        %v1732 = vsel %vm893, %v1727, 0
        %1734 = vmatprep.subr.mxu0 0.0
        %1735 = vmatpush1.msra.mxu0 %v1729
        %1736 = vmatprep.subr.mxu0 0.0
        %1737 = vmatpush1.msra.mxu0 0.0
        %1738 = vmatprep.subr.mxu0 0.0
        %1739 = vmatpush1.msra.mxu0 0.0
        %1740 = vmatprep.subr.mxu0 0.0
        %1741 = vmatpush1.msra.mxu0 0.0
        %1742 = vmatprep.subr.mxu0 0.0
        %1743 = vmatpush1.msra.mxu0 0.0
        %1744 = vmatprep.subr.mxu0 0.0
        %1745 = vmatpush1.msra.mxu0 0.0
        %1746 = vmatprep.subr.mxu0 0.0
        %1747 = vmatpush1.msra.mxu0 0.0
        %1748 = vmatprep.subr.mxu0 0.0
        %1749 = vmatpush1.msra.mxu0 0.0
        %1750 = vmatprep.subr.mxu0 0.0
        %1751 = vmatpush1.msra.mxu0 0.0
        %1752 = vmatprep.subr.mxu0 0.0
        %1753 = vmatpush1.msra.mxu0 0.0
        %1754 = vmatprep.subr.mxu0 0.0
        %1755 = vmatpush1.msra.mxu0 0.0
        %1756 = vmatprep.subr.mxu0 0.0
        %1757 = vmatpush1.msra.mxu0 0.0
        %1758 = vmatprep.subr.mxu0 0.0
        %1759 = vmatpush1.msra.mxu0 0.0
        %1760 = vmatprep.subr.mxu0 0.0
        %1761 = vmatpush1.msra.mxu0 0.0
        %1762 = vmatprep.subr.mxu0 0.0
        %1763 = vmatpush1.msra.mxu0 0.0
        %1764 = vmatprep.subr.mxu0 0.0
        %1765 = vmatpush1.msra.mxu0 0.0
        %1766 = vmatprep.subr.mxu0 0.0
        %1767 = vmatpush1.msra.mxu0 0.0
        %1768 = vmatprep.subr.mxu0 0.0
        %1769 = vmatpush1.msra.mxu0 0.0
        %1770 = vmatprep.subr.mxu0 0.0
        %1771 = vmatpush1.msra.mxu0 0.0
        %1772 = vmatprep.subr.mxu0 0.0
        %1773 = vmatpush1.msra.mxu0 0.0
        %1774 = vmatprep.subr.mxu0 0.0
        %1775 = vmatpush1.msra.mxu0 0.0
        %1776 = vmatprep.subr.mxu0 0.0
        %1777 = vmatpush1.msra.mxu0 0.0
        %1778 = vmatprep.subr.mxu0 0.0
        %1779 = vmatpush1.msra.mxu0 0.0
        %1780 = vmatprep.subr.mxu0 0.0
        %1781 = vmatpush1.msra.mxu0 0.0
        %1782 = vmatprep.subr.mxu0 0.0
        %1783 = vmatpush1.msra.mxu0 0.0
        %1784 = vmatprep.subr.mxu0 0.0
        %1785 = vmatpush1.msra.mxu0 0.0
        %1786 = vmatprep.subr.mxu0 0.0
        %1787 = vmatpush1.msra.mxu0 0.0
        %1788 = vmatprep.subr.mxu0 0.0
        %1789 = vmatpush1.msra.mxu0 0.0
        %1790 = vmatprep.subr.mxu0 0.0
        %1791 = vmatpush1.msra.mxu0 0.0
        %1792 = vmatprep.subr.mxu0 0.0
        %1793 = vmatpush1.msra.mxu0 0.0
        %1794 = vmatprep.subr.mxu0 0.0
        %1795 = vmatpush1.msra.mxu0 0.0
        %1796 = vmatprep.subr.mxu0 0.0
        %1797 = vmatpush1.msra.mxu0 0.0
        %1798 = vmatprep.mubr.f32.mxu0 0.0
        %1799 = vmatmul.mubr.f32.gmra.mrb[0].mxu0 %v1732
        %v1800 = vpop.f32.mrb[0].mxu0
        %v1801 = vadd.f32 0.0, %v1800
        %v1802 = vpop.f32.mrb[0].mxu0
        %1803 = vdwg.mxu0
        %1804 = vrot.lane.b32.xlu0 %v763, 56
        %v1805 = vpop.permute.xlu0 %1804
        %1806 = vrot.lane.b32.xlu0 %v688, 56
        %v1807 = vpop.permute.xlu0 %1806
        %v1808 = vsel %vm816, %v1805, 0
        %v1810 = vsel %vm816, %v1807, 0
        %1812 = vmatprep.subr.mxu0 0.0
        %1813 = vmatpush1.xpose.msra.mxu0 %v1810
        %1814 = vmatprep.subr.mxu0 0.0
        %1815 = vmatpush1.xpose.msra.mxu0 0.0
        %1816 = vmatprep.subr.mxu0 0.0
        %1817 = vmatpush1.xpose.msra.mxu0 0.0
        %1818 = vmatprep.subr.mxu0 0.0
        %1819 = vmatpush1.xpose.msra.mxu0 0.0
        %1820 = vmatprep.subr.mxu0 0.0
        %1821 = vmatpush1.xpose.msra.mxu0 0.0
        %1822 = vmatprep.subr.mxu0 0.0
        %1823 = vmatpush1.xpose.msra.mxu0 0.0
        %1824 = vmatprep.subr.mxu0 0.0
        %1825 = vmatpush1.xpose.msra.mxu0 0.0
        %1826 = vmatprep.subr.mxu0 0.0
        %1827 = vmatpush1.xpose.msra.mxu0 0.0
        %1828 = vmatprep.subr.mxu0 0.0
        %1829 = vmatpush1.xpose.msra.mxu0 0.0
        %1830 = vmatprep.subr.mxu0 0.0
        %1831 = vmatpush1.xpose.msra.mxu0 0.0
        %1832 = vmatprep.subr.mxu0 0.0
        %1833 = vmatpush1.xpose.msra.mxu0 0.0
        %1834 = vmatprep.subr.mxu0 0.0
        %1835 = vmatpush1.xpose.msra.mxu0 0.0
        %1836 = vmatprep.subr.mxu0 0.0
        %1837 = vmatpush1.xpose.msra.mxu0 0.0
        %1838 = vmatprep.subr.mxu0 0.0
        %1839 = vmatpush1.xpose.msra.mxu0 0.0
        %1840 = vmatprep.subr.mxu0 0.0
        %1841 = vmatpush1.xpose.msra.mxu0 0.0
        %1842 = vmatprep.subr.mxu0 0.0
        %1843 = vmatpush1.xpose.msra.mxu0 0.0
        %1844 = vmatprep.subr.mxu0 0.0
        %1845 = vmatpush1.xpose.msra.mxu0 0.0
        %1846 = vmatprep.subr.mxu0 0.0
        %1847 = vmatpush1.xpose.msra.mxu0 0.0
        %1848 = vmatprep.subr.mxu0 0.0
        %1849 = vmatpush1.xpose.msra.mxu0 0.0
        %1850 = vmatprep.subr.mxu0 0.0
        %1851 = vmatpush1.xpose.msra.mxu0 0.0
        %1852 = vmatprep.subr.mxu0 0.0
        %1853 = vmatpush1.xpose.msra.mxu0 0.0
        %1854 = vmatprep.subr.mxu0 0.0
        %1855 = vmatpush1.xpose.msra.mxu0 0.0
        %1856 = vmatprep.subr.mxu0 0.0
        %1857 = vmatpush1.xpose.msra.mxu0 0.0
        %1858 = vmatprep.subr.mxu0 0.0
        %1859 = vmatpush1.xpose.msra.mxu0 0.0
        %1860 = vmatprep.subr.mxu0 0.0
        %1861 = vmatpush1.xpose.msra.mxu0 0.0
        %1862 = vmatprep.subr.mxu0 0.0
        %1863 = vmatpush1.xpose.msra.mxu0 0.0
        %1864 = vmatprep.subr.mxu0 0.0
        %1865 = vmatpush1.xpose.msra.mxu0 0.0
        %1866 = vmatprep.subr.mxu0 0.0
        %1867 = vmatpush1.xpose.msra.mxu0 0.0
        %1868 = vmatprep.subr.mxu0 0.0
        %1869 = vmatpush1.xpose.msra.mxu0 0.0
        %1870 = vmatprep.subr.mxu0 0.0
        %1871 = vmatpush1.xpose.msra.mxu0 0.0
        %1872 = vmatprep.subr.mxu0 0.0
        %1873 = vmatpush1.xpose.msra.mxu0 0.0
        %1874 = vmatprep.subr.mxu0 0.0
        %1875 = vmatpush1.xpose.msra.mxu0 0.0
        %1876 = vmatprep.mubr.f32.mxu0 0.0
        %1877 = vmatmul.mubr.f32.gmra.mrb[0].mxu0 %v1808
        %v1878 = vpop.f32.mrb[0].mxu0
        %v1879 = vadd.f32 0.0, %v1878
        %v1880 = vpop.f32.mrb[0].mxu0
        %1881 = vdwg.mxu0
        %v1882 = vsel %vm893, %v1879, -inf
        %1883 = vmax.xlane.f32.xlu0 %v1882
        %v1884 = vpop.xlane.xlu0 %1883
        %v1885 = vsub.f32 %v1879, %v1884
        %v1886 = vmul.f32 %v1885, 1.442695
        %v1887 = vpow.pop %v1886
        %v1888 = vsel %vm893, %v1887, 0.0
        %1889 = vadd.xlane.f32.xlu0 %v1888
        %v1890 = vpop.xlane.xlu0 %1889
        %v1891 = vrcp.pop %v1890
        %v1892 = vmul.f32 %v1887, %v1891
        %1893 = vrot.lane.b32.xlu0 %v759, 56
        %v1894 = vpop.permute.xlu0 %1893
        %v1897 = vsel %vm893, %v1892, 0
        %1899 = vmatprep.subr.mxu0 0.0
        %1900 = vmatpush1.msra.mxu0 %v1894
        %1901 = vmatprep.subr.mxu0 0.0
        %1902 = vmatpush1.msra.mxu0 0.0
        %1903 = vmatprep.subr.mxu0 0.0
        %1904 = vmatpush1.msra.mxu0 0.0
        %1905 = vmatprep.subr.mxu0 0.0
        %1906 = vmatpush1.msra.mxu0 0.0
        %1907 = vmatprep.subr.mxu0 0.0
        %1908 = vmatpush1.msra.mxu0 0.0
        %1909 = vmatprep.subr.mxu0 0.0
        %1910 = vmatpush1.msra.mxu0 0.0
        %1911 = vmatprep.subr.mxu0 0.0
        %1912 = vmatpush1.msra.mxu0 0.0
        %1913 = vmatprep.subr.mxu0 0.0
        %1914 = vmatpush1.msra.mxu0 0.0
        %1915 = vmatprep.subr.mxu0 0.0
        %1916 = vmatpush1.msra.mxu0 0.0
        %1917 = vmatprep.subr.mxu0 0.0
        %1918 = vmatpush1.msra.mxu0 0.0
        %1919 = vmatprep.subr.mxu0 0.0
        %1920 = vmatpush1.msra.mxu0 0.0
        %1921 = vmatprep.subr.mxu0 0.0
        %1922 = vmatpush1.msra.mxu0 0.0
        %1923 = vmatprep.subr.mxu0 0.0
        %1924 = vmatpush1.msra.mxu0 0.0
        %1925 = vmatprep.subr.mxu0 0.0
        %1926 = vmatpush1.msra.mxu0 0.0
        %1927 = vmatprep.subr.mxu0 0.0
        %1928 = vmatpush1.msra.mxu0 0.0
        %1929 = vmatprep.subr.mxu0 0.0
        %1930 = vmatpush1.msra.mxu0 0.0
        %1931 = vmatprep.subr.mxu0 0.0
        %1932 = vmatpush1.msra.mxu0 0.0
        %1933 = vmatprep.subr.mxu0 0.0
        %1934 = vmatpush1.msra.mxu0 0.0
        %1935 = vmatprep.subr.mxu0 0.0
        %1936 = vmatpush1.msra.mxu0 0.0
        %1937 = vmatprep.subr.mxu0 0.0
        %1938 = vmatpush1.msra.mxu0 0.0
        %1939 = vmatprep.subr.mxu0 0.0
        %1940 = vmatpush1.msra.mxu0 0.0
        %1941 = vmatprep.subr.mxu0 0.0
        %1942 = vmatpush1.msra.mxu0 0.0
        %1943 = vmatprep.subr.mxu0 0.0
        %1944 = vmatpush1.msra.mxu0 0.0
        %1945 = vmatprep.subr.mxu0 0.0
        %1946 = vmatpush1.msra.mxu0 0.0
        %1947 = vmatprep.subr.mxu0 0.0
        %1948 = vmatpush1.msra.mxu0 0.0
        %1949 = vmatprep.subr.mxu0 0.0
        %1950 = vmatpush1.msra.mxu0 0.0
        %1951 = vmatprep.subr.mxu0 0.0
        %1952 = vmatpush1.msra.mxu0 0.0
        %1953 = vmatprep.subr.mxu0 0.0
        %1954 = vmatpush1.msra.mxu0 0.0
        %1955 = vmatprep.subr.mxu0 0.0
        %1956 = vmatpush1.msra.mxu0 0.0
        %1957 = vmatprep.subr.mxu0 0.0
        %1958 = vmatpush1.msra.mxu0 0.0
        %1959 = vmatprep.subr.mxu0 0.0
        %1960 = vmatpush1.msra.mxu0 0.0
        %1961 = vmatprep.subr.mxu0 0.0
        %1962 = vmatpush1.msra.mxu0 0.0
        %1963 = vmatprep.mubr.f32.mxu0 0.0
        %1964 = vmatmul.mubr.f32.gmra.mrb[0].mxu0 %v1897
        %v1965 = vpop.f32.mrb[0].mxu0
        %v1966 = vadd.f32 0.0, %v1965
        %v1967 = vpop.f32.mrb[0].mxu0
        %1968 = vdwg.mxu0
        %1969 = vrot.lane.b32.xlu0 %v763, 44
        %v1970 = vpop.permute.xlu0 %1969
        %1971 = vrot.lane.b32.xlu0 %v688, 44
        %v1972 = vpop.permute.xlu0 %1971
        %v1973 = vsel %vm816, %v1970, 0
        %v1975 = vsel %vm816, %v1972, 0
        %1977 = vmatprep.subr.mxu0 0.0
        %1978 = vmatpush1.xpose.msra.mxu0 %v1975
        %1979 = vmatprep.subr.mxu0 0.0
        %1980 = vmatpush1.xpose.msra.mxu0 0.0
        %1981 = vmatprep.subr.mxu0 0.0
        %1982 = vmatpush1.xpose.msra.mxu0 0.0
        %1983 = vmatprep.subr.mxu0 0.0
        %1984 = vmatpush1.xpose.msra.mxu0 0.0
        %1985 = vmatprep.subr.mxu0 0.0
        %1986 = vmatpush1.xpose.msra.mxu0 0.0
        %1987 = vmatprep.subr.mxu0 0.0
        %1988 = vmatpush1.xpose.msra.mxu0 0.0
        %1989 = vmatprep.subr.mxu0 0.0
        %1990 = vmatpush1.xpose.msra.mxu0 0.0
        %1991 = vmatprep.subr.mxu0 0.0
        %1992 = vmatpush1.xpose.msra.mxu0 0.0
        %1993 = vmatprep.subr.mxu0 0.0
        %1994 = vmatpush1.xpose.msra.mxu0 0.0
        %1995 = vmatprep.subr.mxu0 0.0
        %1996 = vmatpush1.xpose.msra.mxu0 0.0
        %1997 = vmatprep.subr.mxu0 0.0
        %1998 = vmatpush1.xpose.msra.mxu0 0.0
        %1999 = vmatprep.subr.mxu0 0.0
        %2000 = vmatpush1.xpose.msra.mxu0 0.0
        %2001 = vmatprep.subr.mxu0 0.0
        %2002 = vmatpush1.xpose.msra.mxu0 0.0
        %2003 = vmatprep.subr.mxu0 0.0
        %2004 = vmatpush1.xpose.msra.mxu0 0.0
        %2005 = vmatprep.subr.mxu0 0.0
        %2006 = vmatpush1.xpose.msra.mxu0 0.0
        %2007 = vmatprep.subr.mxu0 0.0
        %2008 = vmatpush1.xpose.msra.mxu0 0.0
        %2009 = vmatprep.subr.mxu0 0.0
        %2010 = vmatpush1.xpose.msra.mxu0 0.0
        %2011 = vmatprep.subr.mxu0 0.0
        %2012 = vmatpush1.xpose.msra.mxu0 0.0
        %2013 = vmatprep.subr.mxu0 0.0
        %2014 = vmatpush1.xpose.msra.mxu0 0.0
        %2015 = vmatprep.subr.mxu0 0.0
        %2016 = vmatpush1.xpose.msra.mxu0 0.0
        %2017 = vmatprep.subr.mxu0 0.0
        %2018 = vmatpush1.xpose.msra.mxu0 0.0
        %2019 = vmatprep.subr.mxu0 0.0
        %2020 = vmatpush1.xpose.msra.mxu0 0.0
        %2021 = vmatprep.subr.mxu0 0.0
        %2022 = vmatpush1.xpose.msra.mxu0 0.0
        %2023 = vmatprep.subr.mxu0 0.0
        %2024 = vmatpush1.xpose.msra.mxu0 0.0
        %2025 = vmatprep.subr.mxu0 0.0
        %2026 = vmatpush1.xpose.msra.mxu0 0.0
        %2027 = vmatprep.subr.mxu0 0.0
        %2028 = vmatpush1.xpose.msra.mxu0 0.0
        %2029 = vmatprep.subr.mxu0 0.0
        %2030 = vmatpush1.xpose.msra.mxu0 0.0
        %2031 = vmatprep.subr.mxu0 0.0
        %2032 = vmatpush1.xpose.msra.mxu0 0.0
        %2033 = vmatprep.subr.mxu0 0.0
        %2034 = vmatpush1.xpose.msra.mxu0 0.0
        %2035 = vmatprep.subr.mxu0 0.0
        %2036 = vmatpush1.xpose.msra.mxu0 0.0
        %2037 = vmatprep.subr.mxu0 0.0
        %2038 = vmatpush1.xpose.msra.mxu0 0.0
        %2039 = vmatprep.subr.mxu0 0.0
        %2040 = vmatpush1.xpose.msra.mxu0 0.0
        %2041 = vmatprep.mubr.f32.mxu0 0.0
        %2042 = vmatmul.mubr.f32.gmra.mrb[0].mxu0 %v1973
        %v2043 = vpop.f32.mrb[0].mxu0
        %v2044 = vadd.f32 0.0, %v2043
        %v2045 = vpop.f32.mrb[0].mxu0
        %2046 = vdwg.mxu0
        %v2047 = vsel %vm893, %v2044, -inf
        %2048 = vmax.xlane.f32.xlu0 %v2047
        %v2049 = vpop.xlane.xlu0 %2048
        %v2050 = vsub.f32 %v2044, %v2049
        %v2051 = vmul.f32 %v2050, 1.442695
        %v2052 = vpow.pop %v2051
        %v2053 = vsel %vm893, %v2052, 0.0
        %2054 = vadd.xlane.f32.xlu0 %v2053
        %v2055 = vpop.xlane.xlu0 %2054
        %v2056 = vrcp.pop %v2055
        %v2057 = vmul.f32 %v2052, %v2056
        %2058 = vrot.lane.b32.xlu0 %v759, 44
        %v2059 = vpop.permute.xlu0 %2058
        %v2062 = vsel %vm893, %v2057, 0
        %2064 = vmatprep.subr.mxu0 0.0
        %2065 = vmatpush1.msra.mxu0 %v2059
        %2066 = vmatprep.subr.mxu0 0.0
        %2067 = vmatpush1.msra.mxu0 0.0
        %2068 = vmatprep.subr.mxu0 0.0
        %2069 = vmatpush1.msra.mxu0 0.0
        %2070 = vmatprep.subr.mxu0 0.0
        %2071 = vmatpush1.msra.mxu0 0.0
        %2072 = vmatprep.subr.mxu0 0.0
        %2073 = vmatpush1.msra.mxu0 0.0
        %2074 = vmatprep.subr.mxu0 0.0
        %2075 = vmatpush1.msra.mxu0 0.0
        %2076 = vmatprep.subr.mxu0 0.0
        %2077 = vmatpush1.msra.mxu0 0.0
        %2078 = vmatprep.subr.mxu0 0.0
        %2079 = vmatpush1.msra.mxu0 0.0
        %2080 = vmatprep.subr.mxu0 0.0
        %2081 = vmatpush1.msra.mxu0 0.0
        %2082 = vmatprep.subr.mxu0 0.0
        %2083 = vmatpush1.msra.mxu0 0.0
        %2084 = vmatprep.subr.mxu0 0.0
        %2085 = vmatpush1.msra.mxu0 0.0
        %2086 = vmatprep.subr.mxu0 0.0
        %2087 = vmatpush1.msra.mxu0 0.0
        %2088 = vmatprep.subr.mxu0 0.0
        %2089 = vmatpush1.msra.mxu0 0.0
        %2090 = vmatprep.subr.mxu0 0.0
        %2091 = vmatpush1.msra.mxu0 0.0
        %2092 = vmatprep.subr.mxu0 0.0
        %2093 = vmatpush1.msra.mxu0 0.0
        %2094 = vmatprep.subr.mxu0 0.0
        %2095 = vmatpush1.msra.mxu0 0.0
        %2096 = vmatprep.subr.mxu0 0.0
        %2097 = vmatpush1.msra.mxu0 0.0
        %2098 = vmatprep.subr.mxu0 0.0
        %2099 = vmatpush1.msra.mxu0 0.0
        %2100 = vmatprep.subr.mxu0 0.0
        %2101 = vmatpush1.msra.mxu0 0.0
        %2102 = vmatprep.subr.mxu0 0.0
        %2103 = vmatpush1.msra.mxu0 0.0
        %2104 = vmatprep.subr.mxu0 0.0
        %2105 = vmatpush1.msra.mxu0 0.0
        %2106 = vmatprep.subr.mxu0 0.0
        %2107 = vmatpush1.msra.mxu0 0.0
        %2108 = vmatprep.subr.mxu0 0.0
        %2109 = vmatpush1.msra.mxu0 0.0
        %2110 = vmatprep.subr.mxu0 0.0
        %2111 = vmatpush1.msra.mxu0 0.0
        %2112 = vmatprep.subr.mxu0 0.0
        %2113 = vmatpush1.msra.mxu0 0.0
        %2114 = vmatprep.subr.mxu0 0.0
        %2115 = vmatpush1.msra.mxu0 0.0
        %2116 = vmatprep.subr.mxu0 0.0
        %2117 = vmatpush1.msra.mxu0 0.0
        %2118 = vmatprep.subr.mxu0 0.0
        %2119 = vmatpush1.msra.mxu0 0.0
        %2120 = vmatprep.subr.mxu0 0.0
        %2121 = vmatpush1.msra.mxu0 0.0
        %2122 = vmatprep.subr.mxu0 0.0
        %2123 = vmatpush1.msra.mxu0 0.0
        %2124 = vmatprep.subr.mxu0 0.0
        %2125 = vmatpush1.msra.mxu0 0.0
        %2126 = vmatprep.subr.mxu0 0.0
        %2127 = vmatpush1.msra.mxu0 0.0
        %2128 = vmatprep.mubr.f32.mxu0 0.0
        %2129 = vmatmul.mubr.f32.gmra.mrb[0].mxu0 %v2062
        %v2130 = vpop.f32.mrb[0].mxu0
        %v2131 = vadd.f32 0.0, %v2130
        %v2132 = vpop.f32.mrb[0].mxu0
        %2133 = vdwg.mxu0
        %2134 = vrot.lane.b32.xlu0 %v763, 32
        %v2135 = vpop.permute.xlu0 %2134
        %2136 = vrot.lane.b32.xlu0 %v688, 32
        %v2137 = vpop.permute.xlu0 %2136
        %v2138 = vsel %vm816, %v2135, 0
        %v2140 = vsel %vm816, %v2137, 0
        %2142 = vmatprep.subr.mxu0 0.0
        %2143 = vmatpush1.xpose.msra.mxu0 %v2140
        %2144 = vmatprep.subr.mxu0 0.0
        %2145 = vmatpush1.xpose.msra.mxu0 0.0
        %2146 = vmatprep.subr.mxu0 0.0
        %2147 = vmatpush1.xpose.msra.mxu0 0.0
        %2148 = vmatprep.subr.mxu0 0.0
        %2149 = vmatpush1.xpose.msra.mxu0 0.0
        %2150 = vmatprep.subr.mxu0 0.0
        %2151 = vmatpush1.xpose.msra.mxu0 0.0
        %2152 = vmatprep.subr.mxu0 0.0
        %2153 = vmatpush1.xpose.msra.mxu0 0.0
        %2154 = vmatprep.subr.mxu0 0.0
        %2155 = vmatpush1.xpose.msra.mxu0 0.0
        %2156 = vmatprep.subr.mxu0 0.0
        %2157 = vmatpush1.xpose.msra.mxu0 0.0
        %2158 = vmatprep.subr.mxu0 0.0
        %2159 = vmatpush1.xpose.msra.mxu0 0.0
        %2160 = vmatprep.subr.mxu0 0.0
        %2161 = vmatpush1.xpose.msra.mxu0 0.0
        %2162 = vmatprep.subr.mxu0 0.0
        %2163 = vmatpush1.xpose.msra.mxu0 0.0
        %2164 = vmatprep.subr.mxu0 0.0
        %2165 = vmatpush1.xpose.msra.mxu0 0.0
        %2166 = vmatprep.subr.mxu0 0.0
        %2167 = vmatpush1.xpose.msra.mxu0 0.0
        %2168 = vmatprep.subr.mxu0 0.0
        %2169 = vmatpush1.xpose.msra.mxu0 0.0
        %2170 = vmatprep.subr.mxu0 0.0
        %2171 = vmatpush1.xpose.msra.mxu0 0.0
        %2172 = vmatprep.subr.mxu0 0.0
        %2173 = vmatpush1.xpose.msra.mxu0 0.0
        %2174 = vmatprep.subr.mxu0 0.0
        %2175 = vmatpush1.xpose.msra.mxu0 0.0
        %2176 = vmatprep.subr.mxu0 0.0
        %2177 = vmatpush1.xpose.msra.mxu0 0.0
        %2178 = vmatprep.subr.mxu0 0.0
        %2179 = vmatpush1.xpose.msra.mxu0 0.0
        %2180 = vmatprep.subr.mxu0 0.0
        %2181 = vmatpush1.xpose.msra.mxu0 0.0
        %2182 = vmatprep.subr.mxu0 0.0
        %2183 = vmatpush1.xpose.msra.mxu0 0.0
        %2184 = vmatprep.subr.mxu0 0.0
        %2185 = vmatpush1.xpose.msra.mxu0 0.0
        %2186 = vmatprep.subr.mxu0 0.0
        %2187 = vmatpush1.xpose.msra.mxu0 0.0
        %2188 = vmatprep.subr.mxu0 0.0
        %2189 = vmatpush1.xpose.msra.mxu0 0.0
        %2190 = vmatprep.subr.mxu0 0.0
        %2191 = vmatpush1.xpose.msra.mxu0 0.0
        %2192 = vmatprep.subr.mxu0 0.0
        %2193 = vmatpush1.xpose.msra.mxu0 0.0
        %2194 = vmatprep.subr.mxu0 0.0
        %2195 = vmatpush1.xpose.msra.mxu0 0.0
        %2196 = vmatprep.subr.mxu0 0.0
        %2197 = vmatpush1.xpose.msra.mxu0 0.0
        %2198 = vmatprep.subr.mxu0 0.0
        %2199 = vmatpush1.xpose.msra.mxu0 0.0
        %2200 = vmatprep.subr.mxu0 0.0
        %2201 = vmatpush1.xpose.msra.mxu0 0.0
        %2202 = vmatprep.subr.mxu0 0.0
        %2203 = vmatpush1.xpose.msra.mxu0 0.0
        %2204 = vmatprep.subr.mxu0 0.0
        %2205 = vmatpush1.xpose.msra.mxu0 0.0
        %2206 = vmatprep.mubr.f32.mxu0 0.0
        %2207 = vmatmul.mubr.f32.gmra.mrb[0].mxu0 %v2138
        %v2208 = vpop.f32.mrb[0].mxu0
        %v2209 = vadd.f32 0.0, %v2208
        %v2210 = vpop.f32.mrb[0].mxu0
        %2211 = vdwg.mxu0
        %v2212 = vsel %vm893, %v2209, -inf
        %2213 = vmax.xlane.f32.xlu0 %v2212
        %v2214 = vpop.xlane.xlu0 %2213
        %v2215 = vsub.f32 %v2209, %v2214
        %v2216 = vmul.f32 %v2215, 1.442695
        %v2217 = vpow.pop %v2216
        %v2218 = vsel %vm893, %v2217, 0.0
        %2219 = vadd.xlane.f32.xlu0 %v2218
        %v2220 = vpop.xlane.xlu0 %2219
        %v2221 = vrcp.pop %v2220
        %v2222 = vmul.f32 %v2217, %v2221
        %2223 = vrot.lane.b32.xlu0 %v759, 32
        %v2224 = vpop.permute.xlu0 %2223
        %v2227 = vsel %vm893, %v2222, 0
        %2229 = vmatprep.subr.mxu0 0.0
        %2230 = vmatpush1.msra.mxu0 %v2224
        %2231 = vmatprep.subr.mxu0 0.0
        %2232 = vmatpush1.msra.mxu0 0.0
        %2233 = vmatprep.subr.mxu0 0.0
        %2234 = vmatpush1.msra.mxu0 0.0
        %2235 = vmatprep.subr.mxu0 0.0
        %2236 = vmatpush1.msra.mxu0 0.0
        %2237 = vmatprep.subr.mxu0 0.0
        %2238 = vmatpush1.msra.mxu0 0.0
        %2239 = vmatprep.subr.mxu0 0.0
        %2240 = vmatpush1.msra.mxu0 0.0
        %2241 = vmatprep.subr.mxu0 0.0
        %2242 = vmatpush1.msra.mxu0 0.0
        %2243 = vmatprep.subr.mxu0 0.0
        %2244 = vmatpush1.msra.mxu0 0.0
        %2245 = vmatprep.subr.mxu0 0.0
        %2246 = vmatpush1.msra.mxu0 0.0
        %2247 = vmatprep.subr.mxu0 0.0
        %2248 = vmatpush1.msra.mxu0 0.0
        %2249 = vmatprep.subr.mxu0 0.0
        %2250 = vmatpush1.msra.mxu0 0.0
        %2251 = vmatprep.subr.mxu0 0.0
        %2252 = vmatpush1.msra.mxu0 0.0
        %2253 = vmatprep.subr.mxu0 0.0
        %2254 = vmatpush1.msra.mxu0 0.0
        %2255 = vmatprep.subr.mxu0 0.0
        %2256 = vmatpush1.msra.mxu0 0.0
        %2257 = vmatprep.subr.mxu0 0.0
        %2258 = vmatpush1.msra.mxu0 0.0
        %2259 = vmatprep.subr.mxu0 0.0
        %2260 = vmatpush1.msra.mxu0 0.0
        %2261 = vmatprep.subr.mxu0 0.0
        %2262 = vmatpush1.msra.mxu0 0.0
        %2263 = vmatprep.subr.mxu0 0.0
        %2264 = vmatpush1.msra.mxu0 0.0
        %2265 = vmatprep.subr.mxu0 0.0
        %2266 = vmatpush1.msra.mxu0 0.0
        %2267 = vmatprep.subr.mxu0 0.0
        %2268 = vmatpush1.msra.mxu0 0.0
        %2269 = vmatprep.subr.mxu0 0.0
        %2270 = vmatpush1.msra.mxu0 0.0
        %2271 = vmatprep.subr.mxu0 0.0
        %2272 = vmatpush1.msra.mxu0 0.0
        %2273 = vmatprep.subr.mxu0 0.0
        %2274 = vmatpush1.msra.mxu0 0.0
        %2275 = vmatprep.subr.mxu0 0.0
        %2276 = vmatpush1.msra.mxu0 0.0
        %2277 = vmatprep.subr.mxu0 0.0
        %2278 = vmatpush1.msra.mxu0 0.0
        %2279 = vmatprep.subr.mxu0 0.0
        %2280 = vmatpush1.msra.mxu0 0.0
        %2281 = vmatprep.subr.mxu0 0.0
        %2282 = vmatpush1.msra.mxu0 0.0
        %2283 = vmatprep.subr.mxu0 0.0
        %2284 = vmatpush1.msra.mxu0 0.0
        %2285 = vmatprep.subr.mxu0 0.0
        %2286 = vmatpush1.msra.mxu0 0.0
        %2287 = vmatprep.subr.mxu0 0.0
        %2288 = vmatpush1.msra.mxu0 0.0
        %2289 = vmatprep.subr.mxu0 0.0
        %2290 = vmatpush1.msra.mxu0 0.0
        %2291 = vmatprep.subr.mxu0 0.0
        %2292 = vmatpush1.msra.mxu0 0.0
        %2293 = vmatprep.mubr.f32.mxu0 0.0
        %2294 = vmatmul.mubr.f32.gmra.mrb[0].mxu0 %v2227
        %v2295 = vpop.f32.mrb[0].mxu0
        %v2296 = vadd.f32 0.0, %v2295
        %v2297 = vpop.f32.mrb[0].mxu0
        %2298 = vdwg.mxu0
        %2299 = vrot.lane.b32.xlu0 %v763, 20
        %v2300 = vpop.permute.xlu0 %2299
        %2301 = vrot.lane.b32.xlu0 %v688, 20
        %v2302 = vpop.permute.xlu0 %2301
        %v2303 = vsel %vm816, %v2300, 0
        %v2305 = vsel %vm816, %v2302, 0
        %2307 = vmatprep.subr.mxu0 0.0
        %2308 = vmatpush1.xpose.msra.mxu0 %v2305
        %2309 = vmatprep.subr.mxu0 0.0
        %2310 = vmatpush1.xpose.msra.mxu0 0.0
        %2311 = vmatprep.subr.mxu0 0.0
        %2312 = vmatpush1.xpose.msra.mxu0 0.0
        %2313 = vmatprep.subr.mxu0 0.0
        %2314 = vmatpush1.xpose.msra.mxu0 0.0
        %2315 = vmatprep.subr.mxu0 0.0
        %2316 = vmatpush1.xpose.msra.mxu0 0.0
        %2317 = vmatprep.subr.mxu0 0.0
        %2318 = vmatpush1.xpose.msra.mxu0 0.0
        %2319 = vmatprep.subr.mxu0 0.0
        %2320 = vmatpush1.xpose.msra.mxu0 0.0
        %2321 = vmatprep.subr.mxu0 0.0
        %2322 = vmatpush1.xpose.msra.mxu0 0.0
        %2323 = vmatprep.subr.mxu0 0.0
        %2324 = vmatpush1.xpose.msra.mxu0 0.0
        %2325 = vmatprep.subr.mxu0 0.0
        %2326 = vmatpush1.xpose.msra.mxu0 0.0
        %2327 = vmatprep.subr.mxu0 0.0
        %2328 = vmatpush1.xpose.msra.mxu0 0.0
        %2329 = vmatprep.subr.mxu0 0.0
        %2330 = vmatpush1.xpose.msra.mxu0 0.0
        %2331 = vmatprep.subr.mxu0 0.0
        %2332 = vmatpush1.xpose.msra.mxu0 0.0
        %2333 = vmatprep.subr.mxu0 0.0
        %2334 = vmatpush1.xpose.msra.mxu0 0.0
        %2335 = vmatprep.subr.mxu0 0.0
        %2336 = vmatpush1.xpose.msra.mxu0 0.0
        %2337 = vmatprep.subr.mxu0 0.0
        %2338 = vmatpush1.xpose.msra.mxu0 0.0
        %2339 = vmatprep.subr.mxu0 0.0
        %2340 = vmatpush1.xpose.msra.mxu0 0.0
        %2341 = vmatprep.subr.mxu0 0.0
        %2342 = vmatpush1.xpose.msra.mxu0 0.0
        %2343 = vmatprep.subr.mxu0 0.0
        %2344 = vmatpush1.xpose.msra.mxu0 0.0
        %2345 = vmatprep.subr.mxu0 0.0
        %2346 = vmatpush1.xpose.msra.mxu0 0.0
        %2347 = vmatprep.subr.mxu0 0.0
        %2348 = vmatpush1.xpose.msra.mxu0 0.0
        %2349 = vmatprep.subr.mxu0 0.0
        %2350 = vmatpush1.xpose.msra.mxu0 0.0
        %2351 = vmatprep.subr.mxu0 0.0
        %2352 = vmatpush1.xpose.msra.mxu0 0.0
        %2353 = vmatprep.subr.mxu0 0.0
        %2354 = vmatpush1.xpose.msra.mxu0 0.0
        %2355 = vmatprep.subr.mxu0 0.0
        %2356 = vmatpush1.xpose.msra.mxu0 0.0
        %2357 = vmatprep.subr.mxu0 0.0
        %2358 = vmatpush1.xpose.msra.mxu0 0.0
        %2359 = vmatprep.subr.mxu0 0.0
        %2360 = vmatpush1.xpose.msra.mxu0 0.0
        %2361 = vmatprep.subr.mxu0 0.0
        %2362 = vmatpush1.xpose.msra.mxu0 0.0
        %2363 = vmatprep.subr.mxu0 0.0
        %2364 = vmatpush1.xpose.msra.mxu0 0.0
        %2365 = vmatprep.subr.mxu0 0.0
        %2366 = vmatpush1.xpose.msra.mxu0 0.0
        %2367 = vmatprep.subr.mxu0 0.0
        %2368 = vmatpush1.xpose.msra.mxu0 0.0
        %2369 = vmatprep.subr.mxu0 0.0
        %2370 = vmatpush1.xpose.msra.mxu0 0.0
        %2371 = vmatprep.mubr.f32.mxu0 0.0
        %2372 = vmatmul.mubr.f32.gmra.mrb[0].mxu0 %v2303
        %v2373 = vpop.f32.mrb[0].mxu0
        %v2374 = vadd.f32 0.0, %v2373
        %v2375 = vpop.f32.mrb[0].mxu0
        %2376 = vdwg.mxu0
        %v2377 = vsel %vm893, %v2374, -inf
        %2378 = vmax.xlane.f32.xlu0 %v2377
        %v2379 = vpop.xlane.xlu0 %2378
        %v2380 = vsub.f32 %v2374, %v2379
        %v2381 = vmul.f32 %v2380, 1.442695
        %v2382 = vpow.pop %v2381
        %v2383 = vsel %vm893, %v2382, 0.0
        %2384 = vadd.xlane.f32.xlu0 %v2383
        %v2385 = vpop.xlane.xlu0 %2384
        %v2386 = vrcp.pop %v2385
        %v2387 = vmul.f32 %v2382, %v2386
        %2388 = vrot.lane.b32.xlu0 %v759, 20
        %v2389 = vpop.permute.xlu0 %2388
        %v2392 = vsel %vm893, %v2387, 0
        %2394 = vmatprep.subr.mxu0 0.0
        %2395 = vmatpush1.msra.mxu0 %v2389
        %2396 = vmatprep.subr.mxu0 0.0
        %2397 = vmatpush1.msra.mxu0 0.0
        %2398 = vmatprep.subr.mxu0 0.0
        %2399 = vmatpush1.msra.mxu0 0.0
        %2400 = vmatprep.subr.mxu0 0.0
        %2401 = vmatpush1.msra.mxu0 0.0
        %2402 = vmatprep.subr.mxu0 0.0
        %2403 = vmatpush1.msra.mxu0 0.0
        %2404 = vmatprep.subr.mxu0 0.0
        %2405 = vmatpush1.msra.mxu0 0.0
        %2406 = vmatprep.subr.mxu0 0.0
        %2407 = vmatpush1.msra.mxu0 0.0
        %2408 = vmatprep.subr.mxu0 0.0
        %2409 = vmatpush1.msra.mxu0 0.0
        %2410 = vmatprep.subr.mxu0 0.0
        %2411 = vmatpush1.msra.mxu0 0.0
        %2412 = vmatprep.subr.mxu0 0.0
        %2413 = vmatpush1.msra.mxu0 0.0
        %2414 = vmatprep.subr.mxu0 0.0
        %2415 = vmatpush1.msra.mxu0 0.0
        %2416 = vmatprep.subr.mxu0 0.0
        %2417 = vmatpush1.msra.mxu0 0.0
        %2418 = vmatprep.subr.mxu0 0.0
        %2419 = vmatpush1.msra.mxu0 0.0
        %2420 = vmatprep.subr.mxu0 0.0
        %2421 = vmatpush1.msra.mxu0 0.0
        %2422 = vmatprep.subr.mxu0 0.0
        %2423 = vmatpush1.msra.mxu0 0.0
        %2424 = vmatprep.subr.mxu0 0.0
        %2425 = vmatpush1.msra.mxu0 0.0
        %2426 = vmatprep.subr.mxu0 0.0
        %2427 = vmatpush1.msra.mxu0 0.0
        %2428 = vmatprep.subr.mxu0 0.0
        %2429 = vmatpush1.msra.mxu0 0.0
        %2430 = vmatprep.subr.mxu0 0.0
        %2431 = vmatpush1.msra.mxu0 0.0
        %2432 = vmatprep.subr.mxu0 0.0
        %2433 = vmatpush1.msra.mxu0 0.0
        %2434 = vmatprep.subr.mxu0 0.0
        %2435 = vmatpush1.msra.mxu0 0.0
        %2436 = vmatprep.subr.mxu0 0.0
        %2437 = vmatpush1.msra.mxu0 0.0
        %2438 = vmatprep.subr.mxu0 0.0
        %2439 = vmatpush1.msra.mxu0 0.0
        %2440 = vmatprep.subr.mxu0 0.0
        %2441 = vmatpush1.msra.mxu0 0.0
        %2442 = vmatprep.subr.mxu0 0.0
        %2443 = vmatpush1.msra.mxu0 0.0
        %2444 = vmatprep.subr.mxu0 0.0
        %2445 = vmatpush1.msra.mxu0 0.0
        %2446 = vmatprep.subr.mxu0 0.0
        %2447 = vmatpush1.msra.mxu0 0.0
        %2448 = vmatprep.subr.mxu0 0.0
        %2449 = vmatpush1.msra.mxu0 0.0
        %2450 = vmatprep.subr.mxu0 0.0
        %2451 = vmatpush1.msra.mxu0 0.0
        %2452 = vmatprep.subr.mxu0 0.0
        %2453 = vmatpush1.msra.mxu0 0.0
        %2454 = vmatprep.subr.mxu0 0.0
        %2455 = vmatpush1.msra.mxu0 0.0
        %2456 = vmatprep.subr.mxu0 0.0
        %2457 = vmatpush1.msra.mxu0 0.0
        %2458 = vmatprep.mubr.f32.mxu0 0.0
        %2459 = vmatmul.mubr.f32.gmra.mrb[0].mxu0 %v2392
        %v2460 = vpop.f32.mrb[0].mxu0
        %v2461 = vadd.f32 0.0, %v2460
        %v2462 = vpop.f32.mrb[0].mxu0
        %2463 = vdwg.mxu0
        %2465 = vrot.lane.b32.xlu0 %v763, 8
        %v2466 = vpop.permute.xlu0 %2465
        %2467 = vrot.lane.b32.xlu0 %v764, 8
        %v2468 = vpop.permute.xlu0 %2467
        %v2469 = vsel %vm893, %v2466, %v2468
        %2471 = vrot.lane.b32.xlu0 %v688, 8
        %v2472 = vpop.permute.xlu0 %2471
        %2473 = vrot.lane.b32.xlu0 %v690, 8
        %v2474 = vpop.permute.xlu0 %2473
        %v2475 = vsel %vm893, %v2472, %v2474
        %v2476 = vsel %vm816, %v2469, 0
        %v2478 = vsel %vm816, %v2475, 0
        %2480 = vmatprep.subr.mxu0 0.0
        %2481 = vmatpush1.xpose.msra.mxu0 %v2478
        %2482 = vmatprep.subr.mxu0 0.0
        %2483 = vmatpush1.xpose.msra.mxu0 0.0
        %2484 = vmatprep.subr.mxu0 0.0
        %2485 = vmatpush1.xpose.msra.mxu0 0.0
        %2486 = vmatprep.subr.mxu0 0.0
        %2487 = vmatpush1.xpose.msra.mxu0 0.0
        %2488 = vmatprep.subr.mxu0 0.0
        %2489 = vmatpush1.xpose.msra.mxu0 0.0
        %2490 = vmatprep.subr.mxu0 0.0
        %2491 = vmatpush1.xpose.msra.mxu0 0.0
        %2492 = vmatprep.subr.mxu0 0.0
        %2493 = vmatpush1.xpose.msra.mxu0 0.0
        %2494 = vmatprep.subr.mxu0 0.0
        %2495 = vmatpush1.xpose.msra.mxu0 0.0
        %2496 = vmatprep.subr.mxu0 0.0
        %2497 = vmatpush1.xpose.msra.mxu0 0.0
        %2498 = vmatprep.subr.mxu0 0.0
        %2499 = vmatpush1.xpose.msra.mxu0 0.0
        %2500 = vmatprep.subr.mxu0 0.0
        %2501 = vmatpush1.xpose.msra.mxu0 0.0
        %2502 = vmatprep.subr.mxu0 0.0
        %2503 = vmatpush1.xpose.msra.mxu0 0.0
        %2504 = vmatprep.subr.mxu0 0.0
        %2505 = vmatpush1.xpose.msra.mxu0 0.0
        %2506 = vmatprep.subr.mxu0 0.0
        %2507 = vmatpush1.xpose.msra.mxu0 0.0
        %2508 = vmatprep.subr.mxu0 0.0
        %2509 = vmatpush1.xpose.msra.mxu0 0.0
        %2510 = vmatprep.subr.mxu0 0.0
        %2511 = vmatpush1.xpose.msra.mxu0 0.0
        %2512 = vmatprep.subr.mxu0 0.0
        %2513 = vmatpush1.xpose.msra.mxu0 0.0
        %2514 = vmatprep.subr.mxu0 0.0
        %2515 = vmatpush1.xpose.msra.mxu0 0.0
        %2516 = vmatprep.subr.mxu0 0.0
        %2517 = vmatpush1.xpose.msra.mxu0 0.0
        %2518 = vmatprep.subr.mxu0 0.0
        %2519 = vmatpush1.xpose.msra.mxu0 0.0
        %2520 = vmatprep.subr.mxu0 0.0
        %2521 = vmatpush1.xpose.msra.mxu0 0.0
        %2522 = vmatprep.subr.mxu0 0.0
        %2523 = vmatpush1.xpose.msra.mxu0 0.0
        %2524 = vmatprep.subr.mxu0 0.0
        %2525 = vmatpush1.xpose.msra.mxu0 0.0
        %2526 = vmatprep.subr.mxu0 0.0
        %2527 = vmatpush1.xpose.msra.mxu0 0.0
        %2528 = vmatprep.subr.mxu0 0.0
        %2529 = vmatpush1.xpose.msra.mxu0 0.0
        %2530 = vmatprep.subr.mxu0 0.0
        %2531 = vmatpush1.xpose.msra.mxu0 0.0
        %2532 = vmatprep.subr.mxu0 0.0
        %2533 = vmatpush1.xpose.msra.mxu0 0.0
        %2534 = vmatprep.subr.mxu0 0.0
        %2535 = vmatpush1.xpose.msra.mxu0 0.0
        %2536 = vmatprep.subr.mxu0 0.0
        %2537 = vmatpush1.xpose.msra.mxu0 0.0
        %2538 = vmatprep.subr.mxu0 0.0
        %2539 = vmatpush1.xpose.msra.mxu0 0.0
        %2540 = vmatprep.subr.mxu0 0.0
        %2541 = vmatpush1.xpose.msra.mxu0 0.0
        %2542 = vmatprep.subr.mxu0 0.0
        %2543 = vmatpush1.xpose.msra.mxu0 0.0
        %2544 = vmatprep.mubr.f32.mxu0 0.0
        %2545 = vmatmul.mubr.f32.gmra.mrb[0].mxu0 %v2476
        %v2546 = vpop.f32.mrb[0].mxu0
        %v2547 = vadd.f32 0.0, %v2546
        %v2548 = vpop.f32.mrb[0].mxu0
        %2549 = vdwg.mxu0
        %v2550 = vsel %vm893, %v2547, -inf
        %2551 = vmax.xlane.f32.xlu0 %v2550
        %v2552 = vpop.xlane.xlu0 %2551
        %v2553 = vsub.f32 %v2547, %v2552
        %v2554 = vmul.f32 %v2553, 1.442695
        %v2555 = vpow.pop %v2554
        %v2556 = vsel %vm893, %v2555, 0.0
        %2557 = vadd.xlane.f32.xlu0 %v2556
        %v2558 = vpop.xlane.xlu0 %2557
        %v2559 = vrcp.pop %v2558
        %v2560 = vmul.f32 %v2555, %v2559
        %2562 = vrot.lane.b32.xlu0 %v759, 8
        %v2563 = vpop.permute.xlu0 %2562
        %2564 = vrot.lane.b32.xlu0 %v761, 8
        %v2565 = vpop.permute.xlu0 %2564
        %v2566 = vsel %vm893, %v2563, %v2565
        %v2569 = vsel %vm893, %v2560, 0
        %2571 = vmatprep.subr.mxu0 0.0
        %2572 = vmatpush1.msra.mxu0 %v2566
        %2573 = vmatprep.subr.mxu0 0.0
        %2574 = vmatpush1.msra.mxu0 0.0
        %2575 = vmatprep.subr.mxu0 0.0
        %2576 = vmatpush1.msra.mxu0 0.0
        %2577 = vmatprep.subr.mxu0 0.0
        %2578 = vmatpush1.msra.mxu0 0.0
        %2579 = vmatprep.subr.mxu0 0.0
        %2580 = vmatpush1.msra.mxu0 0.0
        %2581 = vmatprep.subr.mxu0 0.0
        %2582 = vmatpush1.msra.mxu0 0.0
        %2583 = vmatprep.subr.mxu0 0.0
        %2584 = vmatpush1.msra.mxu0 0.0
        %2585 = vmatprep.subr.mxu0 0.0
        %2586 = vmatpush1.msra.mxu0 0.0
        %2587 = vmatprep.subr.mxu0 0.0
        %2588 = vmatpush1.msra.mxu0 0.0
        %2589 = vmatprep.subr.mxu0 0.0
        %2590 = vmatpush1.msra.mxu0 0.0
        %2591 = vmatprep.subr.mxu0 0.0
        %2592 = vmatpush1.msra.mxu0 0.0
        %2593 = vmatprep.subr.mxu0 0.0
        %2594 = vmatpush1.msra.mxu0 0.0
        %2595 = vmatprep.subr.mxu0 0.0
        %2596 = vmatpush1.msra.mxu0 0.0
        %2597 = vmatprep.subr.mxu0 0.0
        %2598 = vmatpush1.msra.mxu0 0.0
        %2599 = vmatprep.subr.mxu0 0.0
        %2600 = vmatpush1.msra.mxu0 0.0
        %2601 = vmatprep.subr.mxu0 0.0
        %2602 = vmatpush1.msra.mxu0 0.0
        %2603 = vmatprep.subr.mxu0 0.0
        %2604 = vmatpush1.msra.mxu0 0.0
        %2605 = vmatprep.subr.mxu0 0.0
        %2606 = vmatpush1.msra.mxu0 0.0
        %2607 = vmatprep.subr.mxu0 0.0
        %2608 = vmatpush1.msra.mxu0 0.0
        %2609 = vmatprep.subr.mxu0 0.0
        %2610 = vmatpush1.msra.mxu0 0.0
        %2611 = vmatprep.subr.mxu0 0.0
        %2612 = vmatpush1.msra.mxu0 0.0
        %2613 = vmatprep.subr.mxu0 0.0
        %2614 = vmatpush1.msra.mxu0 0.0
        %2615 = vmatprep.subr.mxu0 0.0
        %2616 = vmatpush1.msra.mxu0 0.0
        %2617 = vmatprep.subr.mxu0 0.0
        %2618 = vmatpush1.msra.mxu0 0.0
        %2619 = vmatprep.subr.mxu0 0.0
        %2620 = vmatpush1.msra.mxu0 0.0
        %2621 = vmatprep.subr.mxu0 0.0
        %2622 = vmatpush1.msra.mxu0 0.0
        %2623 = vmatprep.subr.mxu0 0.0
        %2624 = vmatpush1.msra.mxu0 0.0
        %2625 = vmatprep.subr.mxu0 0.0
        %2626 = vmatpush1.msra.mxu0 0.0
        %2627 = vmatprep.subr.mxu0 0.0
        %2628 = vmatpush1.msra.mxu0 0.0
        %2629 = vmatprep.subr.mxu0 0.0
        %2630 = vmatpush1.msra.mxu0 0.0
        %2631 = vmatprep.subr.mxu0 0.0
        %2632 = vmatpush1.msra.mxu0 0.0
        %2633 = vmatprep.subr.mxu0 0.0
        %2634 = vmatpush1.msra.mxu0 0.0
        %2635 = vmatprep.mubr.f32.mxu0 0.0
        %2636 = vmatmul.mubr.f32.gmra.mrb[0].mxu0 %v2569
        %v2637 = vpop.f32.mrb[0].mxu0
        %v2638 = vadd.f32 0.0, %v2637
        %v2639 = vpop.f32.mrb[0].mxu0
        %2640 = vdwg.mxu0
        %2641 = vrot.lane.b32.xlu0 %v764, 124
        %v2642 = vpop.permute.xlu0 %2641
        %2643 = vrot.lane.b32.xlu0 %v690, 124
        %v2644 = vpop.permute.xlu0 %2643
        %v2645 = vsel %vm816, %v2642, 0
        %v2647 = vsel %vm816, %v2644, 0
        %2649 = vmatprep.subr.mxu0 0.0
        %2650 = vmatpush1.xpose.msra.mxu0 %v2647
        %2651 = vmatprep.subr.mxu0 0.0
        %2652 = vmatpush1.xpose.msra.mxu0 0.0
        %2653 = vmatprep.subr.mxu0 0.0
        %2654 = vmatpush1.xpose.msra.mxu0 0.0
        %2655 = vmatprep.subr.mxu0 0.0
        %2656 = vmatpush1.xpose.msra.mxu0 0.0
        %2657 = vmatprep.subr.mxu0 0.0
        %2658 = vmatpush1.xpose.msra.mxu0 0.0
        %2659 = vmatprep.subr.mxu0 0.0
        %2660 = vmatpush1.xpose.msra.mxu0 0.0
        %2661 = vmatprep.subr.mxu0 0.0
        %2662 = vmatpush1.xpose.msra.mxu0 0.0
        %2663 = vmatprep.subr.mxu0 0.0
        %2664 = vmatpush1.xpose.msra.mxu0 0.0
        %2665 = vmatprep.subr.mxu0 0.0
        %2666 = vmatpush1.xpose.msra.mxu0 0.0
        %2667 = vmatprep.subr.mxu0 0.0
        %2668 = vmatpush1.xpose.msra.mxu0 0.0
        %2669 = vmatprep.subr.mxu0 0.0
        %2670 = vmatpush1.xpose.msra.mxu0 0.0
        %2671 = vmatprep.subr.mxu0 0.0
        %2672 = vmatpush1.xpose.msra.mxu0 0.0
        %2673 = vmatprep.subr.mxu0 0.0
        %2674 = vmatpush1.xpose.msra.mxu0 0.0
        %2675 = vmatprep.subr.mxu0 0.0
        %2676 = vmatpush1.xpose.msra.mxu0 0.0
        %2677 = vmatprep.subr.mxu0 0.0
        %2678 = vmatpush1.xpose.msra.mxu0 0.0
        %2679 = vmatprep.subr.mxu0 0.0
        %2680 = vmatpush1.xpose.msra.mxu0 0.0
        %2681 = vmatprep.subr.mxu0 0.0
        %2682 = vmatpush1.xpose.msra.mxu0 0.0
        %2683 = vmatprep.subr.mxu0 0.0
        %2684 = vmatpush1.xpose.msra.mxu0 0.0
        %2685 = vmatprep.subr.mxu0 0.0
        %2686 = vmatpush1.xpose.msra.mxu0 0.0
        %2687 = vmatprep.subr.mxu0 0.0
        %2688 = vmatpush1.xpose.msra.mxu0 0.0
        %2689 = vmatprep.subr.mxu0 0.0
        %2690 = vmatpush1.xpose.msra.mxu0 0.0
        %2691 = vmatprep.subr.mxu0 0.0
        %2692 = vmatpush1.xpose.msra.mxu0 0.0
        %2693 = vmatprep.subr.mxu0 0.0
        %2694 = vmatpush1.xpose.msra.mxu0 0.0
        %2695 = vmatprep.subr.mxu0 0.0
        %2696 = vmatpush1.xpose.msra.mxu0 0.0
        %2697 = vmatprep.subr.mxu0 0.0
        %2698 = vmatpush1.xpose.msra.mxu0 0.0
        %2699 = vmatprep.subr.mxu0 0.0
        %2700 = vmatpush1.xpose.msra.mxu0 0.0
        %2701 = vmatprep.subr.mxu0 0.0
        %2702 = vmatpush1.xpose.msra.mxu0 0.0
        %2703 = vmatprep.subr.mxu0 0.0
        %2704 = vmatpush1.xpose.msra.mxu0 0.0
        %2705 = vmatprep.subr.mxu0 0.0
        %2706 = vmatpush1.xpose.msra.mxu0 0.0
        %2707 = vmatprep.subr.mxu0 0.0
        %2708 = vmatpush1.xpose.msra.mxu0 0.0
        %2709 = vmatprep.subr.mxu0 0.0
        %2710 = vmatpush1.xpose.msra.mxu0 0.0
        %2711 = vmatprep.subr.mxu0 0.0
        %2712 = vmatpush1.xpose.msra.mxu0 0.0
        %2713 = vmatprep.mubr.f32.mxu0 0.0
        %2714 = vmatmul.mubr.f32.gmra.mrb[0].mxu0 %v2645
        %v2715 = vpop.f32.mrb[0].mxu0
        %v2716 = vadd.f32 0.0, %v2715
        %v2717 = vpop.f32.mrb[0].mxu0
        %2718 = vdwg.mxu0
        %v2719 = vsel %vm893, %v2716, -inf
        %2720 = vmax.xlane.f32.xlu0 %v2719
        %v2721 = vpop.xlane.xlu0 %2720
        %v2722 = vsub.f32 %v2716, %v2721
        %v2723 = vmul.f32 %v2722, 1.442695
        %v2724 = vpow.pop %v2723
        %v2725 = vsel %vm893, %v2724, 0.0
        %2726 = vadd.xlane.f32.xlu0 %v2725
        %v2727 = vpop.xlane.xlu0 %2726
        %v2728 = vrcp.pop %v2727
        %v2729 = vmul.f32 %v2724, %v2728
        %2730 = vrot.lane.b32.xlu0 %v761, 124
        %v2731 = vpop.permute.xlu0 %2730
        %v2734 = vsel %vm893, %v2729, 0
        %2736 = vmatprep.subr.mxu0 0.0
        %2737 = vmatpush1.msra.mxu0 %v2731
        %2738 = vmatprep.subr.mxu0 0.0
        %2739 = vmatpush1.msra.mxu0 0.0
        %2740 = vmatprep.subr.mxu0 0.0
        %2741 = vmatpush1.msra.mxu0 0.0
        %2742 = vmatprep.subr.mxu0 0.0
        %2743 = vmatpush1.msra.mxu0 0.0
        %2744 = vmatprep.subr.mxu0 0.0
        %2745 = vmatpush1.msra.mxu0 0.0
        %2746 = vmatprep.subr.mxu0 0.0
        %2747 = vmatpush1.msra.mxu0 0.0
        %2748 = vmatprep.subr.mxu0 0.0
        %2749 = vmatpush1.msra.mxu0 0.0
        %2750 = vmatprep.subr.mxu0 0.0
        %2751 = vmatpush1.msra.mxu0 0.0
        %2752 = vmatprep.subr.mxu0 0.0
        %2753 = vmatpush1.msra.mxu0 0.0
        %2754 = vmatprep.subr.mxu0 0.0
        %2755 = vmatpush1.msra.mxu0 0.0
        %2756 = vmatprep.subr.mxu0 0.0
        %2757 = vmatpush1.msra.mxu0 0.0
        %2758 = vmatprep.subr.mxu0 0.0
        %2759 = vmatpush1.msra.mxu0 0.0
        %2760 = vmatprep.subr.mxu0 0.0
        %2761 = vmatpush1.msra.mxu0 0.0
        %2762 = vmatprep.subr.mxu0 0.0
        %2763 = vmatpush1.msra.mxu0 0.0
        %2764 = vmatprep.subr.mxu0 0.0
        %2765 = vmatpush1.msra.mxu0 0.0
        %2766 = vmatprep.subr.mxu0 0.0
        %2767 = vmatpush1.msra.mxu0 0.0
        %2768 = vmatprep.subr.mxu0 0.0
        %2769 = vmatpush1.msra.mxu0 0.0
        %2770 = vmatprep.subr.mxu0 0.0
        %2771 = vmatpush1.msra.mxu0 0.0
        %2772 = vmatprep.subr.mxu0 0.0
        %2773 = vmatpush1.msra.mxu0 0.0
        %2774 = vmatprep.subr.mxu0 0.0
        %2775 = vmatpush1.msra.mxu0 0.0
        %2776 = vmatprep.subr.mxu0 0.0
        %2777 = vmatpush1.msra.mxu0 0.0
        %2778 = vmatprep.subr.mxu0 0.0
        %2779 = vmatpush1.msra.mxu0 0.0
        %2780 = vmatprep.subr.mxu0 0.0
        %2781 = vmatpush1.msra.mxu0 0.0
        %2782 = vmatprep.subr.mxu0 0.0
        %2783 = vmatpush1.msra.mxu0 0.0
        %2784 = vmatprep.subr.mxu0 0.0
        %2785 = vmatpush1.msra.mxu0 0.0
        %2786 = vmatprep.subr.mxu0 0.0
        %2787 = vmatpush1.msra.mxu0 0.0
        %2788 = vmatprep.subr.mxu0 0.0
        %2789 = vmatpush1.msra.mxu0 0.0
        %2790 = vmatprep.subr.mxu0 0.0
        %2791 = vmatpush1.msra.mxu0 0.0
        %2792 = vmatprep.subr.mxu0 0.0
        %2793 = vmatpush1.msra.mxu0 0.0
        %2794 = vmatprep.subr.mxu0 0.0
        %2795 = vmatpush1.msra.mxu0 0.0
        %2796 = vmatprep.subr.mxu0 0.0
        %2797 = vmatpush1.msra.mxu0 0.0
        %2798 = vmatprep.subr.mxu0 0.0
        %2799 = vmatpush1.msra.mxu0 0.0
        %2800 = vmatprep.mubr.f32.mxu0 0.0
        %2801 = vmatmul.mubr.f32.gmra.mrb[0].mxu0 %v2734
        %v2802 = vpop.f32.mrb[0].mxu0
        %v2803 = vadd.f32 0.0, %v2802
        %v2804 = vpop.f32.mrb[0].mxu0
        %2805 = vdwg.mxu0
        %2806 = vrot.lane.b32.xlu0 %v764, 112
        %v2807 = vpop.permute.xlu0 %2806
        %2808 = vrot.lane.b32.xlu0 %v690, 112
        %v2809 = vpop.permute.xlu0 %2808
        %v2810 = vsel %vm816, %v2807, 0
        %v2812 = vsel %vm816, %v2809, 0
        %2814 = vmatprep.subr.mxu0 0.0
        %2815 = vmatpush1.xpose.msra.mxu0 %v2812
        %2816 = vmatprep.subr.mxu0 0.0
        %2817 = vmatpush1.xpose.msra.mxu0 0.0
        %2818 = vmatprep.subr.mxu0 0.0
        %2819 = vmatpush1.xpose.msra.mxu0 0.0
        %2820 = vmatprep.subr.mxu0 0.0
        %2821 = vmatpush1.xpose.msra.mxu0 0.0
        %2822 = vmatprep.subr.mxu0 0.0
        %2823 = vmatpush1.xpose.msra.mxu0 0.0
        %2824 = vmatprep.subr.mxu0 0.0
        %2825 = vmatpush1.xpose.msra.mxu0 0.0
        %2826 = vmatprep.subr.mxu0 0.0
        %2827 = vmatpush1.xpose.msra.mxu0 0.0
        %2828 = vmatprep.subr.mxu0 0.0
        %2829 = vmatpush1.xpose.msra.mxu0 0.0
        %2830 = vmatprep.subr.mxu0 0.0
        %2831 = vmatpush1.xpose.msra.mxu0 0.0
        %2832 = vmatprep.subr.mxu0 0.0
        %2833 = vmatpush1.xpose.msra.mxu0 0.0
        %2834 = vmatprep.subr.mxu0 0.0
        %2835 = vmatpush1.xpose.msra.mxu0 0.0
        %2836 = vmatprep.subr.mxu0 0.0
        %2837 = vmatpush1.xpose.msra.mxu0 0.0
        %2838 = vmatprep.subr.mxu0 0.0
        %2839 = vmatpush1.xpose.msra.mxu0 0.0
        %2840 = vmatprep.subr.mxu0 0.0
        %2841 = vmatpush1.xpose.msra.mxu0 0.0
        %2842 = vmatprep.subr.mxu0 0.0
        %2843 = vmatpush1.xpose.msra.mxu0 0.0
        %2844 = vmatprep.subr.mxu0 0.0
        %2845 = vmatpush1.xpose.msra.mxu0 0.0
        %2846 = vmatprep.subr.mxu0 0.0
        %2847 = vmatpush1.xpose.msra.mxu0 0.0
        %2848 = vmatprep.subr.mxu0 0.0
        %2849 = vmatpush1.xpose.msra.mxu0 0.0
        %2850 = vmatprep.subr.mxu0 0.0
        %2851 = vmatpush1.xpose.msra.mxu0 0.0
        %2852 = vmatprep.subr.mxu0 0.0
        %2853 = vmatpush1.xpose.msra.mxu0 0.0
        %2854 = vmatprep.subr.mxu0 0.0
        %2855 = vmatpush1.xpose.msra.mxu0 0.0
        %2856 = vmatprep.subr.mxu0 0.0
        %2857 = vmatpush1.xpose.msra.mxu0 0.0
        %2858 = vmatprep.subr.mxu0 0.0
        %2859 = vmatpush1.xpose.msra.mxu0 0.0
        %2860 = vmatprep.subr.mxu0 0.0
        %2861 = vmatpush1.xpose.msra.mxu0 0.0
        %2862 = vmatprep.subr.mxu0 0.0
        %2863 = vmatpush1.xpose.msra.mxu0 0.0
        %2864 = vmatprep.subr.mxu0 0.0
        %2865 = vmatpush1.xpose.msra.mxu0 0.0
        %2866 = vmatprep.subr.mxu0 0.0
        %2867 = vmatpush1.xpose.msra.mxu0 0.0
        %2868 = vmatprep.subr.mxu0 0.0
        %2869 = vmatpush1.xpose.msra.mxu0 0.0
        %2870 = vmatprep.subr.mxu0 0.0
        %2871 = vmatpush1.xpose.msra.mxu0 0.0
        %2872 = vmatprep.subr.mxu0 0.0
        %2873 = vmatpush1.xpose.msra.mxu0 0.0
        %2874 = vmatprep.subr.mxu0 0.0
        %2875 = vmatpush1.xpose.msra.mxu0 0.0
        %2876 = vmatprep.subr.mxu0 0.0
        %2877 = vmatpush1.xpose.msra.mxu0 0.0
        %2878 = vmatprep.mubr.f32.mxu0 0.0
        %2879 = vmatmul.mubr.f32.gmra.mrb[0].mxu0 %v2810
        %v2880 = vpop.f32.mrb[0].mxu0
        %v2881 = vadd.f32 0.0, %v2880
        %v2882 = vpop.f32.mrb[0].mxu0
        %2883 = vdwg.mxu0
        %v2884 = vsel %vm893, %v2881, -inf
        %2885 = vmax.xlane.f32.xlu0 %v2884
        %v2886 = vpop.xlane.xlu0 %2885
        %v2887 = vsub.f32 %v2881, %v2886
        %v2888 = vmul.f32 %v2887, 1.442695
        %v2889 = vpow.pop %v2888
        %v2890 = vsel %vm893, %v2889, 0.0
        %2891 = vadd.xlane.f32.xlu0 %v2890
        %v2892 = vpop.xlane.xlu0 %2891
        %v2893 = vrcp.pop %v2892
        %v2894 = vmul.f32 %v2889, %v2893
        %2895 = vrot.lane.b32.xlu0 %v761, 112
        %v2896 = vpop.permute.xlu0 %2895
        %v2899 = vsel %vm893, %v2894, 0
        %2901 = vmatprep.subr.mxu0 0.0
        %2902 = vmatpush1.msra.mxu0 %v2896
        %2903 = vmatprep.subr.mxu0 0.0
        %2904 = vmatpush1.msra.mxu0 0.0
        %2905 = vmatprep.subr.mxu0 0.0
        %2906 = vmatpush1.msra.mxu0 0.0
        %2907 = vmatprep.subr.mxu0 0.0
        %2908 = vmatpush1.msra.mxu0 0.0
        %2909 = vmatprep.subr.mxu0 0.0
        %2910 = vmatpush1.msra.mxu0 0.0
        %2911 = vmatprep.subr.mxu0 0.0
        %2912 = vmatpush1.msra.mxu0 0.0
        %2913 = vmatprep.subr.mxu0 0.0
        %2914 = vmatpush1.msra.mxu0 0.0
        %2915 = vmatprep.subr.mxu0 0.0
        %2916 = vmatpush1.msra.mxu0 0.0
        %2917 = vmatprep.subr.mxu0 0.0
        %2918 = vmatpush1.msra.mxu0 0.0
        %2919 = vmatprep.subr.mxu0 0.0
        %2920 = vmatpush1.msra.mxu0 0.0
        %2921 = vmatprep.subr.mxu0 0.0
        %2922 = vmatpush1.msra.mxu0 0.0
        %2923 = vmatprep.subr.mxu0 0.0
        %2924 = vmatpush1.msra.mxu0 0.0
        %2925 = vmatprep.subr.mxu0 0.0
        %2926 = vmatpush1.msra.mxu0 0.0
        %2927 = vmatprep.subr.mxu0 0.0
        %2928 = vmatpush1.msra.mxu0 0.0
        %2929 = vmatprep.subr.mxu0 0.0
        %2930 = vmatpush1.msra.mxu0 0.0
        %2931 = vmatprep.subr.mxu0 0.0
        %2932 = vmatpush1.msra.mxu0 0.0
        %2933 = vmatprep.subr.mxu0 0.0
        %2934 = vmatpush1.msra.mxu0 0.0
        %2935 = vmatprep.subr.mxu0 0.0
        %2936 = vmatpush1.msra.mxu0 0.0
        %2937 = vmatprep.subr.mxu0 0.0
        %2938 = vmatpush1.msra.mxu0 0.0
        %2939 = vmatprep.subr.mxu0 0.0
        %2940 = vmatpush1.msra.mxu0 0.0
        %2941 = vmatprep.subr.mxu0 0.0
        %2942 = vmatpush1.msra.mxu0 0.0
        %2943 = vmatprep.subr.mxu0 0.0
        %2944 = vmatpush1.msra.mxu0 0.0
        %2945 = vmatprep.subr.mxu0 0.0
        %2946 = vmatpush1.msra.mxu0 0.0
        %2947 = vmatprep.subr.mxu0 0.0
        %2948 = vmatpush1.msra.mxu0 0.0
        %2949 = vmatprep.subr.mxu0 0.0
        %2950 = vmatpush1.msra.mxu0 0.0
        %2951 = vmatprep.subr.mxu0 0.0
        %2952 = vmatpush1.msra.mxu0 0.0
        %2953 = vmatprep.subr.mxu0 0.0
        %2954 = vmatpush1.msra.mxu0 0.0
        %2955 = vmatprep.subr.mxu0 0.0
        %2956 = vmatpush1.msra.mxu0 0.0
        %2957 = vmatprep.subr.mxu0 0.0
        %2958 = vmatpush1.msra.mxu0 0.0
        %2959 = vmatprep.subr.mxu0 0.0
        %2960 = vmatpush1.msra.mxu0 0.0
        %2961 = vmatprep.subr.mxu0 0.0
        %2962 = vmatpush1.msra.mxu0 0.0
        %2963 = vmatprep.subr.mxu0 0.0
        %2964 = vmatpush1.msra.mxu0 0.0
        %2965 = vmatprep.mubr.f32.mxu0 0.0
        %2966 = vmatmul.mubr.f32.gmra.mrb[0].mxu0 %v2899
        %v2967 = vpop.f32.mrb[0].mxu0
        %v2968 = vadd.f32 0.0, %v2967
        %v2969 = vpop.f32.mrb[0].mxu0
        %2970 = vdwg.mxu0
        %2971 = vrot.lane.b32.xlu0 %v764, 100
        %v2972 = vpop.permute.xlu0 %2971
        %2973 = vrot.lane.b32.xlu0 %v690, 100
        %v2974 = vpop.permute.xlu0 %2973
        %v2975 = vsel %vm816, %v2972, 0
        %v2977 = vsel %vm816, %v2974, 0
        %2979 = vmatprep.subr.mxu0 0.0
        %2980 = vmatpush1.xpose.msra.mxu0 %v2977
        %2981 = vmatprep.subr.mxu0 0.0
        %2982 = vmatpush1.xpose.msra.mxu0 0.0
        %2983 = vmatprep.subr.mxu0 0.0
        %2984 = vmatpush1.xpose.msra.mxu0 0.0
        %2985 = vmatprep.subr.mxu0 0.0
        %2986 = vmatpush1.xpose.msra.mxu0 0.0
        %2987 = vmatprep.subr.mxu0 0.0
        %2988 = vmatpush1.xpose.msra.mxu0 0.0
        %2989 = vmatprep.subr.mxu0 0.0
        %2990 = vmatpush1.xpose.msra.mxu0 0.0
        %2991 = vmatprep.subr.mxu0 0.0
        %2992 = vmatpush1.xpose.msra.mxu0 0.0
        %2993 = vmatprep.subr.mxu0 0.0
        %2994 = vmatpush1.xpose.msra.mxu0 0.0
        %2995 = vmatprep.subr.mxu0 0.0
        %2996 = vmatpush1.xpose.msra.mxu0 0.0
        %2997 = vmatprep.subr.mxu0 0.0
        %2998 = vmatpush1.xpose.msra.mxu0 0.0
        %2999 = vmatprep.subr.mxu0 0.0
        %3000 = vmatpush1.xpose.msra.mxu0 0.0
        %3001 = vmatprep.subr.mxu0 0.0
        %3002 = vmatpush1.xpose.msra.mxu0 0.0
        %3003 = vmatprep.subr.mxu0 0.0
        %3004 = vmatpush1.xpose.msra.mxu0 0.0
        %3005 = vmatprep.subr.mxu0 0.0
        %3006 = vmatpush1.xpose.msra.mxu0 0.0
        %3007 = vmatprep.subr.mxu0 0.0
        %3008 = vmatpush1.xpose.msra.mxu0 0.0
        %3009 = vmatprep.subr.mxu0 0.0
        %3010 = vmatpush1.xpose.msra.mxu0 0.0
        %3011 = vmatprep.subr.mxu0 0.0
        %3012 = vmatpush1.xpose.msra.mxu0 0.0
        %3013 = vmatprep.subr.mxu0 0.0
        %3014 = vmatpush1.xpose.msra.mxu0 0.0
        %3015 = vmatprep.subr.mxu0 0.0
        %3016 = vmatpush1.xpose.msra.mxu0 0.0
        %3017 = vmatprep.subr.mxu0 0.0
        %3018 = vmatpush1.xpose.msra.mxu0 0.0
        %3019 = vmatprep.subr.mxu0 0.0
        %3020 = vmatpush1.xpose.msra.mxu0 0.0
        %3021 = vmatprep.subr.mxu0 0.0
        %3022 = vmatpush1.xpose.msra.mxu0 0.0
        %3023 = vmatprep.subr.mxu0 0.0
        %3024 = vmatpush1.xpose.msra.mxu0 0.0
        %3025 = vmatprep.subr.mxu0 0.0
        %3026 = vmatpush1.xpose.msra.mxu0 0.0
        %3027 = vmatprep.subr.mxu0 0.0
        %3028 = vmatpush1.xpose.msra.mxu0 0.0
        %3029 = vmatprep.subr.mxu0 0.0
        %3030 = vmatpush1.xpose.msra.mxu0 0.0
        %3031 = vmatprep.subr.mxu0 0.0
        %3032 = vmatpush1.xpose.msra.mxu0 0.0
        %3033 = vmatprep.subr.mxu0 0.0
        %3034 = vmatpush1.xpose.msra.mxu0 0.0
        %3035 = vmatprep.subr.mxu0 0.0
        %3036 = vmatpush1.xpose.msra.mxu0 0.0
        %3037 = vmatprep.subr.mxu0 0.0
        %3038 = vmatpush1.xpose.msra.mxu0 0.0
        %3039 = vmatprep.subr.mxu0 0.0
        %3040 = vmatpush1.xpose.msra.mxu0 0.0
        %3041 = vmatprep.subr.mxu0 0.0
        %3042 = vmatpush1.xpose.msra.mxu0 0.0
        %3043 = vmatprep.mubr.f32.mxu0 0.0
        %3044 = vmatmul.mubr.f32.gmra.mrb[0].mxu0 %v2975
        %v3045 = vpop.f32.mrb[0].mxu0
        %v3046 = vadd.f32 0.0, %v3045
        %v3047 = vpop.f32.mrb[0].mxu0
        %3048 = vdwg.mxu0
        %v3049 = vsel %vm893, %v3046, -inf
        %3050 = vmax.xlane.f32.xlu0 %v3049
        %v3051 = vpop.xlane.xlu0 %3050
        %v3052 = vsub.f32 %v3046, %v3051
        %v3053 = vmul.f32 %v3052, 1.442695
        %v3054 = vpow.pop %v3053
        %v3055 = vsel %vm893, %v3054, 0.0
        %3056 = vadd.xlane.f32.xlu0 %v3055
        %v3057 = vpop.xlane.xlu0 %3056
        %v3058 = vrcp.pop %v3057
        %v3059 = vmul.f32 %v3054, %v3058
        %3060 = vrot.lane.b32.xlu0 %v761, 100
        %v3061 = vpop.permute.xlu0 %3060
        %v3064 = vsel %vm893, %v3059, 0
        %3066 = vmatprep.subr.mxu0 0.0
        %3067 = vmatpush1.msra.mxu0 %v3061
        %3068 = vmatprep.subr.mxu0 0.0
        %3069 = vmatpush1.msra.mxu0 0.0
        %3070 = vmatprep.subr.mxu0 0.0
        %3071 = vmatpush1.msra.mxu0 0.0
        %3072 = vmatprep.subr.mxu0 0.0
        %3073 = vmatpush1.msra.mxu0 0.0
        %3074 = vmatprep.subr.mxu0 0.0
        %3075 = vmatpush1.msra.mxu0 0.0
        %3076 = vmatprep.subr.mxu0 0.0
        %3077 = vmatpush1.msra.mxu0 0.0
        %3078 = vmatprep.subr.mxu0 0.0
        %3079 = vmatpush1.msra.mxu0 0.0
        %3080 = vmatprep.subr.mxu0 0.0
        %3081 = vmatpush1.msra.mxu0 0.0
        %3082 = vmatprep.subr.mxu0 0.0
        %3083 = vmatpush1.msra.mxu0 0.0
        %3084 = vmatprep.subr.mxu0 0.0
        %3085 = vmatpush1.msra.mxu0 0.0
        %3086 = vmatprep.subr.mxu0 0.0
        %3087 = vmatpush1.msra.mxu0 0.0
        %3088 = vmatprep.subr.mxu0 0.0
        %3089 = vmatpush1.msra.mxu0 0.0
        %3090 = vmatprep.subr.mxu0 0.0
        %3091 = vmatpush1.msra.mxu0 0.0
        %3092 = vmatprep.subr.mxu0 0.0
        %3093 = vmatpush1.msra.mxu0 0.0
        %3094 = vmatprep.subr.mxu0 0.0
        %3095 = vmatpush1.msra.mxu0 0.0
        %3096 = vmatprep.subr.mxu0 0.0
        %3097 = vmatpush1.msra.mxu0 0.0
        %3098 = vmatprep.subr.mxu0 0.0
        %3099 = vmatpush1.msra.mxu0 0.0
        %3100 = vmatprep.subr.mxu0 0.0
        %3101 = vmatpush1.msra.mxu0 0.0
        %3102 = vmatprep.subr.mxu0 0.0
        %3103 = vmatpush1.msra.mxu0 0.0
        %3104 = vmatprep.subr.mxu0 0.0
        %3105 = vmatpush1.msra.mxu0 0.0
        %3106 = vmatprep.subr.mxu0 0.0
        %3107 = vmatpush1.msra.mxu0 0.0
        %3108 = vmatprep.subr.mxu0 0.0
        %3109 = vmatpush1.msra.mxu0 0.0
        %3110 = vmatprep.subr.mxu0 0.0
        %3111 = vmatpush1.msra.mxu0 0.0
        %3112 = vmatprep.subr.mxu0 0.0
        %3113 = vmatpush1.msra.mxu0 0.0
        %3114 = vmatprep.subr.mxu0 0.0
        %3115 = vmatpush1.msra.mxu0 0.0
        %3116 = vmatprep.subr.mxu0 0.0
        %3117 = vmatpush1.msra.mxu0 0.0
        %3118 = vmatprep.subr.mxu0 0.0
        %3119 = vmatpush1.msra.mxu0 0.0
        %3120 = vmatprep.subr.mxu0 0.0
        %3121 = vmatpush1.msra.mxu0 0.0
        %3122 = vmatprep.subr.mxu0 0.0
        %3123 = vmatpush1.msra.mxu0 0.0
        %3124 = vmatprep.subr.mxu0 0.0
        %3125 = vmatpush1.msra.mxu0 0.0
        %3126 = vmatprep.subr.mxu0 0.0
        %3127 = vmatpush1.msra.mxu0 0.0
        %3128 = vmatprep.subr.mxu0 0.0
        %3129 = vmatpush1.msra.mxu0 0.0
        %3130 = vmatprep.mubr.f32.mxu0 0.0
        %3131 = vmatmul.mubr.f32.gmra.mrb[0].mxu0 %v3064
        %v3132 = vpop.f32.mrb[0].mxu0
        %v3133 = vadd.f32 0.0, %v3132
        %v3134 = vpop.f32.mrb[0].mxu0
        %3135 = vdwg.mxu0
        %3136 = vrot.lane.b32.xlu0 %v764, 88
        %v3137 = vpop.permute.xlu0 %3136
        %3138 = vrot.lane.b32.xlu0 %v690, 88
        %v3139 = vpop.permute.xlu0 %3138
        %v3140 = vsel %vm816, %v3137, 0
        %v3142 = vsel %vm816, %v3139, 0
        %3144 = vmatprep.subr.mxu0 0.0
        %3145 = vmatpush1.xpose.msra.mxu0 %v3142
        %3146 = vmatprep.subr.mxu0 0.0
        %3147 = vmatpush1.xpose.msra.mxu0 0.0
        %3148 = vmatprep.subr.mxu0 0.0
        %3149 = vmatpush1.xpose.msra.mxu0 0.0
        %3150 = vmatprep.subr.mxu0 0.0
        %3151 = vmatpush1.xpose.msra.mxu0 0.0
        %3152 = vmatprep.subr.mxu0 0.0
        %3153 = vmatpush1.xpose.msra.mxu0 0.0
        %3154 = vmatprep.subr.mxu0 0.0
        %3155 = vmatpush1.xpose.msra.mxu0 0.0
        %3156 = vmatprep.subr.mxu0 0.0
        %3157 = vmatpush1.xpose.msra.mxu0 0.0
        %3158 = vmatprep.subr.mxu0 0.0
        %3159 = vmatpush1.xpose.msra.mxu0 0.0
        %3160 = vmatprep.subr.mxu0 0.0
        %3161 = vmatpush1.xpose.msra.mxu0 0.0
        %3162 = vmatprep.subr.mxu0 0.0
        %3163 = vmatpush1.xpose.msra.mxu0 0.0
        %3164 = vmatprep.subr.mxu0 0.0
        %3165 = vmatpush1.xpose.msra.mxu0 0.0
        %3166 = vmatprep.subr.mxu0 0.0
        %3167 = vmatpush1.xpose.msra.mxu0 0.0
        %3168 = vmatprep.subr.mxu0 0.0
        %3169 = vmatpush1.xpose.msra.mxu0 0.0
        %3170 = vmatprep.subr.mxu0 0.0
        %3171 = vmatpush1.xpose.msra.mxu0 0.0
        %3172 = vmatprep.subr.mxu0 0.0
        %3173 = vmatpush1.xpose.msra.mxu0 0.0
        %3174 = vmatprep.subr.mxu0 0.0
        %3175 = vmatpush1.xpose.msra.mxu0 0.0
        %3176 = vmatprep.subr.mxu0 0.0
        %3177 = vmatpush1.xpose.msra.mxu0 0.0
        %3178 = vmatprep.subr.mxu0 0.0
        %3179 = vmatpush1.xpose.msra.mxu0 0.0
        %3180 = vmatprep.subr.mxu0 0.0
        %3181 = vmatpush1.xpose.msra.mxu0 0.0
        %3182 = vmatprep.subr.mxu0 0.0
        %3183 = vmatpush1.xpose.msra.mxu0 0.0
        %3184 = vmatprep.subr.mxu0 0.0
        %3185 = vmatpush1.xpose.msra.mxu0 0.0
        %3186 = vmatprep.subr.mxu0 0.0
        %3187 = vmatpush1.xpose.msra.mxu0 0.0
        %3188 = vmatprep.subr.mxu0 0.0
        %3189 = vmatpush1.xpose.msra.mxu0 0.0
        %3190 = vmatprep.subr.mxu0 0.0
        %3191 = vmatpush1.xpose.msra.mxu0 0.0
        %3192 = vmatprep.subr.mxu0 0.0
        %3193 = vmatpush1.xpose.msra.mxu0 0.0
        %3194 = vmatprep.subr.mxu0 0.0
        %3195 = vmatpush1.xpose.msra.mxu0 0.0
        %3196 = vmatprep.subr.mxu0 0.0
        %3197 = vmatpush1.xpose.msra.mxu0 0.0
        %3198 = vmatprep.subr.mxu0 0.0
        %3199 = vmatpush1.xpose.msra.mxu0 0.0
        %3200 = vmatprep.subr.mxu0 0.0
        %3201 = vmatpush1.xpose.msra.mxu0 0.0
        %3202 = vmatprep.subr.mxu0 0.0
        %3203 = vmatpush1.xpose.msra.mxu0 0.0
        %3204 = vmatprep.subr.mxu0 0.0
        %3205 = vmatpush1.xpose.msra.mxu0 0.0
        %3206 = vmatprep.subr.mxu0 0.0
        %3207 = vmatpush1.xpose.msra.mxu0 0.0
        %3208 = vmatprep.mubr.f32.mxu0 0.0
        %3209 = vmatmul.mubr.f32.gmra.mrb[0].mxu0 %v3140
        %v3210 = vpop.f32.mrb[0].mxu0
        %v3211 = vadd.f32 0.0, %v3210
        %v3212 = vpop.f32.mrb[0].mxu0
        %3213 = vdwg.mxu0
        %v3214 = vsel %vm893, %v3211, -inf
        %3215 = vmax.xlane.f32.xlu0 %v3214
        %v3216 = vpop.xlane.xlu0 %3215
        %v3217 = vsub.f32 %v3211, %v3216
        %v3218 = vmul.f32 %v3217, 1.442695
        %v3219 = vpow.pop %v3218
        %v3220 = vsel %vm893, %v3219, 0.0
        %3221 = vadd.xlane.f32.xlu0 %v3220
        %v3222 = vpop.xlane.xlu0 %3221
        %v3223 = vrcp.pop %v3222
        %v3224 = vmul.f32 %v3219, %v3223
        %3225 = vrot.lane.b32.xlu0 %v761, 88
        %v3226 = vpop.permute.xlu0 %3225
        %v3229 = vsel %vm893, %v3224, 0
        %3231 = vmatprep.subr.mxu0 0.0
        %3232 = vmatpush1.msra.mxu0 %v3226
        %3233 = vmatprep.subr.mxu0 0.0
        %3234 = vmatpush1.msra.mxu0 0.0
        %3235 = vmatprep.subr.mxu0 0.0
        %3236 = vmatpush1.msra.mxu0 0.0
        %3237 = vmatprep.subr.mxu0 0.0
        %3238 = vmatpush1.msra.mxu0 0.0
        %3239 = vmatprep.subr.mxu0 0.0
        %3240 = vmatpush1.msra.mxu0 0.0
        %3241 = vmatprep.subr.mxu0 0.0
        %3242 = vmatpush1.msra.mxu0 0.0
        %3243 = vmatprep.subr.mxu0 0.0
        %3244 = vmatpush1.msra.mxu0 0.0
        %3245 = vmatprep.subr.mxu0 0.0
        %3246 = vmatpush1.msra.mxu0 0.0
        %3247 = vmatprep.subr.mxu0 0.0
        %3248 = vmatpush1.msra.mxu0 0.0
        %3249 = vmatprep.subr.mxu0 0.0
        %3250 = vmatpush1.msra.mxu0 0.0
        %3251 = vmatprep.subr.mxu0 0.0
        %3252 = vmatpush1.msra.mxu0 0.0
        %3253 = vmatprep.subr.mxu0 0.0
        %3254 = vmatpush1.msra.mxu0 0.0
        %3255 = vmatprep.subr.mxu0 0.0
        %3256 = vmatpush1.msra.mxu0 0.0
        %3257 = vmatprep.subr.mxu0 0.0
        %3258 = vmatpush1.msra.mxu0 0.0
        %3259 = vmatprep.subr.mxu0 0.0
        %3260 = vmatpush1.msra.mxu0 0.0
        %3261 = vmatprep.subr.mxu0 0.0
        %3262 = vmatpush1.msra.mxu0 0.0
        %3263 = vmatprep.subr.mxu0 0.0
        %3264 = vmatpush1.msra.mxu0 0.0
        %3265 = vmatprep.subr.mxu0 0.0
        %3266 = vmatpush1.msra.mxu0 0.0
        %3267 = vmatprep.subr.mxu0 0.0
        %3268 = vmatpush1.msra.mxu0 0.0
        %3269 = vmatprep.subr.mxu0 0.0
        %3270 = vmatpush1.msra.mxu0 0.0
        %3271 = vmatprep.subr.mxu0 0.0
        %3272 = vmatpush1.msra.mxu0 0.0
        %3273 = vmatprep.subr.mxu0 0.0
        %3274 = vmatpush1.msra.mxu0 0.0
        %3275 = vmatprep.subr.mxu0 0.0
        %3276 = vmatpush1.msra.mxu0 0.0
        %3277 = vmatprep.subr.mxu0 0.0
        %3278 = vmatpush1.msra.mxu0 0.0
        %3279 = vmatprep.subr.mxu0 0.0
        %3280 = vmatpush1.msra.mxu0 0.0
        %3281 = vmatprep.subr.mxu0 0.0
        %3282 = vmatpush1.msra.mxu0 0.0
        %3283 = vmatprep.subr.mxu0 0.0
        %3284 = vmatpush1.msra.mxu0 0.0
        %3285 = vmatprep.subr.mxu0 0.0
        %3286 = vmatpush1.msra.mxu0 0.0
        %3287 = vmatprep.subr.mxu0 0.0
        %3288 = vmatpush1.msra.mxu0 0.0
        %3289 = vmatprep.subr.mxu0 0.0
        %3290 = vmatpush1.msra.mxu0 0.0
        %3291 = vmatprep.subr.mxu0 0.0
        %3292 = vmatpush1.msra.mxu0 0.0
        %3293 = vmatprep.subr.mxu0 0.0
        %3294 = vmatpush1.msra.mxu0 0.0
        %3295 = vmatprep.mubr.f32.mxu0 0.0
        %3296 = vmatmul.mubr.f32.gmra.mrb[0].mxu0 %v3229
        %v3297 = vpop.f32.mrb[0].mxu0
        %v3298 = vadd.f32 0.0, %v3297
        %v3299 = vpop.f32.mrb[0].mxu0
        %3300 = vdwg.mxu0
        %3301 = vrot.lane.b32.xlu0 %v764, 76
        %v3302 = vpop.permute.xlu0 %3301
        %3303 = vrot.lane.b32.xlu0 %v690, 76
        %v3304 = vpop.permute.xlu0 %3303
        %v3305 = vsel %vm816, %v3302, 0
        %v3307 = vsel %vm816, %v3304, 0
        %3309 = vmatprep.subr.mxu0 0.0
        %3310 = vmatpush1.xpose.msra.mxu0 %v3307
        %3311 = vmatprep.subr.mxu0 0.0
        %3312 = vmatpush1.xpose.msra.mxu0 0.0
        %3313 = vmatprep.subr.mxu0 0.0
        %3314 = vmatpush1.xpose.msra.mxu0 0.0
        %3315 = vmatprep.subr.mxu0 0.0
        %3316 = vmatpush1.xpose.msra.mxu0 0.0
        %3317 = vmatprep.subr.mxu0 0.0
        %3318 = vmatpush1.xpose.msra.mxu0 0.0
        %3319 = vmatprep.subr.mxu0 0.0
        %3320 = vmatpush1.xpose.msra.mxu0 0.0
        %3321 = vmatprep.subr.mxu0 0.0
        %3322 = vmatpush1.xpose.msra.mxu0 0.0
        %3323 = vmatprep.subr.mxu0 0.0
        %3324 = vmatpush1.xpose.msra.mxu0 0.0
        %3325 = vmatprep.subr.mxu0 0.0
        %3326 = vmatpush1.xpose.msra.mxu0 0.0
        %3327 = vmatprep.subr.mxu0 0.0
        %3328 = vmatpush1.xpose.msra.mxu0 0.0
        %3329 = vmatprep.subr.mxu0 0.0
        %3330 = vmatpush1.xpose.msra.mxu0 0.0
        %3331 = vmatprep.subr.mxu0 0.0
        %3332 = vmatpush1.xpose.msra.mxu0 0.0
        %3333 = vmatprep.subr.mxu0 0.0
        %3334 = vmatpush1.xpose.msra.mxu0 0.0
        %3335 = vmatprep.subr.mxu0 0.0
        %3336 = vmatpush1.xpose.msra.mxu0 0.0
        %3337 = vmatprep.subr.mxu0 0.0
        %3338 = vmatpush1.xpose.msra.mxu0 0.0
        %3339 = vmatprep.subr.mxu0 0.0
        %3340 = vmatpush1.xpose.msra.mxu0 0.0
        %3341 = vmatprep.subr.mxu0 0.0
        %3342 = vmatpush1.xpose.msra.mxu0 0.0
        %3343 = vmatprep.subr.mxu0 0.0
        %3344 = vmatpush1.xpose.msra.mxu0 0.0
        %3345 = vmatprep.subr.mxu0 0.0
        %3346 = vmatpush1.xpose.msra.mxu0 0.0
        %3347 = vmatprep.subr.mxu0 0.0
        %3348 = vmatpush1.xpose.msra.mxu0 0.0
        %3349 = vmatprep.subr.mxu0 0.0
        %3350 = vmatpush1.xpose.msra.mxu0 0.0
        %3351 = vmatprep.subr.mxu0 0.0
        %3352 = vmatpush1.xpose.msra.mxu0 0.0
        %3353 = vmatprep.subr.mxu0 0.0
        %3354 = vmatpush1.xpose.msra.mxu0 0.0
        %3355 = vmatprep.subr.mxu0 0.0
        %3356 = vmatpush1.xpose.msra.mxu0 0.0
        %3357 = vmatprep.subr.mxu0 0.0
        %3358 = vmatpush1.xpose.msra.mxu0 0.0
        %3359 = vmatprep.subr.mxu0 0.0
        %3360 = vmatpush1.xpose.msra.mxu0 0.0
        %3361 = vmatprep.subr.mxu0 0.0
        %3362 = vmatpush1.xpose.msra.mxu0 0.0
        %3363 = vmatprep.subr.mxu0 0.0
        %3364 = vmatpush1.xpose.msra.mxu0 0.0
        %3365 = vmatprep.subr.mxu0 0.0
        %3366 = vmatpush1.xpose.msra.mxu0 0.0
        %3367 = vmatprep.subr.mxu0 0.0
        %3368 = vmatpush1.xpose.msra.mxu0 0.0
        %3369 = vmatprep.subr.mxu0 0.0
        %3370 = vmatpush1.xpose.msra.mxu0 0.0
        %3371 = vmatprep.subr.mxu0 0.0
        %3372 = vmatpush1.xpose.msra.mxu0 0.0
        %3373 = vmatprep.mubr.f32.mxu0 0.0
        %3374 = vmatmul.mubr.f32.gmra.mrb[0].mxu0 %v3305
        %v3375 = vpop.f32.mrb[0].mxu0
        %v3376 = vadd.f32 0.0, %v3375
        %v3377 = vpop.f32.mrb[0].mxu0
        %3378 = vdwg.mxu0
        %v3379 = vsel %vm893, %v3376, -inf
        %3380 = vmax.xlane.f32.xlu0 %v3379
        %v3381 = vpop.xlane.xlu0 %3380
        %v3382 = vsub.f32 %v3376, %v3381
        %v3383 = vmul.f32 %v3382, 1.442695
        %v3384 = vpow.pop %v3383
        %v3385 = vsel %vm893, %v3384, 0.0
        %3386 = vadd.xlane.f32.xlu0 %v3385
        %v3387 = vpop.xlane.xlu0 %3386
        %v3388 = vrcp.pop %v3387
        %v3389 = vmul.f32 %v3384, %v3388
        %3390 = vrot.lane.b32.xlu0 %v761, 76
        %v3391 = vpop.permute.xlu0 %3390
        %v3394 = vsel %vm893, %v3389, 0
        %3396 = vmatprep.subr.mxu0 0.0
        %3397 = vmatpush1.msra.mxu0 %v3391
        %3398 = vmatprep.subr.mxu0 0.0
        %3399 = vmatpush1.msra.mxu0 0.0
        %3400 = vmatprep.subr.mxu0 0.0
        %3401 = vmatpush1.msra.mxu0 0.0
        %3402 = vmatprep.subr.mxu0 0.0
        %3403 = vmatpush1.msra.mxu0 0.0
        %3404 = vmatprep.subr.mxu0 0.0
        %3405 = vmatpush1.msra.mxu0 0.0
        %3406 = vmatprep.subr.mxu0 0.0
        %3407 = vmatpush1.msra.mxu0 0.0
        %3408 = vmatprep.subr.mxu0 0.0
        %3409 = vmatpush1.msra.mxu0 0.0
        %3410 = vmatprep.subr.mxu0 0.0
        %3411 = vmatpush1.msra.mxu0 0.0
        %3412 = vmatprep.subr.mxu0 0.0
        %3413 = vmatpush1.msra.mxu0 0.0
        %3414 = vmatprep.subr.mxu0 0.0
        %3415 = vmatpush1.msra.mxu0 0.0
        %3416 = vmatprep.subr.mxu0 0.0
        %3417 = vmatpush1.msra.mxu0 0.0
        %3418 = vmatprep.subr.mxu0 0.0
        %3419 = vmatpush1.msra.mxu0 0.0
        %3420 = vmatprep.subr.mxu0 0.0
        %3421 = vmatpush1.msra.mxu0 0.0
        %3422 = vmatprep.subr.mxu0 0.0
        %3423 = vmatpush1.msra.mxu0 0.0
        %3424 = vmatprep.subr.mxu0 0.0
        %3425 = vmatpush1.msra.mxu0 0.0
        %3426 = vmatprep.subr.mxu0 0.0
        %3427 = vmatpush1.msra.mxu0 0.0
        %3428 = vmatprep.subr.mxu0 0.0
        %3429 = vmatpush1.msra.mxu0 0.0
        %3430 = vmatprep.subr.mxu0 0.0
        %3431 = vmatpush1.msra.mxu0 0.0
        %3432 = vmatprep.subr.mxu0 0.0
        %3433 = vmatpush1.msra.mxu0 0.0
        %3434 = vmatprep.subr.mxu0 0.0
        %3435 = vmatpush1.msra.mxu0 0.0
        %3436 = vmatprep.subr.mxu0 0.0
        %3437 = vmatpush1.msra.mxu0 0.0
        %3438 = vmatprep.subr.mxu0 0.0
        %3439 = vmatpush1.msra.mxu0 0.0
        %3440 = vmatprep.subr.mxu0 0.0
        %3441 = vmatpush1.msra.mxu0 0.0
        %3442 = vmatprep.subr.mxu0 0.0
        %3443 = vmatpush1.msra.mxu0 0.0
        %3444 = vmatprep.subr.mxu0 0.0
        %3445 = vmatpush1.msra.mxu0 0.0
        %3446 = vmatprep.subr.mxu0 0.0
        %3447 = vmatpush1.msra.mxu0 0.0
        %3448 = vmatprep.subr.mxu0 0.0
        %3449 = vmatpush1.msra.mxu0 0.0
        %3450 = vmatprep.subr.mxu0 0.0
        %3451 = vmatpush1.msra.mxu0 0.0
        %3452 = vmatprep.subr.mxu0 0.0
        %3453 = vmatpush1.msra.mxu0 0.0
        %3454 = vmatprep.subr.mxu0 0.0
        %3455 = vmatpush1.msra.mxu0 0.0
        %3456 = vmatprep.subr.mxu0 0.0
        %3457 = vmatpush1.msra.mxu0 0.0
        %3458 = vmatprep.subr.mxu0 0.0
        %3459 = vmatpush1.msra.mxu0 0.0
        %3460 = vmatprep.mubr.f32.mxu0 0.0
        %3461 = vmatmul.mubr.f32.gmra.mrb[0].mxu0 %v3394
        %v3462 = vpop.f32.mrb[0].mxu0
        %v3463 = vadd.f32 0.0, %v3462
        %v3464 = vpop.f32.mrb[0].mxu0
        %3465 = vdwg.mxu0
        %3467 = vrot.lane.b32.xlu0 %v1141, 12
        %v3468 = vpop.permute.xlu0 %3467
        %3471 = vrot.lane.b32.xlu0 %v1306, 24
        %v3472 = vpop.permute.xlu0 %3471
        %3475 = vrot.lane.b32.xlu0 %v1471, 36
        %v3476 = vpop.permute.xlu0 %3475
        %3479 = vrot.lane.b32.xlu0 %v1636, 48
        %v3480 = vpop.permute.xlu0 %3479
        %3483 = vrot.lane.b32.xlu0 %v1801, 60
        %v3484 = vpop.permute.xlu0 %3483
        %3487 = vrot.lane.b32.xlu0 %v1966, 72
        %v3488 = vpop.permute.xlu0 %3487
        %3491 = vrot.lane.b32.xlu0 %v2131, 84
        %v3492 = vpop.permute.xlu0 %3491
        %3495 = vrot.lane.b32.xlu0 %v2296, 96
        %v3496 = vpop.permute.xlu0 %3495
        %3499 = vrot.lane.b32.xlu0 %v2461, 108
        %v3500 = vpop.permute.xlu0 %3499
        %3503 = vrot.lane.b32.xlu0 %v2638, 120
        %v3504 = vpop.permute.xlu0 %3503
        %3507 = vrot.lane.b32.xlu0 %v2803, 4
        %v3508 = vpop.permute.xlu0 %3507
        %3511 = vrot.lane.b32.xlu0 %v2968, 16
        %v3512 = vpop.permute.xlu0 %3511
        %3515 = vrot.lane.b32.xlu0 %v3133, 28
        %v3516 = vpop.permute.xlu0 %3515
        %3519 = vrot.lane.b32.xlu0 %v3298, 40
        %v3520 = vpop.permute.xlu0 %3519
        %3523 = vrot.lane.b32.xlu0 %v3463, 52
        %v3524 = vpop.permute.xlu0 %3523
        %v3526 = vsel %vm816, %v975, %v3468
        %vm3527 = vcmask 195584
        %v3528 = vsel %vm3527, %v3526, %v3472
        %vm3529 = vcmask 293888
        %v3530 = vsel %vm3529, %v3528, %v3476
        %vm3531 = vcmask 392192
        %v3532 = vsel %vm3531, %v3530, %v3480
        %vm3533 = vcmask 490496
        %v3534 = vsel %vm3533, %v3532, %v3484
        %vm3535 = vcmask 588800
        %v3536 = vsel %vm3535, %v3534, %v3488
        %vm3537 = vcmask 687104
        %v3538 = vsel %vm3537, %v3536, %v3492
        %vm3539 = vcmask 785408
        %v3540 = vsel %vm3539, %v3538, %v3496
        %vm3541 = vcmask 883712
        %v3542 = vsel %vm3541, %v3540, %v3500
        %vm3543 = vcmask 982016
        %v3544 = vsel %vm3543, %v3542, %v3504
        %vm3545 = vcmask 31744
        %v3546 = vsel %vm3545, %v3504, %v3508
        %vm3547 = vcmask 130048
        %v3548 = vsel %vm3547, %v3546, %v3512
        %vm3549 = vcmask 228352
        %v3550 = vsel %vm3549, %v3548, %v3516
        %vm3551 = vcmask 326656
        %v3552 = vsel %vm3551, %v3550, %v3520
        %vm3553 = vcmask 424960
        %v3554 = vsel %vm3553, %v3552, %v3524
        %v3556 = vlaneseq
        %v3557 = vshrl.u32 %v3556, 7
        %v3558 = vsub.s32 0, %v3557
        %v3559 = vrot.slane %v813, %v3558
        %v3560 = vlaneseq
        %v3561 = vshrl.u32 %v3560, 7
        %v3562 = vsub.s32 1, %v3561
        %v3563 = vrot.slane %v813, %v3562
        %vm3566 = vcmask 523264
        %v3568 = vsel %vm3566, %v3554, 0
        %3570 = vmatprep.subr.mxu0 %v766
        %3571 = vmatpush1.msra.mxu0 %v765
        %3572 = vmatprep.subr.mxu0 %v768
        %3573 = vmatpush1.msra.mxu0 %v767
        %3574 = vmatprep.subr.mxu0 %v770
        %3575 = vmatpush1.msra.mxu0 %v769
        %3576 = vmatprep.subr.mxu0 %v772
        %3577 = vmatpush1.msra.mxu0 %v771
        %3578 = vmatprep.subr.mxu0 %v774
        %3579 = vmatpush1.msra.mxu0 %v773
        %3580 = vmatprep.subr.mxu0 %v776
        %3581 = vmatpush1.msra.mxu0 %v775
        %3582 = vmatprep.subr.mxu0 %v778
        %3583 = vmatpush1.msra.mxu0 %v777
        %3584 = vmatprep.subr.mxu0 %v780
        %3585 = vmatpush1.msra.mxu0 %v779
        %3586 = vmatprep.subr.mxu0 %v782
        %3587 = vmatpush1.msra.mxu0 %v781
        %3588 = vmatprep.subr.mxu0 %v784
        %3589 = vmatpush1.msra.mxu0 %v783
        %3590 = vmatprep.subr.mxu0 %v786
        %3591 = vmatpush1.msra.mxu0 %v785
        %3592 = vmatprep.subr.mxu0 %v788
        %3593 = vmatpush1.msra.mxu0 %v787
        %3594 = vmatprep.subr.mxu0 %v790
        %3595 = vmatpush1.msra.mxu0 %v789
        %3596 = vmatprep.subr.mxu0 %v792
        %3597 = vmatpush1.msra.mxu0 %v791
        %3598 = vmatprep.subr.mxu0 %v794
        %3599 = vmatpush1.msra.mxu0 %v793
        %3600 = vmatprep.subr.mxu0 %v796
        %3601 = vmatpush1.msra.mxu0 %v795
        %3602 = vmatprep.subr.mxu0 %v798
        %3603 = vmatpush1.msra.mxu0 %v797
        %3604 = vmatprep.subr.mxu0 %v800
        %3605 = vmatpush1.msra.mxu0 %v799
        %3606 = vmatprep.subr.mxu0 %v802
        %3607 = vmatpush1.msra.mxu0 %v801
        %3608 = vmatprep.subr.mxu0 %v804
        %3609 = vmatpush1.msra.mxu0 %v803
        %3610 = vmatprep.subr.mxu0 %v806
        %3611 = vmatpush1.msra.mxu0 %v805
        %3612 = vmatprep.subr.mxu0 %v808
        %3613 = vmatpush1.msra.mxu0 %v807
        %3614 = vmatprep.subr.mxu0 %v810
        %3615 = vmatpush1.msra.mxu0 %v809
        %3616 = vmatprep.subr.mxu0 %v812
        %3617 = vmatpush1.msra.mxu0 %v811
        %3618 = vmatprep.subr.mxu0 0.0
        %3619 = vmatpush1.msra.mxu0 0.0
        %3620 = vmatprep.subr.mxu0 0.0
        %3621 = vmatpush1.msra.mxu0 0.0
        %3622 = vmatprep.subr.mxu0 0.0
        %3623 = vmatpush1.msra.mxu0 0.0
        %3624 = vmatprep.subr.mxu0 0.0
        %3625 = vmatpush1.msra.mxu0 0.0
        %3626 = vmatprep.subr.mxu0 0.0
        %3627 = vmatpush1.msra.mxu0 0.0
        %3628 = vmatprep.subr.mxu0 0.0
        %3629 = vmatpush1.msra.mxu0 0.0
        %3630 = vmatprep.subr.mxu0 0.0
        %3631 = vmatpush1.msra.mxu0 0.0
        %3632 = vmatprep.subr.mxu0 0.0
        %3633 = vmatpush1.msra.mxu0 0.0
        %3634 = vmatprep.mubr.f32.mxu0 %v3568
        %3635 = vmatmul.mubr.f32.gmra.mrb[0].mxu0 %v3544
        %v3636 = vpop.f32.mrb[0].mxu0
        %v3637 = vadd.f32 %v3559, %v3636
        %v3638 = vpop.f32.mrb[0].mxu0
        %v3639 = vadd.f32 %v3563, %v3638
        %3640 = vdwg.mxu0
        %v3641 = vadd.f32 %v3637, %v324
        %v3642 = vadd.f32 %v3639, %v325
        %v3643 = vadd.f32 %v3641, %v3642
        %3644 = vadd.xlane.f32.xlu0 %v3643
        %v3645 = vpop.xlane.xlu0 %3644
        %v3646 = vmul.f32 %v3645, 0.0052083335
        %v3647 = vmul.f32 %v3641, %v3641
        %v3648 = vmul.f32 %v3642, %v3642
        %v3649 = vadd.f32 %v3647, %v3648
        %3650 = vadd.xlane.f32.xlu0 %v3649
        %v3651 = vpop.xlane.xlu0 %3650
        %v3652 = vmul.f32 %v3651, 0.0052083335
        %v3653 = vmul.f32 %v3646, %v3646
        %v3654 = vsub.f32 %v3652, %v3653
        %v3655 = vsub.f32 %v3641, %v3646
        %v3656 = vsub.f32 %v3642, %v3646
        %v3657 = vadd.f32 %v3654, 1e-12
        %v3658 = vrsqrt.pop %v3657
        %v3659 = vmul.f32 %v3655, %v3658
        %v3660 = vmul.f32 %v3656, %v3658
        %v3662 = vlaneseq
        %v3663 = vshrl.u32 %v3662, 7
        %v3664 = vsub.s32 0, %v3663
        %v3665 = vrot.slane %v814, %v3664
        %v3666 = vlaneseq
        %v3667 = vshrl.u32 %v3666, 7
        %v3668 = vsub.s32 1, %v3667
        %v3669 = vrot.slane %v814, %v3668
        %v3672 = vmul.f32 %v3659, %v3665
        %v3673 = vmul.f32 %v3660, %v3669
        %v3675 = vlaneseq
        %v3676 = vshrl.u32 %v3675, 7
        %v3677 = vsub.s32 0, %v3676
        %v3678 = vrot.slane %v815, %v3677
        %v3679 = vlaneseq
        %v3680 = vshrl.u32 %v3679, 7
        %v3681 = vsub.s32 1, %v3680
        %v3682 = vrot.slane %v815, %v3681
        %v3685 = vadd.f32 %v3672, %v3678
        %v3686 = vadd.f32 %v3673, %v3682
        %3687 = vst [vmem:[%s323] sm:$0xff] %v3685
        %3688 = vst [vmem:[%s323 + $0x8] sm:$0xff] %v3686
        %s3689 = sand.u32 %s185, 1
        %s3690 = scalar_lea.sflag [#allocation4], %s3689
        %s3691 = sand.u32 %s185, 1
        %s3692 = smul.addr %s3691, 16
        %s3693 = scalar_lea.vmem [#allocation8], %s3692
        // Predicated region
        $region61: #{tpu_custom_call.1} parent=47 // pred_check
          %p3694 = pneg %p195
        $region62: #{tpu_custom_call.1} parent=47 // pred_check_branch
          %3696 = sbr.rel (%p3694) target = $region64
        $region63: #{tpu_custom_call.1} parent=47 // pred_region
          %s3698 = ssub.s32 256, 256
          %3699 = vsyncadd %s3690, %s3698
          %s3700 = smul.addr %s25, 2
          %s3701 = smul.addr %s3700, 128
          %s3702 = scalar_lea.hbm %s7, %s3701
          %s3704 = sshll.u32 %s3693, 4
          %s3705 = int_to_ptr.vmem [resolvable:$true] %s3704
          %3707 = dma.vmem_to_hbm [thread:$0]  %s3705, 256, %s3702, %s3690
        $region64: #{tpu_custom_call.1} parent=47 // pred_fallthru
          _
      $region48: #{tpu_custom_call.1} parent=5 // pred_fallthru
        _
      %p3708 = scmp.le.s32.totalorder 2, %s20
      // Predicated region
      $region65: #{tpu_custom_call.1} parent=5 // pred_check
        %p3709 = pneg %p3708
      $region66: #{tpu_custom_call.1} parent=5 // pred_check_branch
        %3711 = sbr.rel (%p3709) target = $region68
      $region67: #{tpu_custom_call.1} parent=5 // pred_region
        %s3712 = ssub.s32 %s20, 2
        // Predicated region
        $region69: #{tpu_custom_call.1} parent=67 // pred_check
          %p3713 = pneg %p201
        $region70: #{tpu_custom_call.1} parent=67 // pred_check_branch
          %3715 = sbr.rel (%p3713) target = $region72
        $region71: #{tpu_custom_call.1} parent=67 // pred_region
          %s3716 = sand.u32 %s186, 1
          %s3717 = scalar_lea.sflag [#allocation4], %s3716
          %s3718 = sand.u32 %s186, 1
          %s3719 = smul.addr %s3718, 16
          %s3720 = scalar_lea.vmem [#allocation8], %s3719
          %3721 = dma.done %s3717, 256
        $region72: #{tpu_custom_call.1} parent=67 // pred_fallthru
          _
      $region68: #{tpu_custom_call.1} parent=5 // pred_fallthru
        _
    $region6: #{tpu_custom_call.1} parent=1 // loop_footer
      %s24 = sadd.s32 1, %s20
    $region7: #{tpu_custom_call.1} parent=1 // loop_footer_branch
      %19 = sbr.rel target = $region3
    $region8: #{tpu_custom_call.1} parent=1 // loop_exit
      _
    %3722 = vsyncpa [#allocation3], 1
    %s3723 = scalar_lea.sflag [#allocation3], 1
    %3724 = vsyncpa %s3723, 1
    %3725 = vsyncpa [#allocation6], 1
    %3726 = vsyncpa [#allocation4], 1
    %s3727 = scalar_lea.sflag [#allocation4], 1
    %3728 = vsyncpa %s3727, 1

</llo_original>
